<compile_context>
chip_gen: v6e
topology: v6e:2x2x1
jax: 0.10.0
libtpu: 0.0.40
codegen_flags: <defaults>
</compile_context>

<pallas_src>
import numpy as np
import jax
import jax.numpy as jnp
from jax.experimental import pallas as pl
from jax.experimental.pallas import tpu as pltpu


# flat per-step trainable-parameter layout (offset, length), total = 55
_PARAM_OFFSETS = {
    "gamma": (0, 1), "reinhard": (1, 2), "crysisengine": (3, 1), "filmic": (4, 2),
    "whiteworld": (6, 1), "bilateral": (7, 3), "median": (10, 1), "fastnlm": (11, 3),
    "wbmanual": (14, 3), "wbquadratic": (17, 30), "gtmmanual": (47, 3), "bm3d": (50, 5),
}
_N_PARAMS = 55
# residual-proxy candidates (collapsed into one per-step conv in the wrapper)
_PROXY_NAMES = ["reinhard", "crysisengine", "filmic", "whiteworld", "bilateral",
                "median", "fastnlm", "path_restore_14l_bgr", "bm3d"]
_RESID_IDX = [1, 2, 3, 5, 6, 7, 8, 11, 14]          # their indices in the 15-way step


# ----------------------------------------------------------------------------
# Deterministic synthetic weights for the proxy sub-networks.
# ----------------------------------------------------------------------------
def _det_conv_w(key, cout, cin, scale=0.05, center_all_out=False):
    w = scale * np.asarray(jax.random.normal(key, (cout, cin, 3, 3)), dtype=np.float32)
    if center_all_out:
        for co in range(cout):
            w[co, 0, 1, 1] += 1.0
    return w


def _im2col(w):
    """(cout, cin, 3, 3) -> (cout, 9*cin).  Column = (kh*3+kw)*cin + ci, i.e.
    tap-major then input channel — matches the in-kernel tap staging layout."""
    cout, cin = w.shape[0], w.shape[1]
    return np.transpose(w, (0, 2, 3, 1)).reshape(cout, 9 * cin).astype(np.float32)


def _pad_lanes(W):
    # zero-border width (lanes) of the flattened tap buffer; >= W+1, 128-aligned
    return ((W + 1 + 127) // 128) * 128


# ----------------------------------------------------------------------------
# Fused kernel: bayer + demosaic + n_step ISP mixture steps, one image per grid
# step.  The image stays resident in VMEM — HBM sees exactly one input read and
# one output write per image.
# ----------------------------------------------------------------------------
def make_fused_kernel(n_step, H, W, collect_intermediates, bayer_w):
    HW = H * W
    PADL = _pad_lanes(W)
    n_out = (n_step + 2) if collect_intermediates else 1
    OFF = _PARAM_OFFSETS

    def kernel(*refs):
        (ps_ref, pp_ref, pb_ref, coef_ref, rflag_ref,     # SMEM scalars
         wde_ref, wpe_ref, em_ref, x_ref) = refs[:9]      # VMEM inputs
        o_refs = refs[9:9 + n_out]
        acc_ref, pad_ref, taps_ref = refs[9 + n_out:]

        rowsel3 = jax.lax.broadcasted_iota(jnp.int32, (3, 1), 0)   # hoisted

        # Border-only zeroing: the interior [PADL:PADL+HW] is always fully
        # overwritten before it is read, and the borders are never written, so
        # only 2*PADL columns need clearing (vs a full-buffer memset before).
        zb = jnp.zeros((3, PADL), jnp.float32)
        pad_ref[0:3, 0:PADL] = zb
        pad_ref[0:3, PADL + HW:PADL + HW + PADL] = zb

        def x3_load():
            # current 3-channel image lives in VMEM (pad interior); re-loading
            # slices uses vld slots (slack) instead of holding it in vregs.
            return pad_ref[0:3, PADL:PADL + HW]

        def stage_taps(C, store):
            """Build the 9 zero-padded 3x3 taps of pad interior rows [0:C].
            store=True: write tap t into taps_ref[t*C:(t+1)*C] (im2col rows);
            store=False: return the (C, HW) tap values as a list."""
            out = []
            t = 0
            for dh in (-1, 0, 1):
                for dw in (-1, 0, 1):
                    off = dh * W + dw
                    v = pad_ref[0:C, PADL + off:PADL + off + HW]
                    if dw == 1:                          # mask row-wrap, right edge
                        v = v * em_ref[1:2]
                    elif dw == -1:                       # mask row-wrap, left edge
                        v = v * em_ref[0:1]
                    if store:
                        taps_ref[t * C:(t + 1) * C, :] = v
                    else:
                        out.append(v)
                    t += 1
            return out

        # ---- step 0: bayer (PathRestore14lBayer residual surrogate | Skip) ----
        x1 = x_ref[0]                                    # (1, HW)
        pad_ref[0:1, PADL:PADL + HW] = x1
        taps1 = stage_taps(1, store=False)
        conv_b = float(bayer_w[0, 0, 0, 0]) * taps1[0]   # tiny 1->1 conv on the VPU
        for idx in range(1, 9):
            kh, kw = idx // 3, idx % 3
            conv_b = conv_b + float(bayer_w[0, 0, kh, kw]) * taps1[idx]
        y1 = pb_ref[0] * (x1 + conv_b) + pb_ref[1] * x1
        if collect_intermediates:
            o_refs[0][0] = y1

        # ---- step 1: demosaic — 4 candidates collapsed into ONE (3,9) conv ----
        pad_ref[0:1, PADL:PADL + HW] = y1
        stage_taps(1, store=True)                        # taps_ref rows 0..8
        cur = jnp.dot(wde_ref[...], taps_ref[0:9, :],
                      preferred_element_type=jnp.float32)            # (3, HW)
        pad_ref[0:3, PADL:PADL + HW] = cur
        if collect_intermediates:
            o_refs[1][0] = cur

        # ---- steps 2 .. n_step+1: 15-candidate pruned-softmax ISP mixture ----
        for k in range(n_step):
            # per-channel identity coefficient (resid probs + Skip + WbManual),
            # precomputed in the wrapper
            coef = jnp.where(rowsel3 == 0, coef_ref[k, 0],
                             jnp.where(rowsel3 == 1, coef_ref[k, 1], coef_ref[k, 2]))

            # residual proxies + Skip + WbManual: ONE matmul + one linear term,
            # skipped entirely if every residual proxy was architecture-pruned.
            @pl.when(rflag_ref[k] > 0)
            def _():
                stage_taps(3, store=True)                # taps_ref rows 0..26
                conv = jnp.dot(wpe_ref[k], taps_ref[0:27, :],
                               preferred_element_type=jnp.float32)   # (3, HW)
                acc_ref[...] = conv + coef * x3_load()

            @pl.when(rflag_ref[k] == 0)
            def _():
                acc_ref[...] = coef * x3_load()

            def P(i):
                return pp_ref[k, i]

            def add(j, fn):
                prob = ps_ref[k, j]

                @pl.when(prob >= 1e-9)                   # pruned candidates: free
                def _():
                    acc_ref[...] += prob * fn()

            # 0: Gamma (surrogate x**g, g = 0.5 + 1.5*sigmoid(param))
            add(0, lambda: jnp.exp((0.5 + 1.5 * P(OFF["gamma"][0]))
                                   * jnp.log(jnp.maximum(x3_load(), 1e-4))))

            # 4: Grayworld white balance (full-image per-channel means)
            def grayworld():
                v = x3_load()
                mc = jnp.mean(v, axis=1, keepdims=True)               # (3, 1)
                ma = (mc[0:1] + mc[1:2] + mc[2:3]) * (1.0 / 3.0)      # (1, 1)
                return v * (ma / (mc + 1e-6))
            add(4, grayworld)

            # 12: WbQuadratic (3x10 quadratic color matrix)
            def wbquad():
                off = OFF["wbquadratic"][0]
                v = x3_load()
                r, g, b = v[0:1], v[1:2], v[2:3]
                ones = jnp.ones_like(r)
                feats = [r * r, g * g, b * b, r * g, r * b, g * b, r, g, b, ones]
                rows = []
                for c in range(3):
                    a = P(off + 10 * c) * feats[0]
                    for j in range(1, 10):
                        a = a + P(off + 10 * c + j) * feats[j]
                    rows.append(a)
                return jnp.concatenate(rows, axis=0)
            add(12, wbquad)

            # 13: GtmManual — quartic Bezier tone curve, anchors (0,k0,k1,k2,1)
            def gtm():
                off = OFF["gtmmanual"][0]
                k0, k1, k2 = P(off), P(off + 1), P(off + 2)
                t = jnp.clip(x3_load(), 0.0, 1.0)
                u = 1.0 - t
                t2, u2 = t * t, u * u
                return (4.0 * u2 * u * t * k0 + 6.0 * u2 * t2 * k1
                        + 4.0 * u * t2 * t * k2 + t2 * t2)
            add(13, gtm)

            if k < n_step - 1 or collect_intermediates:
                val = acc_ref[...]
                if k < n_step - 1:
                    pad_ref[0:3, PADL:PADL + HW] = val   # image for next step's taps
                if collect_intermediates:
                    o_refs[2 + k][0] = val

        if not collect_intermediates:
            o_refs[0][0] = acc_ref[...]

    return kernel


# ----------------------------------------------------------------------------
# Glue (softmax / pruning / sigmoid / candidate collapse) — plain JAX, jitted
# together with the single pallas_call.
# ----------------------------------------------------------------------------
def _smem_spec():
    return pl.BlockSpec(memory_space=pltpu.MemorySpace.SMEM)


def _post_probs_1d(alpha, threshold):
    p = jax.nn.softmax(alpha, axis=0)
    keep = p >= threshold * jnp.max(p)
    post = jnp.where(keep, p, 0.0)
    post = post / jnp.sum(post)
    return post.astype(jnp.float32), jnp.sum(~keep).astype(jnp.int32)


def _post_probs_2d(alpha, threshold):
    p = jax.nn.softmax(alpha, axis=1)
    keep = p >= threshold * jnp.max(p, axis=1, keepdims=True)
    post = jnp.where(keep, p, 0.0)
    post = post / jnp.sum(post, axis=1, keepdims=True)
    return post.astype(jnp.float32), jnp.sum(~keep, axis=1).astype(jnp.int32)


class SuperPrunePallas:
    """JAX/Pallas port of SuperPruneFifteenDemosFourBayerTwoFt (forward only)."""

    def __init__(self, n_step, threshold, H, W, collect_intermediates=False):
        assert n_step >= 1
        self.n_step = n_step
        self.threshold = float(threshold)
        self.H, self.W = H, W
        self.collect_intermediates = collect_intermediates
        self.middle_results = None
        self.pruned_paths = jnp.zeros((n_step + 2,), jnp.int32)

        # architecture alphas: zeros, exactly as in the PyTorch __init__
        self.alpha_bayer = jnp.zeros((2,), jnp.float32)
        self.alpha_demosaic = jnp.zeros((4,), jnp.float32)
        self.alpha_steps = jnp.zeros((n_step, 15), jnp.float32)

        # per-step trainable params (flat layout, init values from PyTorch __init__)
        step_init = np.concatenate([
            [0.0],                                    # gamma
            [0.0, 0.0],                               # reinhard
            [0.0],                                    # crysisengine
            [0.0, 0.0],                               # filmic
            [0.0],                                    # whiteworld
            [0.0, 0.0, 0.0],                          # bilateral
            [0.0],                                    # median
            [0.0, 0.0, 0.0],                          # fastnlm
            [-1.38, -1.38, -1.38],                    # wbmanual
            [0, 0, 0, 0, 0, 0, 0.406, 0, 0, 0,
             0, 0, 0, 0, 0, 0, 0, 0.406, 0, 0,
             0, 0, 0, 0, 0, 0, 0, 0, 0.406, 0],       # wbquadratic
            [-1.099, 0.0, 1.099],                     # gtmmanual
            [-1.946, 1.099, -1.099, -1.099, 2.708],   # bm3d
        ]).astype(np.float32)
        assert step_init.shape[0] == _N_PARAMS
        self.step_params = jnp.tile(jnp.asarray(step_init)[None, :], (n_step, 1))

        # deterministic synthetic proxy-net weights, packed as im2col stacks
        keys = jax.random.split(jax.random.PRNGKey(123), 1 + 4 + len(_PROXY_NAMES))
        bayer_w = _det_conv_w(keys[0], 1, 1)
        demosaic_ws = [_det_conv_w(keys[1 + i], 3, 1, center_all_out=True)
                       for i in range(4)]
        proxy_ws = [_det_conv_w(keys[5 + i], 3, 3) for i in range(len(_PROXY_NAMES))]
        self.w_dem_stack = jnp.asarray(np.stack([_im2col(w) for w in demosaic_ws], 0))  # (4,3,9)
        self.w_proxy_stack = jnp.asarray(np.stack([_im2col(w) for w in proxy_ws], 0))   # (9,3,27)

        # column edge masks (zero where a +/-1 lane tap would wrap across rows)
        HW = H * W
        col = np.arange(HW) % W
        em = np.ones((2, HW), np.float32)
        em[0, col == 0] = 0.0         # keep-mask for dw = -1 taps
        em[1, col == W - 1] = 0.0     # keep-mask for dw = +1 taps
        self.edge_masks = jnp.asarray(em)

        self._kernel = make_fused_kernel(n_step, H, W, collect_intermediates, bayer_w)
        self._forward = jax.jit(self._build_forward())

    def _build_forward(self):
        n_step, threshold = self.n_step, self.threshold
        H, W = self.H, self.W
        HW = H * W
        padl = _pad_lanes(W)
        collect = self.collect_intermediates
        kernel = self._kernel
        w_dem_stack, w_proxy_stack = self.w_dem_stack, self.w_proxy_stack
        edge_masks = self.edge_masks
        OFF = _PARAM_OFFSETS

        def forward(x, alpha_bayer, alpha_demosaic, alpha_steps, step_params):
            N = x.shape[0]
            pb, nb = _post_probs_1d(alpha_bayer, threshold)
            pd, nd = _post_probs_1d(alpha_demosaic, threshold)
            ps, ns = _post_probs_2d(alpha_steps, threshold)
            pp = jax.nn.sigmoid(step_params).astype(jnp.float32)     # torch.sigmoid(par)
            pruned = jnp.concatenate([nb[None], nd[None], ns], axis=0)

            # collapse the 4 demosaic candidates into one (3, 9) effective conv
            w_dem_eff = jnp.einsum('i,icl->cl', pd, w_dem_stack)

            # collapse the 9 residual-proxy candidates (probs * fine-tune scale)
            # into one (3, 27) effective conv per step
            def pmean(name):
                off, ln = OFF[name]
                return jnp.mean(pp[:, off:off + ln], axis=1)          # (n_step,)
            scales = jnp.stack(
                [0.5 + 0.5 * pmean("reinhard"), 0.5 + 0.5 * pmean("crysisengine"),
                 0.5 + 0.5 * pmean("filmic"), 0.5 + 0.5 * pmean("whiteworld"),
                 0.5 + 0.5 * pmean("bilateral"), 0.5 + 0.5 * pmean("median"),
                 0.5 + 0.5 * pmean("fastnlm"),
                 jnp.ones((n_step,), jnp.float32),                    # path_restore_14l_bgr
                 0.5 + 0.5 * pmean("bm3d")], axis=1)                  # (n_step, 9)
            resid_probs = jnp.stack([ps[:, j] for j in _RESID_IDX], axis=1)  # (n_step, 9)
            w_proxy_eff = jnp.einsum('kj,jcl->kcl', resid_probs * scales,
                                     w_proxy_stack)                   # (n_step, 3, 27)

            # Skip + WbManual + residual-identity folded into per-channel coefs
            resid_sum = jnp.sum(resid_probs, axis=1)                  # (n_step,)
            off_wb = OFF["wbmanual"][0]
            g_wb = 4.0 * pp[:, off_wb:off_wb + 3]                     # (n_step, 3)
            coefs = (resid_sum + ps[:, 9])[:, None] + ps[:, 10:11] * g_wb
            coefs = coefs.astype(jnp.float32)
            rflag = (resid_sum >= 1e-9).astype(jnp.int32)             # (n_step,)

            xf = x.reshape(N, 1, HW)                                  # lane-dense layout

            if collect:
                out_shape = ([jax.ShapeDtypeStruct((N, 1, HW), jnp.float32),
                              jax.ShapeDtypeStruct((N, 3, HW), jnp.float32)]
                             + [jax.ShapeDtypeStruct((N, 3, HW), jnp.float32)
                                for _ in range(n_step)])
                out_specs = ([pl.BlockSpec((1, 1, HW), lambda n: (n, 0, 0)),
                              pl.BlockSpec((1, 3, HW), lambda n: (n, 0, 0))]
                             + [pl.BlockSpec((1, 3, HW), lambda n: (n, 0, 0))
                                for _ in range(n_step)])
            else:
                out_shape = [jax.ShapeDtypeStruct((N, 3, HW), jnp.float32)]
                out_specs = [pl.BlockSpec((1, 3, HW), lambda n: (n, 0, 0))]

            outs = pl.pallas_call(
                kernel,
                out_shape=out_shape,
                grid=(N,),
                in_specs=[_smem_spec(),                               # ps   (n_step, 15)
                          _smem_spec(),                               # pp   (n_step, 55)
                          _smem_spec(),                               # pb   (2,)
                          _smem_spec(),                               # coefs (n_step, 3)
                          _smem_spec(),                               # rflag (n_step,)
                          pl.BlockSpec((3, 9), lambda n: (0, 0)),     # demosaic eff conv
                          pl.BlockSpec((n_step, 3, 27), lambda n: (0, 0, 0)),  # proxy eff conv
                          pl.BlockSpec((2, HW), lambda n: (0, 0)),    # column edge masks
                          pl.BlockSpec((1, 1, HW), lambda n: (n, 0, 0))],      # bayer input
                out_specs=out_specs,
                scratch_shapes=[
                    pltpu.VMEM((3, HW), jnp.float32),                 # streaming accumulator
                    pltpu.VMEM((3, HW + 2 * padl), jnp.float32),      # zero-bordered tap rows
                    pltpu.VMEM((32, HW), jnp.float32),                # im2col tap staging
                ],
                compiler_params=pltpu.CompilerParams(
                    dimension_semantics=("parallel",),                # megacore on v7x
                    vmem_limit_bytes=32 * 1024 * 1024),
            )(ps, pp, pb, coefs, rflag, w_dem_eff, w_proxy_eff, edge_masks, xf)

            if not isinstance(outs, (list, tuple)):
                outs = (outs,)
            y = outs[-1].reshape(N, 3, H, W)
            mids = tuple(o.reshape(N, -1, H, W) for o in outs) if collect else ()
            return y, mids, pruned

        return forward

    def __call__(self, x):
        y, mids, pruned = self._forward(x, self.alpha_bayer, self.alpha_demosaic,
                                        self.alpha_steps, self.step_params)
        # device arrays — no per-step host sync
        self.pruned_paths = pruned
        self.middle_results = list(mids) if self.collect_intermediates else None
        return y

    @property
    def intermediate_results(self):
        return self.middle_results


if __name__ == "__main__":
    N, H, W = 2, 16, 16
    n_step, threshold = 2, 0.5

    model = SuperPrunePallas(n_step=n_step, threshold=threshold, H=H, W=W)

    key = jax.random.PRNGKey(0)
    x = jax.random.uniform(key, (N, 1, H, W), dtype=jnp.float32)   # bayer input in [0,1)

    y = model(x)
    y = jax.block_until_ready(y)

    assert y.shape == (N, 3, H, W), y.shape
    assert y.dtype == jnp.float32
    assert bool(jnp.all(jnp.isfinite(y)))
    assert model.pruned_paths.shape == (n_step + 2,)
    print("KERNEL_OK")
</pallas_src>

<mosaic_0001>
module attributes {stable_mosaic.version = 11 : i64} {
  func.func @kernel(%arg0: i32, %arg1: memref<2x15xf32, #tpu.memory_space<smem>>, %arg2: memref<2x55xf32, #tpu.memory_space<smem>>, %arg3: memref<2xf32, #tpu.memory_space<smem>>, %arg4: memref<2x3xf32, #tpu.memory_space<smem>>, %arg5: memref<2xi32, #tpu.memory_space<smem>>, %arg6: memref<3x9xf32, #tpu.memory_space<vmem>>, %arg7: memref<2x3x27xf32, #tpu.memory_space<vmem>>, %arg8: memref<2x256xf32, #tpu.memory_space<vmem>>, %arg9: memref<1x1x256xf32, #tpu.memory_space<vmem>>, %arg10: memref<1x3x256xf32, #tpu.memory_space<vmem>>, %arg11: memref<3x256xf32, #tpu.memory_space<vmem>>, %arg12: memref<3x512xf32, #tpu.memory_space<vmem>>, %arg13: memref<32x256xf32, #tpu.memory_space<vmem>>) attributes {dimension_semantics = [#tpu.dimension_semantics<parallel>], iteration_bounds = array<i64: 2>, scalar_prefetch = 0 : i64, scratch_operands = 3 : i64, tpu.core_type = #tpu.core_type<tc>, window_params = [{transform_indices = @transform_0, window_bounds = array<i64: 2, 15>}, {transform_indices = @transform_1, window_bounds = array<i64: 2, 55>}, {transform_indices = @transform_2, window_bounds = array<i64: 2>}, {transform_indices = @transform_3, window_bounds = array<i64: 2, 3>}, {transform_indices = @transform_4, window_bounds = array<i64: 2>}, {pipeline_mode = #tpu.pipeline_mode<synchronous>, transform_indices = @transform_5, window_bounds = array<i64: 3, 9>}, {pipeline_mode = #tpu.pipeline_mode<synchronous>, transform_indices = @transform_6, window_bounds = array<i64: 2, 3, 27>}, {pipeline_mode = #tpu.pipeline_mode<synchronous>, transform_indices = @transform_7, window_bounds = array<i64: 2, 256>}, {transform_indices = @transform_8, window_bounds = array<i64: 1, 1, 256>}, {transform_indices = @transform_9, window_bounds = array<i64: 1, 3, 256>}]} {
    %0 = tpu.iota {dimensions = array<i32: 0>} : vector<3x1xi32>
    %cst = arith.constant 0.000000e+00 : f32
    %1 = vector.broadcast %cst : f32 to vector<3x128xf32>
    %c0 = arith.constant 0 : index
    %c0_0 = arith.constant 0 : index
    %2 = vector.load %arg12[%c0, %c0_0] : memref<3x512xf32, #tpu.memory_space<vmem>>, vector<3x128xf32>
    tpu.vector_store %arg12[%c0, %c0_0], %1 {strides = array<i32>} : memref<3x512xf32, #tpu.memory_space<vmem>>, vector<3x128xf32>,
    %c0_1 = arith.constant 0 : index
    %c384 = arith.constant 384 : index
    %3 = vector.load %arg12[%c0_1, %c384] : memref<3x512xf32, #tpu.memory_space<vmem>>, vector<3x128xf32>
    tpu.vector_store %arg12[%c0_1, %c384], %1 {strides = array<i32>} : memref<3x512xf32, #tpu.memory_space<vmem>>, vector<3x128xf32>,
    %c0_2 = arith.constant 0 : index
    %c0_3 = arith.constant 0 : index
    %c0_4 = arith.constant 0 : index
    %4 = vector.load %arg9[%c0_2, %c0_3, %c0_4] : memref<1x1x256xf32, #tpu.memory_space<vmem>>, vector<1x1x256xf32>
    %5 = vector.shape_cast %4 : vector<1x1x256xf32> to vector<1x256xf32>
    %c0_5 = arith.constant 0 : index
    %c128 = arith.constant 128 : index
    %6 = vector.load %arg12[%c0_5, %c128] : memref<3x512xf32, #tpu.memory_space<vmem>>, vector<1x256xf32>
    tpu.vector_store %arg12[%c0_5, %c128], %5 {strides = array<i32>} : memref<3x512xf32, #tpu.memory_space<vmem>>, vector<1x256xf32>,
    %c0_6 = arith.constant 0 : index
    %c111 = arith.constant 111 : index
    %7 = vector.load %arg12[%c0_6, %c111] : memref<3x512xf32, #tpu.memory_space<vmem>>, vector<1x256xf32>
    %c0_7 = arith.constant 0 : index
    %c0_8 = arith.constant 0 : index
    %8 = vector.load %arg8[%c0_7, %c0_8] : memref<2x256xf32, #tpu.memory_space<vmem>>, vector<1x256xf32>
    %9 = arith.mulf %7, %8 : vector<1x256xf32>
    %c0_9 = arith.constant 0 : index
    %c112 = arith.constant 112 : index
    %10 = vector.load %arg12[%c0_9, %c112] : memref<3x512xf32, #tpu.memory_space<vmem>>, vector<1x256xf32>
    %c0_10 = arith.constant 0 : index
    %c113 = arith.constant 113 : index
    %11 = vector.load %arg12[%c0_10, %c113] : memref<3x512xf32, #tpu.memory_space<vmem>>, vector<1x256xf32>
    %c1 = arith.constant 1 : index
    %c0_11 = arith.constant 0 : index
    %12 = vector.load %arg8[%c1, %c0_11] : memref<2x256xf32, #tpu.memory_space<vmem>>, vector<1x256xf32>
    %13 = arith.mulf %11, %12 : vector<1x256xf32>
    %c0_12 = arith.constant 0 : index
    %c127 = arith.constant 127 : index
    %14 = vector.load %arg12[%c0_12, %c127] : memref<3x512xf32, #tpu.memory_space<vmem>>, vector<1x256xf32>
    %c0_13 = arith.constant 0 : index
    %c0_14 = arith.constant 0 : index
    %15 = vector.load %arg8[%c0_13, %c0_14] : memref<2x256xf32, #tpu.memory_space<vmem>>, vector<1x256xf32>
    %16 = arith.mulf %14, %15 : vector<1x256xf32>
    %c0_15 = arith.constant 0 : index
    %c128_16 = arith.constant 128 : index
    %17 = vector.load %arg12[%c0_15, %c128_16] : memref<3x512xf32, #tpu.memory_space<vmem>>, vector<1x256xf32>
    %c0_17 = arith.constant 0 : index
    %c129 = arith.constant 129 : index
    %18 = vector.load %arg12[%c0_17, %c129] : memref<3x512xf32, #tpu.memory_space<vmem>>, vector<1x256xf32>
    %c1_18 = arith.constant 1 : index
    %c0_19 = arith.constant 0 : index
    %19 = vector.load %arg8[%c1_18, %c0_19] : memref<2x256xf32, #tpu.memory_space<vmem>>, vector<1x256xf32>
    %20 = arith.mulf %18, %19 : vector<1x256xf32>
    %c0_20 = arith.constant 0 : index
    %c143 = arith.constant 143 : index
    %21 = vector.load %arg12[%c0_20, %c143] : memref<3x512xf32, #tpu.memory_space<vmem>>, vector<1x256xf32>
    %c0_21 = arith.constant 0 : index
    %c0_22 = arith.constant 0 : index
    %22 = vector.load %arg8[%c0_21, %c0_22] : memref<2x256xf32, #tpu.memory_space<vmem>>, vector<1x256xf32>
    %23 = arith.mulf %21, %22 : vector<1x256xf32>
    %c0_23 = arith.constant 0 : index
    %c144 = arith.constant 144 : index
    %24 = vector.load %arg12[%c0_23, %c144] : memref<3x512xf32, #tpu.memory_space<vmem>>, vector<1x256xf32>
    %c0_24 = arith.constant 0 : index
    %c145 = arith.constant 145 : index
    %25 = vector.load %arg12[%c0_24, %c145] : memref<3x512xf32, #tpu.memory_space<vmem>>, vector<1x256xf32>
    %c1_25 = arith.constant 1 : index
    %c0_26 = arith.constant 0 : index
    %26 = vector.load %arg8[%c1_25, %c0_26] : memref<2x256xf32, #tpu.memory_space<vmem>>, vector<1x256xf32>
    %27 = arith.mulf %25, %26 : vector<1x256xf32>
    %cst_27 = arith.constant -0.0245466791 : f32
    %28 = vector.broadcast %cst_27 : f32 to vector<1x256xf32>
    %29 = arith.mulf %28, %9 : vector<1x256xf32>
    %cst_28 = arith.constant -0.0473934673 : f32
    %30 = vector.broadcast %cst_28 : f32 to vector<1x256xf32>
    %31 = arith.mulf %30, %10 : vector<1x256xf32>
    %32 = arith.addf %29, %31 : vector<1x256xf32>
    %cst_29 = arith.constant -0.0887598544 : f32
    %33 = vector.broadcast %cst_29 : f32 to vector<1x256xf32>
    %34 = arith.mulf %33, %13 : vector<1x256xf32>
    %35 = arith.addf %32, %34 : vector<1x256xf32>
    %cst_30 = arith.constant -0.0150501607 : f32
    %36 = vector.broadcast %cst_30 : f32 to vector<1x256xf32>
    %37 = arith.mulf %36, %16 : vector<1x256xf32>
    %38 = arith.addf %35, %37 : vector<1x256xf32>
    %cst_31 = arith.constant 0.00246805372 : f32
    %39 = vector.broadcast %cst_31 : f32 to vector<1x256xf32>
    %40 = arith.mulf %39, %17 : vector<1x256xf32>
    %41 = arith.addf %38, %40 : vector<1x256xf32>
    %cst_32 = arith.constant -0.025578171 : f32
    %42 = vector.broadcast %cst_32 : f32 to vector<1x256xf32>
    %43 = arith.mulf %42, %20 : vector<1x256xf32>
    %44 = arith.addf %41, %43 : vector<1x256xf32>
    %cst_33 = arith.constant -0.0330765769 : f32
    %45 = vector.broadcast %cst_33 : f32 to vector<1x256xf32>
    %46 = arith.mulf %45, %23 : vector<1x256xf32>
    %47 = arith.addf %44, %46 : vector<1x256xf32>
    %cst_34 = arith.constant -0.00756594911 : f32
    %48 = vector.broadcast %cst_34 : f32 to vector<1x256xf32>
    %49 = arith.mulf %48, %24 : vector<1x256xf32>
    %50 = arith.addf %47, %49 : vector<1x256xf32>
    %cst_35 = arith.constant 0.0342675447 : f32
    %51 = vector.broadcast %cst_35 : f32 to vector<1x256xf32>
    %52 = arith.mulf %51, %27 : vector<1x256xf32>
    %53 = arith.addf %50, %52 : vector<1x256xf32>
    %c0_36 = arith.constant 0 : index
    %54 = memref.load %arg3[%c0_36] : memref<2xf32, #tpu.memory_space<smem>>
    %55 = arith.addf %5, %53 : vector<1x256xf32>
    %56 = vector.broadcast %54 : f32 to vector<1x256xf32>
    %57 = arith.mulf %56, %55 : vector<1x256xf32>
    %c1_37 = arith.constant 1 : index
    %58 = memref.load %arg3[%c1_37] : memref<2xf32, #tpu.memory_space<smem>>
    %59 = vector.broadcast %58 : f32 to vector<1x256xf32>
    %60 = arith.mulf %59, %5 : vector<1x256xf32>
    %61 = arith.addf %57, %60 : vector<1x256xf32>
    %c0_38 = arith.constant 0 : index
    %c128_39 = arith.constant 128 : index
    %62 = vector.load %arg12[%c0_38, %c128_39] : memref<3x512xf32, #tpu.memory_space<vmem>>, vector<1x256xf32>
    tpu.vector_store %arg12[%c0_38, %c128_39], %61 {strides = array<i32>} : memref<3x512xf32, #tpu.memory_space<vmem>>, vector<1x256xf32>,
    %c0_40 = arith.constant 0 : index
    %c111_41 = arith.constant 111 : index
    %63 = vector.load %arg12[%c0_40, %c111_41] : memref<3x512xf32, #tpu.memory_space<vmem>>, vector<1x256xf32>
    %c0_42 = arith.constant 0 : index
    %c0_43 = arith.constant 0 : index
    %64 = vector.load %arg8[%c0_42, %c0_43] : memref<2x256xf32, #tpu.memory_space<vmem>>, vector<1x256xf32>
    %65 = arith.mulf %63, %64 : vector<1x256xf32>
    %c0_44 = arith.constant 0 : index
    %c0_45 = arith.constant 0 : index
    %66 = vector.load %arg13[%c0_44, %c0_45] : memref<32x256xf32, #tpu.memory_space<vmem>>, vector<1x256xf32>
    tpu.vector_store %arg13[%c0_44, %c0_45], %65 {strides = array<i32>} : memref<32x256xf32, #tpu.memory_space<vmem>>, vector<1x256xf32>,
    %c0_46 = arith.constant 0 : index
    %c112_47 = arith.constant 112 : index
    %67 = vector.load %arg12[%c0_46, %c112_47] : memref<3x512xf32, #tpu.memory_space<vmem>>, vector<1x256xf32>
    %c1_48 = arith.constant 1 : index
    %c0_49 = arith.constant 0 : index
    %68 = vector.load %arg13[%c1_48, %c0_49] : memref<32x256xf32, #tpu.memory_space<vmem>>, vector<1x256xf32>
    tpu.vector_store %arg13[%c1_48, %c0_49], %67 {strides = array<i32>} : memref<32x256xf32, #tpu.memory_space<vmem>>, vector<1x256xf32>,
    %c0_50 = arith.constant 0 : index
    %c113_51 = arith.constant 113 : index
    %69 = vector.load %arg12[%c0_50, %c113_51] : memref<3x512xf32, #tpu.memory_space<vmem>>, vector<1x256xf32>
    %c1_52 = arith.constant 1 : index
    %c0_53 = arith.constant 0 : index
    %70 = vector.load %arg8[%c1_52, %c0_53] : memref<2x256xf32, #tpu.memory_space<vmem>>, vector<1x256xf32>
    %71 = arith.mulf %69, %70 : vector<1x256xf32>
    %c2 = arith.constant 2 : index
    %c0_54 = arith.constant 0 : index
    %72 = vector.load %arg13[%c2, %c0_54] : memref<32x256xf32, #tpu.memory_space<vmem>>, vector<1x256xf32>
    tpu.vector_store %arg13[%c2, %c0_54], %71 {strides = array<i32>} : memref<32x256xf32, #tpu.memory_space<vmem>>, vector<1x256xf32>,
    %c0_55 = arith.constant 0 : index
    %c127_56 = arith.constant 127 : index
    %73 = vector.load %arg12[%c0_55, %c127_56] : memref<3x512xf32, #tpu.memory_space<vmem>>, vector<1x256xf32>
    %c0_57 = arith.constant 0 : index
    %c0_58 = arith.constant 0 : index
    %74 = vector.load %arg8[%c0_57, %c0_58] : memref<2x256xf32, #tpu.memory_space<vmem>>, vector<1x256xf32>
    %75 = arith.mulf %73, %74 : vector<1x256xf32>
    %c3 = arith.constant 3 : index
    %c0_59 = arith.constant 0 : index
    %76 = vector.load %arg13[%c3, %c0_59] : memref<32x256xf32, #tpu.memory_space<vmem>>, vector<1x256xf32>
    tpu.vector_store %arg13[%c3, %c0_59], %75 {strides = array<i32>} : memref<32x256xf32, #tpu.memory_space<vmem>>, vector<1x256xf32>,
    %c0_60 = arith.constant 0 : index
    %c128_61 = arith.constant 128 : index
    %77 = vector.load %arg12[%c0_60, %c128_61] : memref<3x512xf32, #tpu.memory_space<vmem>>, vector<1x256xf32>
    %c4 = arith.constant 4 : index
    %c0_62 = arith.constant 0 : index
    %78 = vector.load %arg13[%c4, %c0_62] : memref<32x256xf32, #tpu.memory_space<vmem>>, vector<1x256xf32>
    tpu.vector_store %arg13[%c4, %c0_62], %77 {strides = array<i32>} : memref<32x256xf32, #tpu.memory_space<vmem>>, vector<1x256xf32>,
    %c0_63 = arith.constant 0 : index
    %c129_64 = arith.constant 129 : index
    %79 = vector.load %arg12[%c0_63, %c129_64] : memref<3x512xf32, #tpu.memory_space<vmem>>, vector<1x256xf32>
    %c1_65 = arith.constant 1 : index
    %c0_66 = arith.constant 0 : index
    %80 = vector.load %arg8[%c1_65, %c0_66] : memref<2x256xf32, #tpu.memory_space<vmem>>, vector<1x256xf32>
    %81 = arith.mulf %79, %80 : vector<1x256xf32>
    %c5 = arith.constant 5 : index
    %c0_67 = arith.constant 0 : index
    %82 = vector.load %arg13[%c5, %c0_67] : memref<32x256xf32, #tpu.memory_space<vmem>>, vector<1x256xf32>
    tpu.vector_store %arg13[%c5, %c0_67], %81 {strides = array<i32>} : memref<32x256xf32, #tpu.memory_space<vmem>>, vector<1x256xf32>,
    %c0_68 = arith.constant 0 : index
    %c143_69 = arith.constant 143 : index
    %83 = vector.load %arg12[%c0_68, %c143_69] : memref<3x512xf32, #tpu.memory_space<vmem>>, vector<1x256xf32>
    %c0_70 = arith.constant 0 : index
    %c0_71 = arith.constant 0 : index
    %84 = vector.load %arg8[%c0_70, %c0_71] : memref<2x256xf32, #tpu.memory_space<vmem>>, vector<1x256xf32>
    %85 = arith.mulf %83, %84 : vector<1x256xf32>
    %c6 = arith.constant 6 : index
    %c0_72 = arith.constant 0 : index
    %86 = vector.load %arg13[%c6, %c0_72] : memref<32x256xf32, #tpu.memory_space<vmem>>, vector<1x256xf32>
    tpu.vector_store %arg13[%c6, %c0_72], %85 {strides = array<i32>} : memref<32x256xf32, #tpu.memory_space<vmem>>, vector<1x256xf32>,
    %c0_73 = arith.constant 0 : index
    %c144_74 = arith.constant 144 : index
    %87 = vector.load %arg12[%c0_73, %c144_74] : memref<3x512xf32, #tpu.memory_space<vmem>>, vector<1x256xf32>
    %c7 = arith.constant 7 : index
    %c0_75 = arith.constant 0 : index
    %88 = vector.load %arg13[%c7, %c0_75] : memref<32x256xf32, #tpu.memory_space<vmem>>, vector<1x256xf32>
    tpu.vector_store %arg13[%c7, %c0_75], %87 {strides = array<i32>} : memref<32x256xf32, #tpu.memory_space<vmem>>, vector<1x256xf32>,
    %c0_76 = arith.constant 0 : index
    %c145_77 = arith.constant 145 : index
    %89 = vector.load %arg12[%c0_76, %c145_77] : memref<3x512xf32, #tpu.memory_space<vmem>>, vector<1x256xf32>
    %c1_78 = arith.constant 1 : index
    %c0_79 = arith.constant 0 : index
    %90 = vector.load %arg8[%c1_78, %c0_79] : memref<2x256xf32, #tpu.memory_space<vmem>>, vector<1x256xf32>
    %91 = arith.mulf %89, %90 : vector<1x256xf32>
    %c8 = arith.constant 8 : index
    %c0_80 = arith.constant 0 : index
    %92 = vector.load %arg13[%c8, %c0_80] : memref<32x256xf32, #tpu.memory_space<vmem>>, vector<1x256xf32>
    tpu.vector_store %arg13[%c8, %c0_80], %91 {strides = array<i32>} : memref<32x256xf32, #tpu.memory_space<vmem>>, vector<1x256xf32>,
    %c0_81 = arith.constant 0 : index
    %c0_82 = arith.constant 0 : index
    %93 = vector.load %arg6[%c0_81, %c0_82] : memref<3x9xf32, #tpu.memory_space<vmem>>, vector<3x9xf32>
    %c0_83 = arith.constant 0 : index
    %c0_84 = arith.constant 0 : index
    %94 = vector.load %arg13[%c0_83, %c0_84] : memref<32x256xf32, #tpu.memory_space<vmem>>, vector<9x256xf32>
    %cst_85 = arith.constant dense<0.000000e+00> : vector<3x256xf32>
    %95 = tpu.matmul %93, %94, %cst_85 {dimension_numbers = #tpu.dot_dimension_numbers<[1], [0], [0], [1], [0, 0, 1, 1], [], []>} : vector<3x9xf32>, vector<9x256xf32>, vector<3x256xf32> -> vector<3x256xf32>
    %c0_86 = arith.constant 0 : index
    %c128_87 = arith.constant 128 : index
    %96 = vector.load %arg12[%c0_86, %c128_87] : memref<3x512xf32, #tpu.memory_space<vmem>>, vector<3x256xf32>
    tpu.vector_store %arg12[%c0_86, %c128_87], %95 {strides = array<i32>} : memref<3x512xf32, #tpu.memory_space<vmem>>, vector<3x256xf32>,
    %c0_i32 = arith.constant 0 : i32
    %97 = vector.broadcast %c0_i32 : i32 to vector<3x1xi32>
    %98 = arith.cmpi eq, %0, %97 : vector<3x1xi32>
    %c0_88 = arith.constant 0 : index
    %c0_89 = arith.constant 0 : index
    %99 = memref.load %arg4[%c0_88, %c0_89] : memref<2x3xf32, #tpu.memory_space<smem>>
    %c1_i32 = arith.constant 1 : i32
    %100 = vector.broadcast %c1_i32 : i32 to vector<3x1xi32>
    %101 = arith.cmpi eq, %0, %100 : vector<3x1xi32>
    %c0_90 = arith.constant 0 : index
    %c1_91 = arith.constant 1 : index
    %102 = memref.load %arg4[%c0_90, %c1_91] : memref<2x3xf32, #tpu.memory_space<smem>>
    %c0_92 = arith.constant 0 : index
    %c2_93 = arith.constant 2 : index
    %103 = memref.load %arg4[%c0_92, %c2_93] : memref<2x3xf32, #tpu.memory_space<smem>>
    %104 = vector.broadcast %102 : f32 to vector<3x1xf32>
    %105 = vector.broadcast %103 : f32 to vector<3x1xf32>
    %106 = arith.select %101, %104, %105 : vector<3x1xi1>, vector<3x1xf32>
    %107 = vector.broadcast %99 : f32 to vector<3x1xf32>
    %108 = arith.select %98, %107, %106 : vector<3x1xi1>, vector<3x1xf32>
    %c0_94 = arith.constant 0 : index
    %109 = memref.load %arg5[%c0_94] : memref<2xi32, #tpu.memory_space<smem>>
    %c0_i32_95 = arith.constant 0 : i32
    %110 = arith.cmpi sgt, %109, %c0_i32_95 : i32
    %111 = arith.extui %110 : i1 to i32
    %c0_i32_96 = arith.constant 0 : i32
    %112 = arith.cmpi ne, %111, %c0_i32_96 : i32
    scf.if %112 {
      %c0_153 = arith.constant 0 : index
      %c111_154 = arith.constant 111 : index
      %175 = vector.load %arg12[%c0_153, %c111_154] : memref<3x512xf32, #tpu.memory_space<vmem>>, vector<3x256xf32>
      %c0_155 = arith.constant 0 : index
      %c0_156 = arith.constant 0 : index
      %176 = vector.load %arg8[%c0_155, %c0_156] : memref<2x256xf32, #tpu.memory_space<vmem>>, vector<1x256xf32>
      %177 = vector.broadcast %176 : vector<1x256xf32> to vector<3x256xf32>
      %178 = arith.mulf %175, %177 : vector<3x256xf32>
      %c0_157 = arith.constant 0 : index
      %c0_158 = arith.constant 0 : index
      %179 = vector.load %arg13[%c0_157, %c0_158] : memref<32x256xf32, #tpu.memory_space<vmem>>, vector<3x256xf32>
      tpu.vector_store %arg13[%c0_157, %c0_158], %178 {strides = array<i32>} : memref<32x256xf32, #tpu.memory_space<vmem>>, vector<3x256xf32>,
      %c0_159 = arith.constant 0 : index
      %c112_160 = arith.constant 112 : index
      %180 = vector.load %arg12[%c0_159, %c112_160] : memref<3x512xf32, #tpu.memory_space<vmem>>, vector<3x256xf32>
      %c3_161 = arith.constant 3 : index
      %c0_162 = arith.constant 0 : index
      %181 = vector.load %arg13[%c3_161, %c0_162] : memref<32x256xf32, #tpu.memory_space<vmem>>, vector<3x256xf32>
      tpu.vector_store %arg13[%c3_161, %c0_162], %180 {strides = array<i32>} : memref<32x256xf32, #tpu.memory_space<vmem>>, vector<3x256xf32>,
      %c0_163 = arith.constant 0 : index
      %c113_164 = arith.constant 113 : index
      %182 = vector.load %arg12[%c0_163, %c113_164] : memref<3x512xf32, #tpu.memory_space<vmem>>, vector<3x256xf32>
      %c1_165 = arith.constant 1 : index
      %c0_166 = arith.constant 0 : index
      %183 = vector.load %arg8[%c1_165, %c0_166] : memref<2x256xf32, #tpu.memory_space<vmem>>, vector<1x256xf32>
      %184 = vector.broadcast %183 : vector<1x256xf32> to vector<3x256xf32>
      %185 = arith.mulf %182, %184 : vector<3x256xf32>
      %c6_167 = arith.constant 6 : index
      %c0_168 = arith.constant 0 : index
      %186 = vector.load %arg13[%c6_167, %c0_168] : memref<32x256xf32, #tpu.memory_space<vmem>>, vector<3x256xf32>
      tpu.vector_store %arg13[%c6_167, %c0_168], %185 {strides = array<i32>} : memref<32x256xf32, #tpu.memory_space<vmem>>, vector<3x256xf32>,
      %c0_169 = arith.constant 0 : index
      %c127_170 = arith.constant 127 : index
      %187 = vector.load %arg12[%c0_169, %c127_170] : memref<3x512xf32, #tpu.memory_space<vmem>>, vector<3x256xf32>
      %c0_171 = arith.constant 0 : index
      %c0_172 = arith.constant 0 : index
      %188 = vector.load %arg8[%c0_171, %c0_172] : memref<2x256xf32, #tpu.memory_space<vmem>>, vector<1x256xf32>
      %189 = vector.broadcast %188 : vector<1x256xf32> to vector<3x256xf32>
      %190 = arith.mulf %187, %189 : vector<3x256xf32>
      %c9 = arith.constant 9 : index
      %c0_173 = arith.constant 0 : index
      %191 = vector.load %arg13[%c9, %c0_173] : memref<32x256xf32, #tpu.memory_space<vmem>>, vector<3x256xf32>
      tpu.vector_store %arg13[%c9, %c0_173], %190 {strides = array<i32>} : memref<32x256xf32, #tpu.memory_space<vmem>>, vector<3x256xf32>,
      %c0_174 = arith.constant 0 : index
      %c128_175 = arith.constant 128 : index
      %192 = vector.load %arg12[%c0_174, %c128_175] : memref<3x512xf32, #tpu.memory_space<vmem>>, vector<3x256xf32>
      %c12_176 = arith.constant 12 : index
      %c0_177 = arith.constant 0 : index
      %193 = vector.load %arg13[%c12_176, %c0_177] : memref<32x256xf32, #tpu.memory_space<vmem>>, vector<3x256xf32>
      tpu.vector_store %arg13[%c12_176, %c0_177], %192 {strides = array<i32>} : memref<32x256xf32, #tpu.memory_space<vmem>>, vector<3x256xf32>,
      %c0_178 = arith.constant 0 : index
      %c129_179 = arith.constant 129 : index
      %194 = vector.load %arg12[%c0_178, %c129_179] : memref<3x512xf32, #tpu.memory_space<vmem>>, vector<3x256xf32>
      %c1_180 = arith.constant 1 : index
      %c0_181 = arith.constant 0 : index
      %195 = vector.load %arg8[%c1_180, %c0_181] : memref<2x256xf32, #tpu.memory_space<vmem>>, vector<1x256xf32>
      %196 = vector.broadcast %195 : vector<1x256xf32> to vector<3x256xf32>
      %197 = arith.mulf %194, %196 : vector<3x256xf32>
      %c15 = arith.constant 15 : index
      %c0_182 = arith.constant 0 : index
      %198 = vector.load %arg13[%c15, %c0_182] : memref<32x256xf32, #tpu.memory_space<vmem>>, vector<3x256xf32>
      tpu.vector_store %arg13[%c15, %c0_182], %197 {strides = array<i32>} : memref<32x256xf32, #tpu.memory_space<vmem>>, vector<3x256xf32>,
      %c0_183 = arith.constant 0 : index
      %c143_184 = arith.constant 143 : index
      %199 = vector.load %arg12[%c0_183, %c143_184] : memref<3x512xf32, #tpu.memory_space<vmem>>, vector<3x256xf32>
      %c0_185 = arith.constant 0 : index
      %c0_186 = arith.constant 0 : index
      %200 = vector.load %arg8[%c0_185, %c0_186] : memref<2x256xf32, #tpu.memory_space<vmem>>, vector<1x256xf32>
      %201 = vector.broadcast %200 : vector<1x256xf32> to vector<3x256xf32>
      %202 = arith.mulf %199, %201 : vector<3x256xf32>
      %c18 = arith.constant 18 : index
      %c0_187 = arith.constant 0 : index
      %203 = vector.load %arg13[%c18, %c0_187] : memref<32x256xf32, #tpu.memory_space<vmem>>, vector<3x256xf32>
      tpu.vector_store %arg13[%c18, %c0_187], %202 {strides = array<i32>} : memref<32x256xf32, #tpu.memory_space<vmem>>, vector<3x256xf32>,
      %c0_188 = arith.constant 0 : index
      %c144_189 = arith.constant 144 : index
      %204 = vector.load %arg12[%c0_188, %c144_189] : memref<3x512xf32, #tpu.memory_space<vmem>>, vector<3x256xf32>
      %c21 = arith.constant 21 : index
      %c0_190 = arith.constant 0 : index
      %205 = vector.load %arg13[%c21, %c0_190] : memref<32x256xf32, #tpu.memory_space<vmem>>, vector<3x256xf32>
      tpu.vector_store %arg13[%c21, %c0_190], %204 {strides = array<i32>} : memref<32x256xf32, #tpu.memory_space<vmem>>, vector<3x256xf32>,
      %c0_191 = arith.constant 0 : index
      %c145_192 = arith.constant 145 : index
      %206 = vector.load %arg12[%c0_191, %c145_192] : memref<3x512xf32, #tpu.memory_space<vmem>>, vector<3x256xf32>
      %c1_193 = arith.constant 1 : index
      %c0_194 = arith.constant 0 : index
      %207 = vector.load %arg8[%c1_193, %c0_194] : memref<2x256xf32, #tpu.memory_space<vmem>>, vector<1x256xf32>
      %208 = vector.broadcast %207 : vector<1x256xf32> to vector<3x256xf32>
      %209 = arith.mulf %206, %208 : vector<3x256xf32>
      %c24 = arith.constant 24 : index
      %c0_195 = arith.constant 0 : index
      %210 = vector.load %arg13[%c24, %c0_195] : memref<32x256xf32, #tpu.memory_space<vmem>>, vector<3x256xf32>
      tpu.vector_store %arg13[%c24, %c0_195], %209 {strides = array<i32>} : memref<32x256xf32, #tpu.memory_space<vmem>>, vector<3x256xf32>,
      %c0_196 = arith.constant 0 : index
      %c0_197 = arith.constant 0 : index
      %c0_198 = arith.constant 0 : index
      %211 = vector.load %arg7[%c0_196, %c0_197, %c0_198] : memref<2x3x27xf32, #tpu.memory_space<vmem>>, vector<1x3x27xf32>
      %212 = vector.shape_cast %211 : vector<1x3x27xf32> to vector<3x27xf32>
      %c0_199 = arith.constant 0 : index
      %c0_200 = arith.constant 0 : index
      %213 = vector.load %arg13[%c0_199, %c0_200] : memref<32x256xf32, #tpu.memory_space<vmem>>, vector<27x256xf32>
      %cst_201 = arith.constant dense<0.000000e+00> : vector<3x256xf32>
      %214 = tpu.matmul %212, %213, %cst_201 {dimension_numbers = #tpu.dot_dimension_numbers<[1], [0], [0], [1], [0, 0, 1, 1], [], []>} : vector<3x27xf32>, vector<27x256xf32>, vector<3x256xf32> -> vector<3x256xf32>
      %c0_202 = arith.constant 0 : index
      %c128_203 = arith.constant 128 : index
      %215 = vector.load %arg12[%c0_202, %c128_203] : memref<3x512xf32, #tpu.memory_space<vmem>>, vector<3x256xf32>
      %216 = vector.broadcast %108 : vector<3x1xf32> to vector<3x256xf32>
      %217 = arith.mulf %216, %215 : vector<3x256xf32>
      %218 = arith.addf %214, %217 : vector<3x256xf32>
      %c0_204 = arith.constant 0 : index
      %c0_205 = arith.constant 0 : index
      %219 = vector.load %arg11[%c0_204, %c0_205] : memref<3x256xf32, #tpu.memory_space<vmem>>, vector<3x256xf32>
      tpu.vector_store %arg11[%c0_204, %c0_205], %218 {strides = array<i32>} : memref<3x256xf32, #tpu.memory_space<vmem>>, vector<3x256xf32>,
    } else {
    }
    %c0_97 = arith.constant 0 : index
    %113 = memref.load %arg5[%c0_97] : memref<2xi32, #tpu.memory_space<smem>>
    %c0_i32_98 = arith.constant 0 : i32
    %114 = arith.cmpi eq, %113, %c0_i32_98 : i32
    %115 = arith.extui %114 : i1 to i32
    %c0_i32_99 = arith.constant 0 : i32
    %116 = arith.cmpi ne, %115, %c0_i32_99 : i32
    scf.if %116 {
      %c0_153 = arith.constant 0 : index
      %c128_154 = arith.constant 128 : index
      %175 = vector.load %arg12[%c0_153, %c128_154] : memref<3x512xf32, #tpu.memory_space<vmem>>, vector<3x256xf32>
      %176 = vector.broadcast %108 : vector<3x1xf32> to vector<3x256xf32>
      %177 = arith.mulf %176, %175 : vector<3x256xf32>
      %c0_155 = arith.constant 0 : index
      %c0_156 = arith.constant 0 : index
      %178 = vector.load %arg11[%c0_155, %c0_156] : memref<3x256xf32, #tpu.memory_space<vmem>>, vector<3x256xf32>
      tpu.vector_store %arg11[%c0_155, %c0_156], %177 {strides = array<i32>} : memref<3x256xf32, #tpu.memory_space<vmem>>, vector<3x256xf32>,
    } else {
    }
    %c0_100 = arith.constant 0 : index
    %c0_101 = arith.constant 0 : index
    %117 = memref.load %arg1[%c0_100, %c0_101] : memref<2x15xf32, #tpu.memory_space<smem>>
    %cst_102 = arith.constant 9.99999971E-10 : f32
    %118 = arith.cmpf oge, %117, %cst_102 : f32
    %119 = arith.extui %118 : i1 to i32
    %c0_i32_103 = arith.constant 0 : i32
    %120 = arith.cmpi ne, %119, %c0_i32_103 : i32
    scf.if %120 {
      %c0_153 = arith.constant 0 : index
      %c0_154 = arith.constant 0 : index
      %175 = vector.load %arg11[%c0_153, %c0_154] : memref<3x256xf32, #tpu.memory_space<vmem>>, vector<3x256xf32>
      %c0_155 = arith.constant 0 : index
      %c0_156 = arith.constant 0 : index
      %176 = memref.load %arg2[%c0_155, %c0_156] : memref<2x55xf32, #tpu.memory_space<smem>>
      %cst_157 = arith.constant 1.500000e+00 : f32
      %177 = arith.mulf %cst_157, %176 : f32
      %cst_158 = arith.constant 5.000000e-01 : f32
      %178 = arith.addf %cst_158, %177 : f32
      %c0_159 = arith.constant 0 : index
      %c128_160 = arith.constant 128 : index
      %179 = vector.load %arg12[%c0_159, %c128_160] : memref<3x512xf32, #tpu.memory_space<vmem>>, vector<3x256xf32>
      %cst_161 = arith.constant 9.99999974E-5 : f32
      %180 = vector.broadcast %cst_161 : f32 to vector<3x256xf32>
      %181 = arith.maximumf %179, %180 : vector<3x256xf32>
      %182 = math.log %181 : vector<3x256xf32>
      %183 = vector.broadcast %178 : f32 to vector<3x256xf32>
      %184 = arith.mulf %183, %182 : vector<3x256xf32>
      %185 = math.exp %184 : vector<3x256xf32>
      %186 = vector.broadcast %117 : f32 to vector<3x256xf32>
      %187 = arith.mulf %186, %185 : vector<3x256xf32>
      %188 = arith.addf %175, %187 : vector<3x256xf32>
      %c0_162 = arith.constant 0 : index
      %c0_163 = arith.constant 0 : index
      %189 = vector.load %arg11[%c0_162, %c0_163] : memref<3x256xf32, #tpu.memory_space<vmem>>, vector<3x256xf32>
      tpu.vector_store %arg11[%c0_162, %c0_163], %188 {strides = array<i32>} : memref<3x256xf32, #tpu.memory_space<vmem>>, vector<3x256xf32>,
    } else {
    }
    %c0_104 = arith.constant 0 : index
    %c4_105 = arith.constant 4 : index
    %121 = memref.load %arg1[%c0_104, %c4_105] : memref<2x15xf32, #tpu.memory_space<smem>>
    %cst_106 = arith.constant 9.99999971E-10 : f32
    %122 = arith.cmpf oge, %121, %cst_106 : f32
    %123 = arith.extui %122 : i1 to i32
    %c0_i32_107 = arith.constant 0 : i32
    %124 = arith.cmpi ne, %123, %c0_i32_107 : i32
    scf.if %124 {
      %c0_153 = arith.constant 0 : index
      %c0_154 = arith.constant 0 : index
      %175 = vector.load %arg11[%c0_153, %c0_154] : memref<3x256xf32, #tpu.memory_space<vmem>>, vector<3x256xf32>
      %c0_155 = arith.constant 0 : index
      %c128_156 = arith.constant 128 : index
      %176 = vector.load %arg12[%c0_155, %c128_156] : memref<3x512xf32, #tpu.memory_space<vmem>>, vector<3x256xf32>
      %cst_157 = arith.constant dense<0.000000e+00> : vector<3xf32>
      %177 = vector.multi_reduction <add>, %176, %cst_157 [1] : vector<3x256xf32> to vector<3xf32>
      %178 = vector.shape_cast %177 : vector<3xf32> to vector<3x1xf32>
      %cst_158 = arith.constant 2.560000e+02 : f32
      %179 = vector.broadcast %cst_158 : f32 to vector<3x1xf32>
      %180 = arith.divf %178, %179 : vector<3x1xf32>
      %181 = vector.extract_strided_slice %180 {offsets = [0, 0], sizes = [1, 1], strides = [1, 1]} : vector<3x1xf32> to vector<1x1xf32>
      %182 = vector.extract_strided_slice %180 {offsets = [1, 0], sizes = [1, 1], strides = [1, 1]} : vector<3x1xf32> to vector<1x1xf32>
      %183 = arith.addf %181, %182 : vector<1x1xf32>
      %184 = vector.extract_strided_slice %180 {offsets = [2, 0], sizes = [1, 1], strides = [1, 1]} : vector<3x1xf32> to vector<1x1xf32>
      %185 = arith.addf %183, %184 : vector<1x1xf32>
      %cst_159 = arith.constant 0.333333343 : f32
      %186 = vector.broadcast %cst_159 : f32 to vector<1x1xf32>
      %187 = arith.mulf %185, %186 : vector<1x1xf32>
      %cst_160 = arith.constant 9.99999997E-7 : f32
      %188 = vector.broadcast %cst_160 : f32 to vector<3x1xf32>
      %189 = arith.addf %180, %188 : vector<3x1xf32>
      %190 = vector.broadcast %187 : vector<1x1xf32> to vector<3x1xf32>
      %191 = arith.divf %190, %189 : vector<3x1xf32>
      %192 = vector.broadcast %191 : vector<3x1xf32> to vector<3x256xf32>
      %193 = arith.mulf %176, %192 : vector<3x256xf32>
      %194 = vector.broadcast %121 : f32 to vector<3x256xf32>
      %195 = arith.mulf %194, %193 : vector<3x256xf32>
      %196 = arith.addf %175, %195 : vector<3x256xf32>
      %c0_161 = arith.constant 0 : index
      %c0_162 = arith.constant 0 : index
      %197 = vector.load %arg11[%c0_161, %c0_162] : memref<3x256xf32, #tpu.memory_space<vmem>>, vector<3x256xf32>
      tpu.vector_store %arg11[%c0_161, %c0_162], %196 {strides = array<i32>} : memref<3x256xf32, #tpu.memory_space<vmem>>, vector<3x256xf32>,
    } else {
    }
    %c0_108 = arith.constant 0 : index
    %c12 = arith.constant 12 : index
    %125 = memref.load %arg1[%c0_108, %c12] : memref<2x15xf32, #tpu.memory_space<smem>>
    %cst_109 = arith.constant 9.99999971E-10 : f32
    %126 = arith.cmpf oge, %125, %cst_109 : f32
    %127 = arith.extui %126 : i1 to i32
    %c0_i32_110 = arith.constant 0 : i32
    %128 = arith.cmpi ne, %127, %c0_i32_110 : i32
    scf.if %128 {
      %c0_153 = arith.constant 0 : index
      %c0_154 = arith.constant 0 : index
      %175 = vector.load %arg11[%c0_153, %c0_154] : memref<3x256xf32, #tpu.memory_space<vmem>>, vector<3x256xf32>
      %c0_155 = arith.constant 0 : index
      %c128_156 = arith.constant 128 : index
      %176 = vector.load %arg12[%c0_155, %c128_156] : memref<3x512xf32, #tpu.memory_space<vmem>>, vector<3x256xf32>
      %177 = vector.extract_strided_slice %176 {offsets = [0, 0], sizes = [1, 256], strides = [1, 1]} : vector<3x256xf32> to vector<1x256xf32>
      %178 = vector.extract_strided_slice %176 {offsets = [1, 0], sizes = [1, 256], strides = [1, 1]} : vector<3x256xf32> to vector<1x256xf32>
      %179 = vector.extract_strided_slice %176 {offsets = [2, 0], sizes = [1, 256], strides = [1, 1]} : vector<3x256xf32> to vector<1x256xf32>
      %cst_157 = arith.constant 1.000000e+00 : f32
      %180 = vector.broadcast %cst_157 : f32 to vector<1x256xf32>
      %181 = arith.mulf %177, %177 : vector<1x256xf32>
      %182 = arith.mulf %178, %178 : vector<1x256xf32>
      %183 = arith.mulf %179, %179 : vector<1x256xf32>
      %184 = arith.mulf %177, %178 : vector<1x256xf32>
      %185 = arith.mulf %177, %179 : vector<1x256xf32>
      %186 = arith.mulf %178, %179 : vector<1x256xf32>
      %c0_158 = arith.constant 0 : index
      %c17 = arith.constant 17 : index
      %187 = memref.load %arg2[%c0_158, %c17] : memref<2x55xf32, #tpu.memory_space<smem>>
      %188 = vector.broadcast %187 : f32 to vector<1x256xf32>
      %189 = arith.mulf %188, %181 : vector<1x256xf32>
      %c0_159 = arith.constant 0 : index
      %c18 = arith.constant 18 : index
      %190 = memref.load %arg2[%c0_159, %c18] : memref<2x55xf32, #tpu.memory_space<smem>>
      %191 = vector.broadcast %190 : f32 to vector<1x256xf32>
      %192 = arith.mulf %191, %182 : vector<1x256xf32>
      %193 = arith.addf %189, %192 : vector<1x256xf32>
      %c0_160 = arith.constant 0 : index
      %c19 = arith.constant 19 : index
      %194 = memref.load %arg2[%c0_160, %c19] : memref<2x55xf32, #tpu.memory_space<smem>>
      %195 = vector.broadcast %194 : f32 to vector<1x256xf32>
      %196 = arith.mulf %195, %183 : vector<1x256xf32>
      %197 = arith.addf %193, %196 : vector<1x256xf32>
      %c0_161 = arith.constant 0 : index
      %c20 = arith.constant 20 : index
      %198 = memref.load %arg2[%c0_161, %c20] : memref<2x55xf32, #tpu.memory_space<smem>>
      %199 = vector.broadcast %198 : f32 to vector<1x256xf32>
      %200 = arith.mulf %199, %184 : vector<1x256xf32>
      %201 = arith.addf %197, %200 : vector<1x256xf32>
      %c0_162 = arith.constant 0 : index
      %c21 = arith.constant 21 : index
      %202 = memref.load %arg2[%c0_162, %c21] : memref<2x55xf32, #tpu.memory_space<smem>>
      %203 = vector.broadcast %202 : f32 to vector<1x256xf32>
      %204 = arith.mulf %203, %185 : vector<1x256xf32>
      %205 = arith.addf %201, %204 : vector<1x256xf32>
      %c0_163 = arith.constant 0 : index
      %c22 = arith.constant 22 : index
      %206 = memref.load %arg2[%c0_163, %c22] : memref<2x55xf32, #tpu.memory_space<smem>>
      %207 = vector.broadcast %206 : f32 to vector<1x256xf32>
      %208 = arith.mulf %207, %186 : vector<1x256xf32>
      %209 = arith.addf %205, %208 : vector<1x256xf32>
      %c0_164 = arith.constant 0 : index
      %c23 = arith.constant 23 : index
      %210 = memref.load %arg2[%c0_164, %c23] : memref<2x55xf32, #tpu.memory_space<smem>>
      %211 = vector.broadcast %210 : f32 to vector<1x256xf32>
      %212 = arith.mulf %211, %177 : vector<1x256xf32>
      %213 = arith.addf %209, %212 : vector<1x256xf32>
      %c0_165 = arith.constant 0 : index
      %c24 = arith.constant 24 : index
      %214 = memref.load %arg2[%c0_165, %c24] : memref<2x55xf32, #tpu.memory_space<smem>>
      %215 = vector.broadcast %214 : f32 to vector<1x256xf32>
      %216 = arith.mulf %215, %178 : vector<1x256xf32>
      %217 = arith.addf %213, %216 : vector<1x256xf32>
      %c0_166 = arith.constant 0 : index
      %c25 = arith.constant 25 : index
      %218 = memref.load %arg2[%c0_166, %c25] : memref<2x55xf32, #tpu.memory_space<smem>>
      %219 = vector.broadcast %218 : f32 to vector<1x256xf32>
      %220 = arith.mulf %219, %179 : vector<1x256xf32>
      %221 = arith.addf %217, %220 : vector<1x256xf32>
      %c0_167 = arith.constant 0 : index
      %c26 = arith.constant 26 : index
      %222 = memref.load %arg2[%c0_167, %c26] : memref<2x55xf32, #tpu.memory_space<smem>>
      %223 = vector.broadcast %222 : f32 to vector<1x256xf32>
      %224 = arith.mulf %223, %180 : vector<1x256xf32>
      %225 = arith.addf %221, %224 : vector<1x256xf32>
      %c0_168 = arith.constant 0 : index
      %c27 = arith.constant 27 : index
      %226 = memref.load %arg2[%c0_168, %c27] : memref<2x55xf32, #tpu.memory_space<smem>>
      %227 = vector.broadcast %226 : f32 to vector<1x256xf32>
      %228 = arith.mulf %227, %181 : vector<1x256xf32>
      %c0_169 = arith.constant 0 : index
      %c28 = arith.constant 28 : index
      %229 = memref.load %arg2[%c0_169, %c28] : memref<2x55xf32, #tpu.memory_space<smem>>
      %230 = vector.broadcast %229 : f32 to vector<1x256xf32>
      %231 = arith.mulf %230, %182 : vector<1x256xf32>
      %232 = arith.addf %228, %231 : vector<1x256xf32>
      %c0_170 = arith.constant 0 : index
      %c29 = arith.constant 29 : index
      %233 = memref.load %arg2[%c0_170, %c29] : memref<2x55xf32, #tpu.memory_space<smem>>
      %234 = vector.broadcast %233 : f32 to vector<1x256xf32>
      %235 = arith.mulf %234, %183 : vector<1x256xf32>
      %236 = arith.addf %232, %235 : vector<1x256xf32>
      %c0_171 = arith.constant 0 : index
      %c30 = arith.constant 30 : index
      %237 = memref.load %arg2[%c0_171, %c30] : memref<2x55xf32, #tpu.memory_space<smem>>
      %238 = vector.broadcast %237 : f32 to vector<1x256xf32>
      %239 = arith.mulf %238, %184 : vector<1x256xf32>
      %240 = arith.addf %236, %239 : vector<1x256xf32>
      %c0_172 = arith.constant 0 : index
      %c31 = arith.constant 31 : index
      %241 = memref.load %arg2[%c0_172, %c31] : memref<2x55xf32, #tpu.memory_space<smem>>
      %242 = vector.broadcast %241 : f32 to vector<1x256xf32>
      %243 = arith.mulf %242, %185 : vector<1x256xf32>
      %244 = arith.addf %240, %243 : vector<1x256xf32>
      %c0_173 = arith.constant 0 : index
      %c32 = arith.constant 32 : index
      %245 = memref.load %arg2[%c0_173, %c32] : memref<2x55xf32, #tpu.memory_space<smem>>
      %246 = vector.broadcast %245 : f32 to vector<1x256xf32>
      %247 = arith.mulf %246, %186 : vector<1x256xf32>
      %248 = arith.addf %244, %247 : vector<1x256xf32>
      %c0_174 = arith.constant 0 : index
      %c33 = arith.constant 33 : index
      %249 = memref.load %arg2[%c0_174, %c33] : memref<2x55xf32, #tpu.memory_space<smem>>
      %250 = vector.broadcast %249 : f32 to vector<1x256xf32>
      %251 = arith.mulf %250, %177 : vector<1x256xf32>
      %252 = arith.addf %248, %251 : vector<1x256xf32>
      %c0_175 = arith.constant 0 : index
      %c34 = arith.constant 34 : index
      %253 = memref.load %arg2[%c0_175, %c34] : memref<2x55xf32, #tpu.memory_space<smem>>
      %254 = vector.broadcast %253 : f32 to vector<1x256xf32>
      %255 = arith.mulf %254, %178 : vector<1x256xf32>
      %256 = arith.addf %252, %255 : vector<1x256xf32>
      %c0_176 = arith.constant 0 : index
      %c35 = arith.constant 35 : index
      %257 = memref.load %arg2[%c0_176, %c35] : memref<2x55xf32, #tpu.memory_space<smem>>
      %258 = vector.broadcast %257 : f32 to vector<1x256xf32>
      %259 = arith.mulf %258, %179 : vector<1x256xf32>
      %260 = arith.addf %256, %259 : vector<1x256xf32>
      %c0_177 = arith.constant 0 : index
      %c36 = arith.constant 36 : index
      %261 = memref.load %arg2[%c0_177, %c36] : memref<2x55xf32, #tpu.memory_space<smem>>
      %262 = vector.broadcast %261 : f32 to vector<1x256xf32>
      %263 = arith.mulf %262, %180 : vector<1x256xf32>
      %264 = arith.addf %260, %263 : vector<1x256xf32>
      %c0_178 = arith.constant 0 : index
      %c37 = arith.constant 37 : index
      %265 = memref.load %arg2[%c0_178, %c37] : memref<2x55xf32, #tpu.memory_space<smem>>
      %266 = vector.broadcast %265 : f32 to vector<1x256xf32>
      %267 = arith.mulf %266, %181 : vector<1x256xf32>
      %c0_179 = arith.constant 0 : index
      %c38 = arith.constant 38 : index
      %268 = memref.load %arg2[%c0_179, %c38] : memref<2x55xf32, #tpu.memory_space<smem>>
      %269 = vector.broadcast %268 : f32 to vector<1x256xf32>
      %270 = arith.mulf %269, %182 : vector<1x256xf32>
      %271 = arith.addf %267, %270 : vector<1x256xf32>
      %c0_180 = arith.constant 0 : index
      %c39 = arith.constant 39 : index
      %272 = memref.load %arg2[%c0_180, %c39] : memref<2x55xf32, #tpu.memory_space<smem>>
      %273 = vector.broadcast %272 : f32 to vector<1x256xf32>
      %274 = arith.mulf %273, %183 : vector<1x256xf32>
      %275 = arith.addf %271, %274 : vector<1x256xf32>
      %c0_181 = arith.constant 0 : index
      %c40 = arith.constant 40 : index
      %276 = memref.load %arg2[%c0_181, %c40] : memref<2x55xf32, #tpu.memory_space<smem>>
      %277 = vector.broadcast %276 : f32 to vector<1x256xf32>
      %278 = arith.mulf %277, %184 : vector<1x256xf32>
      %279 = arith.addf %275, %278 : vector<1x256xf32>
      %c0_182 = arith.constant 0 : index
      %c41 = arith.constant 41 : index
      %280 = memref.load %arg2[%c0_182, %c41] : memref<2x55xf32, #tpu.memory_space<smem>>
      %281 = vector.broadcast %280 : f32 to vector<1x256xf32>
      %282 = arith.mulf %281, %185 : vector<1x256xf32>
      %283 = arith.addf %279, %282 : vector<1x256xf32>
      %c0_183 = arith.constant 0 : index
      %c42 = arith.constant 42 : index
      %284 = memref.load %arg2[%c0_183, %c42] : memref<2x55xf32, #tpu.memory_space<smem>>
      %285 = vector.broadcast %284 : f32 to vector<1x256xf32>
      %286 = arith.mulf %285, %186 : vector<1x256xf32>
      %287 = arith.addf %283, %286 : vector<1x256xf32>
      %c0_184 = arith.constant 0 : index
      %c43 = arith.constant 43 : index
      %288 = memref.load %arg2[%c0_184, %c43] : memref<2x55xf32, #tpu.memory_space<smem>>
      %289 = vector.broadcast %288 : f32 to vector<1x256xf32>
      %290 = arith.mulf %289, %177 : vector<1x256xf32>
      %291 = arith.addf %287, %290 : vector<1x256xf32>
      %c0_185 = arith.constant 0 : index
      %c44 = arith.constant 44 : index
      %292 = memref.load %arg2[%c0_185, %c44] : memref<2x55xf32, #tpu.memory_space<smem>>
      %293 = vector.broadcast %292 : f32 to vector<1x256xf32>
      %294 = arith.mulf %293, %178 : vector<1x256xf32>
      %295 = arith.addf %291, %294 : vector<1x256xf32>
      %c0_186 = arith.constant 0 : index
      %c45 = arith.constant 45 : index
      %296 = memref.load %arg2[%c0_186, %c45] : memref<2x55xf32, #tpu.memory_space<smem>>
      %297 = vector.broadcast %296 : f32 to vector<1x256xf32>
      %298 = arith.mulf %297, %179 : vector<1x256xf32>
      %299 = arith.addf %295, %298 : vector<1x256xf32>
      %c0_187 = arith.constant 0 : index
      %c46 = arith.constant 46 : index
      %300 = memref.load %arg2[%c0_187, %c46] : memref<2x55xf32, #tpu.memory_space<smem>>
      %301 = vector.broadcast %300 : f32 to vector<1x256xf32>
      %302 = arith.mulf %301, %180 : vector<1x256xf32>
      %303 = arith.addf %299, %302 : vector<1x256xf32>
      %304 = tpu.concatenate %225, %264, %303 in 0 : vector<1x256xf32>, vector<1x256xf32>, vector<1x256xf32> -> vector<3x256xf32>
      %305 = vector.broadcast %125 : f32 to vector<3x256xf32>
      %306 = arith.mulf %305, %304 : vector<3x256xf32>
      %307 = arith.addf %175, %306 : vector<3x256xf32>
      %c0_188 = arith.constant 0 : index
      %c0_189 = arith.constant 0 : index
      %308 = vector.load %arg11[%c0_188, %c0_189] : memref<3x256xf32, #tpu.memory_space<vmem>>, vector<3x256xf32>
      tpu.vector_store %arg11[%c0_188, %c0_189], %307 {strides = array<i32>} : memref<3x256xf32, #tpu.memory_space<vmem>>, vector<3x256xf32>,
    } else {
    }
    %c0_111 = arith.constant 0 : index
    %c13 = arith.constant 13 : index
    %129 = memref.load %arg1[%c0_111, %c13] : memref<2x15xf32, #tpu.memory_space<smem>>
    %cst_112 = arith.constant 9.99999971E-10 : f32
    %130 = arith.cmpf oge, %129, %cst_112 : f32
    %131 = arith.extui %130 : i1 to i32
    %c0_i32_113 = arith.constant 0 : i32
    %132 = arith.cmpi ne, %131, %c0_i32_113 : i32
    scf.if %132 {
      %c0_153 = arith.constant 0 : index
      %c0_154 = arith.constant 0 : index
      %175 = vector.load %arg11[%c0_153, %c0_154] : memref<3x256xf32, #tpu.memory_space<vmem>>, vector<3x256xf32>
      %c0_155 = arith.constant 0 : index
      %c47 = arith.constant 47 : index
      %176 = memref.load %arg2[%c0_155, %c47] : memref<2x55xf32, #tpu.memory_space<smem>>
      %c0_156 = arith.constant 0 : index
      %c48 = arith.constant 48 : index
      %177 = memref.load %arg2[%c0_156, %c48] : memref<2x55xf32, #tpu.memory_space<smem>>
      %c0_157 = arith.constant 0 : index
      %c49 = arith.constant 49 : index
      %178 = memref.load %arg2[%c0_157, %c49] : memref<2x55xf32, #tpu.memory_space<smem>>
      %c0_158 = arith.constant 0 : index
      %c128_159 = arith.constant 128 : index
      %179 = vector.load %arg12[%c0_158, %c128_159] : memref<3x512xf32, #tpu.memory_space<vmem>>, vector<3x256xf32>
      %cst_160 = arith.constant 0.000000e+00 : f32
      %cst_161 = arith.constant 1.000000e+00 : f32
      %180 = vector.broadcast %cst_160 : f32 to vector<3x256xf32>
      %181 = arith.maximumf %180, %179 : vector<3x256xf32>
      %182 = vector.broadcast %cst_161 : f32 to vector<3x256xf32>
      %183 = arith.minimumf %182, %181 : vector<3x256xf32>
      %cst_162 = arith.constant 1.000000e+00 : f32
      %184 = vector.broadcast %cst_162 : f32 to vector<3x256xf32>
      %185 = arith.subf %184, %183 : vector<3x256xf32>
      %186 = arith.mulf %183, %183 : vector<3x256xf32>
      %187 = arith.mulf %185, %185 : vector<3x256xf32>
      %cst_163 = arith.constant 4.000000e+00 : f32
      %188 = vector.broadcast %cst_163 : f32 to vector<3x256xf32>
      %189 = arith.mulf %188, %187 : vector<3x256xf32>
      %190 = arith.mulf %189, %185 : vector<3x256xf32>
      %191 = arith.mulf %190, %183 : vector<3x256xf32>
      %192 = vector.broadcast %176 : f32 to vector<3x256xf32>
      %193 = arith.mulf %191, %192 : vector<3x256xf32>
      %cst_164 = arith.constant 6.000000e+00 : f32
      %194 = vector.broadcast %cst_164 : f32 to vector<3x256xf32>
      %195 = arith.mulf %194, %187 : vector<3x256xf32>
      %196 = arith.mulf %195, %186 : vector<3x256xf32>
      %197 = vector.broadcast %177 : f32 to vector<3x256xf32>
      %198 = arith.mulf %196, %197 : vector<3x256xf32>
      %199 = arith.addf %193, %198 : vector<3x256xf32>
      %cst_165 = arith.constant 4.000000e+00 : f32
      %200 = vector.broadcast %cst_165 : f32 to vector<3x256xf32>
      %201 = arith.mulf %200, %185 : vector<3x256xf32>
      %202 = arith.mulf %201, %186 : vector<3x256xf32>
      %203 = arith.mulf %202, %183 : vector<3x256xf32>
      %204 = vector.broadcast %178 : f32 to vector<3x256xf32>
      %205 = arith.mulf %203, %204 : vector<3x256xf32>
      %206 = arith.addf %199, %205 : vector<3x256xf32>
      %207 = arith.mulf %186, %186 : vector<3x256xf32>
      %208 = arith.addf %206, %207 : vector<3x256xf32>
      %209 = vector.broadcast %129 : f32 to vector<3x256xf32>
      %210 = arith.mulf %209, %208 : vector<3x256xf32>
      %211 = arith.addf %175, %210 : vector<3x256xf32>
      %c0_166 = arith.constant 0 : index
      %c0_167 = arith.constant 0 : index
      %212 = vector.load %arg11[%c0_166, %c0_167] : memref<3x256xf32, #tpu.memory_space<vmem>>, vector<3x256xf32>
      tpu.vector_store %arg11[%c0_166, %c0_167], %211 {strides = array<i32>} : memref<3x256xf32, #tpu.memory_space<vmem>>, vector<3x256xf32>,
    } else {
    }
    %c0_114 = arith.constant 0 : index
    %c0_115 = arith.constant 0 : index
    %133 = vector.load %arg11[%c0_114, %c0_115] : memref<3x256xf32, #tpu.memory_space<vmem>>, vector<3x256xf32>
    %c0_116 = arith.constant 0 : index
    %c128_117 = arith.constant 128 : index
    %134 = vector.load %arg12[%c0_116, %c128_117] : memref<3x512xf32, #tpu.memory_space<vmem>>, vector<3x256xf32>
    tpu.vector_store %arg12[%c0_116, %c128_117], %133 {strides = array<i32>} : memref<3x512xf32, #tpu.memory_space<vmem>>, vector<3x256xf32>,
    %c0_i32_118 = arith.constant 0 : i32
    %135 = vector.broadcast %c0_i32_118 : i32 to vector<3x1xi32>
    %136 = arith.cmpi eq, %0, %135 : vector<3x1xi32>
    %c1_119 = arith.constant 1 : index
    %c0_120 = arith.constant 0 : index
    %137 = memref.load %arg4[%c1_119, %c0_120] : memref<2x3xf32, #tpu.memory_space<smem>>
    %c1_i32_121 = arith.constant 1 : i32
    %138 = vector.broadcast %c1_i32_121 : i32 to vector<3x1xi32>
    %139 = arith.cmpi eq, %0, %138 : vector<3x1xi32>
    %c1_122 = arith.constant 1 : index
    %c1_123 = arith.constant 1 : index
    %140 = memref.load %arg4[%c1_122, %c1_123] : memref<2x3xf32, #tpu.memory_space<smem>>
    %c1_124 = arith.constant 1 : index
    %c2_125 = arith.constant 2 : index
    %141 = memref.load %arg4[%c1_124, %c2_125] : memref<2x3xf32, #tpu.memory_space<smem>>
    %142 = vector.broadcast %140 : f32 to vector<3x1xf32>
    %143 = vector.broadcast %141 : f32 to vector<3x1xf32>
    %144 = arith.select %139, %142, %143 : vector<3x1xi1>, vector<3x1xf32>
    %145 = vector.broadcast %137 : f32 to vector<3x1xf32>
    %146 = arith.select %136, %145, %144 : vector<3x1xi1>, vector<3x1xf32>
    %c1_126 = arith.constant 1 : index
    %147 = memref.load %arg5[%c1_126] : memref<2xi32, #tpu.memory_space<smem>>
    %c0_i32_127 = arith.constant 0 : i32
    %148 = arith.cmpi sgt, %147, %c0_i32_127 : i32
    %149 = arith.extui %148 : i1 to i32
    %c0_i32_128 = arith.constant 0 : i32
    %150 = arith.cmpi ne, %149, %c0_i32_128 : i32
    scf.if %150 {
      %c0_153 = arith.constant 0 : index
      %c111_154 = arith.constant 111 : index
      %175 = vector.load %arg12[%c0_153, %c111_154] : memref<3x512xf32, #tpu.memory_space<vmem>>, vector<3x256xf32>
      %c0_155 = arith.constant 0 : index
      %c0_156 = arith.constant 0 : index
      %176 = vector.load %arg8[%c0_155, %c0_156] : memref<2x256xf32, #tpu.memory_space<vmem>>, vector<1x256xf32>
      %177 = vector.broadcast %176 : vector<1x256xf32> to vector<3x256xf32>
      %178 = arith.mulf %175, %177 : vector<3x256xf32>
      %c0_157 = arith.constant 0 : index
      %c0_158 = arith.constant 0 : index
      %179 = vector.load %arg13[%c0_157, %c0_158] : memref<32x256xf32, #tpu.memory_space<vmem>>, vector<3x256xf32>
      tpu.vector_store %arg13[%c0_157, %c0_158], %178 {strides = array<i32>} : memref<32x256xf32, #tpu.memory_space<vmem>>, vector<3x256xf32>,
      %c0_159 = arith.constant 0 : index
      %c112_160 = arith.constant 112 : index
      %180 = vector.load %arg12[%c0_159, %c112_160] : memref<3x512xf32, #tpu.memory_space<vmem>>, vector<3x256xf32>
      %c3_161 = arith.constant 3 : index
      %c0_162 = arith.constant 0 : index
      %181 = vector.load %arg13[%c3_161, %c0_162] : memref<32x256xf32, #tpu.memory_space<vmem>>, vector<3x256xf32>
      tpu.vector_store %arg13[%c3_161, %c0_162], %180 {strides = array<i32>} : memref<32x256xf32, #tpu.memory_space<vmem>>, vector<3x256xf32>,
      %c0_163 = arith.constant 0 : index
      %c113_164 = arith.constant 113 : index
      %182 = vector.load %arg12[%c0_163, %c113_164] : memref<3x512xf32, #tpu.memory_space<vmem>>, vector<3x256xf32>
      %c1_165 = arith.constant 1 : index
      %c0_166 = arith.constant 0 : index
      %183 = vector.load %arg8[%c1_165, %c0_166] : memref<2x256xf32, #tpu.memory_space<vmem>>, vector<1x256xf32>
      %184 = vector.broadcast %183 : vector<1x256xf32> to vector<3x256xf32>
      %185 = arith.mulf %182, %184 : vector<3x256xf32>
      %c6_167 = arith.constant 6 : index
      %c0_168 = arith.constant 0 : index
      %186 = vector.load %arg13[%c6_167, %c0_168] : memref<32x256xf32, #tpu.memory_space<vmem>>, vector<3x256xf32>
      tpu.vector_store %arg13[%c6_167, %c0_168], %185 {strides = array<i32>} : memref<32x256xf32, #tpu.memory_space<vmem>>, vector<3x256xf32>,
      %c0_169 = arith.constant 0 : index
      %c127_170 = arith.constant 127 : index
      %187 = vector.load %arg12[%c0_169, %c127_170] : memref<3x512xf32, #tpu.memory_space<vmem>>, vector<3x256xf32>
      %c0_171 = arith.constant 0 : index
      %c0_172 = arith.constant 0 : index
      %188 = vector.load %arg8[%c0_171, %c0_172] : memref<2x256xf32, #tpu.memory_space<vmem>>, vector<1x256xf32>
      %189 = vector.broadcast %188 : vector<1x256xf32> to vector<3x256xf32>
      %190 = arith.mulf %187, %189 : vector<3x256xf32>
      %c9 = arith.constant 9 : index
      %c0_173 = arith.constant 0 : index
      %191 = vector.load %arg13[%c9, %c0_173] : memref<32x256xf32, #tpu.memory_space<vmem>>, vector<3x256xf32>
      tpu.vector_store %arg13[%c9, %c0_173], %190 {strides = array<i32>} : memref<32x256xf32, #tpu.memory_space<vmem>>, vector<3x256xf32>,
      %c0_174 = arith.constant 0 : index
      %c128_175 = arith.constant 128 : index
      %192 = vector.load %arg12[%c0_174, %c128_175] : memref<3x512xf32, #tpu.memory_space<vmem>>, vector<3x256xf32>
      %c12_176 = arith.constant 12 : index
      %c0_177 = arith.constant 0 : index
      %193 = vector.load %arg13[%c12_176, %c0_177] : memref<32x256xf32, #tpu.memory_space<vmem>>, vector<3x256xf32>
      tpu.vector_store %arg13[%c12_176, %c0_177], %192 {strides = array<i32>} : memref<32x256xf32, #tpu.memory_space<vmem>>, vector<3x256xf32>,
      %c0_178 = arith.constant 0 : index
      %c129_179 = arith.constant 129 : index
      %194 = vector.load %arg12[%c0_178, %c129_179] : memref<3x512xf32, #tpu.memory_space<vmem>>, vector<3x256xf32>
      %c1_180 = arith.constant 1 : index
      %c0_181 = arith.constant 0 : index
      %195 = vector.load %arg8[%c1_180, %c0_181] : memref<2x256xf32, #tpu.memory_space<vmem>>, vector<1x256xf32>
      %196 = vector.broadcast %195 : vector<1x256xf32> to vector<3x256xf32>
      %197 = arith.mulf %194, %196 : vector<3x256xf32>
      %c15 = arith.constant 15 : index
      %c0_182 = arith.constant 0 : index
      %198 = vector.load %arg13[%c15, %c0_182] : memref<32x256xf32, #tpu.memory_space<vmem>>, vector<3x256xf32>
      tpu.vector_store %arg13[%c15, %c0_182], %197 {strides = array<i32>} : memref<32x256xf32, #tpu.memory_space<vmem>>, vector<3x256xf32>,
      %c0_183 = arith.constant 0 : index
      %c143_184 = arith.constant 143 : index
      %199 = vector.load %arg12[%c0_183, %c143_184] : memref<3x512xf32, #tpu.memory_space<vmem>>, vector<3x256xf32>
      %c0_185 = arith.constant 0 : index
      %c0_186 = arith.constant 0 : index
      %200 = vector.load %arg8[%c0_185, %c0_186] : memref<2x256xf32, #tpu.memory_space<vmem>>, vector<1x256xf32>
      %201 = vector.broadcast %200 : vector<1x256xf32> to vector<3x256xf32>
      %202 = arith.mulf %199, %201 : vector<3x256xf32>
      %c18 = arith.constant 18 : index
      %c0_187 = arith.constant 0 : index
      %203 = vector.load %arg13[%c18, %c0_187] : memref<32x256xf32, #tpu.memory_space<vmem>>, vector<3x256xf32>
      tpu.vector_store %arg13[%c18, %c0_187], %202 {strides = array<i32>} : memref<32x256xf32, #tpu.memory_space<vmem>>, vector<3x256xf32>,
      %c0_188 = arith.constant 0 : index
      %c144_189 = arith.constant 144 : index
      %204 = vector.load %arg12[%c0_188, %c144_189] : memref<3x512xf32, #tpu.memory_space<vmem>>, vector<3x256xf32>
      %c21 = arith.constant 21 : index
      %c0_190 = arith.constant 0 : index
      %205 = vector.load %arg13[%c21, %c0_190] : memref<32x256xf32, #tpu.memory_space<vmem>>, vector<3x256xf32>
      tpu.vector_store %arg13[%c21, %c0_190], %204 {strides = array<i32>} : memref<32x256xf32, #tpu.memory_space<vmem>>, vector<3x256xf32>,
      %c0_191 = arith.constant 0 : index
      %c145_192 = arith.constant 145 : index
      %206 = vector.load %arg12[%c0_191, %c145_192] : memref<3x512xf32, #tpu.memory_space<vmem>>, vector<3x256xf32>
      %c1_193 = arith.constant 1 : index
      %c0_194 = arith.constant 0 : index
      %207 = vector.load %arg8[%c1_193, %c0_194] : memref<2x256xf32, #tpu.memory_space<vmem>>, vector<1x256xf32>
      %208 = vector.broadcast %207 : vector<1x256xf32> to vector<3x256xf32>
      %209 = arith.mulf %206, %208 : vector<3x256xf32>
      %c24 = arith.constant 24 : index
      %c0_195 = arith.constant 0 : index
      %210 = vector.load %arg13[%c24, %c0_195] : memref<32x256xf32, #tpu.memory_space<vmem>>, vector<3x256xf32>
      tpu.vector_store %arg13[%c24, %c0_195], %209 {strides = array<i32>} : memref<32x256xf32, #tpu.memory_space<vmem>>, vector<3x256xf32>,
      %c1_196 = arith.constant 1 : index
      %c0_197 = arith.constant 0 : index
      %c0_198 = arith.constant 0 : index
      %211 = vector.load %arg7[%c1_196, %c0_197, %c0_198] : memref<2x3x27xf32, #tpu.memory_space<vmem>>, vector<1x3x27xf32>
      %212 = vector.shape_cast %211 : vector<1x3x27xf32> to vector<3x27xf32>
      %c0_199 = arith.constant 0 : index
      %c0_200 = arith.constant 0 : index
      %213 = vector.load %arg13[%c0_199, %c0_200] : memref<32x256xf32, #tpu.memory_space<vmem>>, vector<27x256xf32>
      %cst_201 = arith.constant dense<0.000000e+00> : vector<3x256xf32>
      %214 = tpu.matmul %212, %213, %cst_201 {dimension_numbers = #tpu.dot_dimension_numbers<[1], [0], [0], [1], [0, 0, 1, 1], [], []>} : vector<3x27xf32>, vector<27x256xf32>, vector<3x256xf32> -> vector<3x256xf32>
      %c0_202 = arith.constant 0 : index
      %c128_203 = arith.constant 128 : index
      %215 = vector.load %arg12[%c0_202, %c128_203] : memref<3x512xf32, #tpu.memory_space<vmem>>, vector<3x256xf32>
      %216 = vector.broadcast %146 : vector<3x1xf32> to vector<3x256xf32>
      %217 = arith.mulf %216, %215 : vector<3x256xf32>
      %218 = arith.addf %214, %217 : vector<3x256xf32>
      %c0_204 = arith.constant 0 : index
      %c0_205 = arith.constant 0 : index
      %219 = vector.load %arg11[%c0_204, %c0_205] : memref<3x256xf32, #tpu.memory_space<vmem>>, vector<3x256xf32>
      tpu.vector_store %arg11[%c0_204, %c0_205], %218 {strides = array<i32>} : memref<3x256xf32, #tpu.memory_space<vmem>>, vector<3x256xf32>,
    } else {
    }
    %c1_129 = arith.constant 1 : index
    %151 = memref.load %arg5[%c1_129] : memref<2xi32, #tpu.memory_space<smem>>
    %c0_i32_130 = arith.constant 0 : i32
    %152 = arith.cmpi eq, %151, %c0_i32_130 : i32
    %153 = arith.extui %152 : i1 to i32
    %c0_i32_131 = arith.constant 0 : i32
    %154 = arith.cmpi ne, %153, %c0_i32_131 : i32
    scf.if %154 {
      %c0_153 = arith.constant 0 : index
      %c128_154 = arith.constant 128 : index
      %175 = vector.load %arg12[%c0_153, %c128_154] : memref<3x512xf32, #tpu.memory_space<vmem>>, vector<3x256xf32>
      %176 = vector.broadcast %146 : vector<3x1xf32> to vector<3x256xf32>
      %177 = arith.mulf %176, %175 : vector<3x256xf32>
      %c0_155 = arith.constant 0 : index
      %c0_156 = arith.constant 0 : index
      %178 = vector.load %arg11[%c0_155, %c0_156] : memref<3x256xf32, #tpu.memory_space<vmem>>, vector<3x256xf32>
      tpu.vector_store %arg11[%c0_155, %c0_156], %177 {strides = array<i32>} : memref<3x256xf32, #tpu.memory_space<vmem>>, vector<3x256xf32>,
    } else {
    }
    %c1_132 = arith.constant 1 : index
    %c0_133 = arith.constant 0 : index
    %155 = memref.load %arg1[%c1_132, %c0_133] : memref<2x15xf32, #tpu.memory_space<smem>>
    %cst_134 = arith.constant 9.99999971E-10 : f32
    %156 = arith.cmpf oge, %155, %cst_134 : f32
    %157 = arith.extui %156 : i1 to i32
    %c0_i32_135 = arith.constant 0 : i32
    %158 = arith.cmpi ne, %157, %c0_i32_135 : i32
    scf.if %158 {
      %c0_153 = arith.constant 0 : index
      %c0_154 = arith.constant 0 : index
      %175 = vector.load %arg11[%c0_153, %c0_154] : memref<3x256xf32, #tpu.memory_space<vmem>>, vector<3x256xf32>
      %c1_155 = arith.constant 1 : index
      %c0_156 = arith.constant 0 : index
      %176 = memref.load %arg2[%c1_155, %c0_156] : memref<2x55xf32, #tpu.memory_space<smem>>
      %cst_157 = arith.constant 1.500000e+00 : f32
      %177 = arith.mulf %cst_157, %176 : f32
      %cst_158 = arith.constant 5.000000e-01 : f32
      %178 = arith.addf %cst_158, %177 : f32
      %c0_159 = arith.constant 0 : index
      %c128_160 = arith.constant 128 : index
      %179 = vector.load %arg12[%c0_159, %c128_160] : memref<3x512xf32, #tpu.memory_space<vmem>>, vector<3x256xf32>
      %cst_161 = arith.constant 9.99999974E-5 : f32
      %180 = vector.broadcast %cst_161 : f32 to vector<3x256xf32>
      %181 = arith.maximumf %179, %180 : vector<3x256xf32>
      %182 = math.log %181 : vector<3x256xf32>
      %183 = vector.broadcast %178 : f32 to vector<3x256xf32>
      %184 = arith.mulf %183, %182 : vector<3x256xf32>
      %185 = math.exp %184 : vector<3x256xf32>
      %186 = vector.broadcast %155 : f32 to vector<3x256xf32>
      %187 = arith.mulf %186, %185 : vector<3x256xf32>
      %188 = arith.addf %175, %187 : vector<3x256xf32>
      %c0_162 = arith.constant 0 : index
      %c0_163 = arith.constant 0 : index
      %189 = vector.load %arg11[%c0_162, %c0_163] : memref<3x256xf32, #tpu.memory_space<vmem>>, vector<3x256xf32>
      tpu.vector_store %arg11[%c0_162, %c0_163], %188 {strides = array<i32>} : memref<3x256xf32, #tpu.memory_space<vmem>>, vector<3x256xf32>,
    } else {
    }
    %c1_136 = arith.constant 1 : index
    %c4_137 = arith.constant 4 : index
    %159 = memref.load %arg1[%c1_136, %c4_137] : memref<2x15xf32, #tpu.memory_space<smem>>
    %cst_138 = arith.constant 9.99999971E-10 : f32
    %160 = arith.cmpf oge, %159, %cst_138 : f32
    %161 = arith.extui %160 : i1 to i32
    %c0_i32_139 = arith.constant 0 : i32
    %162 = arith.cmpi ne, %161, %c0_i32_139 : i32
    scf.if %162 {
      %c0_153 = arith.constant 0 : index
      %c0_154 = arith.constant 0 : index
      %175 = vector.load %arg11[%c0_153, %c0_154] : memref<3x256xf32, #tpu.memory_space<vmem>>, vector<3x256xf32>
      %c0_155 = arith.constant 0 : index
      %c128_156 = arith.constant 128 : index
      %176 = vector.load %arg12[%c0_155, %c128_156] : memref<3x512xf32, #tpu.memory_space<vmem>>, vector<3x256xf32>
      %cst_157 = arith.constant dense<0.000000e+00> : vector<3xf32>
      %177 = vector.multi_reduction <add>, %176, %cst_157 [1] : vector<3x256xf32> to vector<3xf32>
      %178 = vector.shape_cast %177 : vector<3xf32> to vector<3x1xf32>
      %cst_158 = arith.constant 2.560000e+02 : f32
      %179 = vector.broadcast %cst_158 : f32 to vector<3x1xf32>
      %180 = arith.divf %178, %179 : vector<3x1xf32>
      %181 = vector.extract_strided_slice %180 {offsets = [0, 0], sizes = [1, 1], strides = [1, 1]} : vector<3x1xf32> to vector<1x1xf32>
      %182 = vector.extract_strided_slice %180 {offsets = [1, 0], sizes = [1, 1], strides = [1, 1]} : vector<3x1xf32> to vector<1x1xf32>
      %183 = arith.addf %181, %182 : vector<1x1xf32>
      %184 = vector.extract_strided_slice %180 {offsets = [2, 0], sizes = [1, 1], strides = [1, 1]} : vector<3x1xf32> to vector<1x1xf32>
      %185 = arith.addf %183, %184 : vector<1x1xf32>
      %cst_159 = arith.constant 0.333333343 : f32
      %186 = vector.broadcast %cst_159 : f32 to vector<1x1xf32>
      %187 = arith.mulf %185, %186 : vector<1x1xf32>
      %cst_160 = arith.constant 9.99999997E-7 : f32
      %188 = vector.broadcast %cst_160 : f32 to vector<3x1xf32>
      %189 = arith.addf %180, %188 : vector<3x1xf32>
      %190 = vector.broadcast %187 : vector<1x1xf32> to vector<3x1xf32>
      %191 = arith.divf %190, %189 : vector<3x1xf32>
      %192 = vector.broadcast %191 : vector<3x1xf32> to vector<3x256xf32>
      %193 = arith.mulf %176, %192 : vector<3x256xf32>
      %194 = vector.broadcast %159 : f32 to vector<3x256xf32>
      %195 = arith.mulf %194, %193 : vector<3x256xf32>
      %196 = arith.addf %175, %195 : vector<3x256xf32>
      %c0_161 = arith.constant 0 : index
      %c0_162 = arith.constant 0 : index
      %197 = vector.load %arg11[%c0_161, %c0_162] : memref<3x256xf32, #tpu.memory_space<vmem>>, vector<3x256xf32>
      tpu.vector_store %arg11[%c0_161, %c0_162], %196 {strides = array<i32>} : memref<3x256xf32, #tpu.memory_space<vmem>>, vector<3x256xf32>,
    } else {
    }
    %c1_140 = arith.constant 1 : index
    %c12_141 = arith.constant 12 : index
    %163 = memref.load %arg1[%c1_140, %c12_141] : memref<2x15xf32, #tpu.memory_space<smem>>
    %cst_142 = arith.constant 9.99999971E-10 : f32
    %164 = arith.cmpf oge, %163, %cst_142 : f32
    %165 = arith.extui %164 : i1 to i32
    %c0_i32_143 = arith.constant 0 : i32
    %166 = arith.cmpi ne, %165, %c0_i32_143 : i32
    scf.if %166 {
      %c0_153 = arith.constant 0 : index
      %c0_154 = arith.constant 0 : index
      %175 = vector.load %arg11[%c0_153, %c0_154] : memref<3x256xf32, #tpu.memory_space<vmem>>, vector<3x256xf32>
      %c0_155 = arith.constant 0 : index
      %c128_156 = arith.constant 128 : index
      %176 = vector.load %arg12[%c0_155, %c128_156] : memref<3x512xf32, #tpu.memory_space<vmem>>, vector<3x256xf32>
      %177 = vector.extract_strided_slice %176 {offsets = [0, 0], sizes = [1, 256], strides = [1, 1]} : vector<3x256xf32> to vector<1x256xf32>
      %178 = vector.extract_strided_slice %176 {offsets = [1, 0], sizes = [1, 256], strides = [1, 1]} : vector<3x256xf32> to vector<1x256xf32>
      %179 = vector.extract_strided_slice %176 {offsets = [2, 0], sizes = [1, 256], strides = [1, 1]} : vector<3x256xf32> to vector<1x256xf32>
      %cst_157 = arith.constant 1.000000e+00 : f32
      %180 = vector.broadcast %cst_157 : f32 to vector<1x256xf32>
      %181 = arith.mulf %177, %177 : vector<1x256xf32>
      %182 = arith.mulf %178, %178 : vector<1x256xf32>
      %183 = arith.mulf %179, %179 : vector<1x256xf32>
      %184 = arith.mulf %177, %178 : vector<1x256xf32>
      %185 = arith.mulf %177, %179 : vector<1x256xf32>
      %186 = arith.mulf %178, %179 : vector<1x256xf32>
      %c1_158 = arith.constant 1 : index
      %c17 = arith.constant 17 : index
      %187 = memref.load %arg2[%c1_158, %c17] : memref<2x55xf32, #tpu.memory_space<smem>>
      %188 = vector.broadcast %187 : f32 to vector<1x256xf32>
      %189 = arith.mulf %188, %181 : vector<1x256xf32>
      %c1_159 = arith.constant 1 : index
      %c18 = arith.constant 18 : index
      %190 = memref.load %arg2[%c1_159, %c18] : memref<2x55xf32, #tpu.memory_space<smem>>
      %191 = vector.broadcast %190 : f32 to vector<1x256xf32>
      %192 = arith.mulf %191, %182 : vector<1x256xf32>
      %193 = arith.addf %189, %192 : vector<1x256xf32>
      %c1_160 = arith.constant 1 : index
      %c19 = arith.constant 19 : index
      %194 = memref.load %arg2[%c1_160, %c19] : memref<2x55xf32, #tpu.memory_space<smem>>
      %195 = vector.broadcast %194 : f32 to vector<1x256xf32>
      %196 = arith.mulf %195, %183 : vector<1x256xf32>
      %197 = arith.addf %193, %196 : vector<1x256xf32>
      %c1_161 = arith.constant 1 : index
      %c20 = arith.constant 20 : index
      %198 = memref.load %arg2[%c1_161, %c20] : memref<2x55xf32, #tpu.memory_space<smem>>
      %199 = vector.broadcast %198 : f32 to vector<1x256xf32>
      %200 = arith.mulf %199, %184 : vector<1x256xf32>
      %201 = arith.addf %197, %200 : vector<1x256xf32>
      %c1_162 = arith.constant 1 : index
      %c21 = arith.constant 21 : index
      %202 = memref.load %arg2[%c1_162, %c21] : memref<2x55xf32, #tpu.memory_space<smem>>
      %203 = vector.broadcast %202 : f32 to vector<1x256xf32>
      %204 = arith.mulf %203, %185 : vector<1x256xf32>
      %205 = arith.addf %201, %204 : vector<1x256xf32>
      %c1_163 = arith.constant 1 : index
      %c22 = arith.constant 22 : index
      %206 = memref.load %arg2[%c1_163, %c22] : memref<2x55xf32, #tpu.memory_space<smem>>
      %207 = vector.broadcast %206 : f32 to vector<1x256xf32>
      %208 = arith.mulf %207, %186 : vector<1x256xf32>
      %209 = arith.addf %205, %208 : vector<1x256xf32>
      %c1_164 = arith.constant 1 : index
      %c23 = arith.constant 23 : index
      %210 = memref.load %arg2[%c1_164, %c23] : memref<2x55xf32, #tpu.memory_space<smem>>
      %211 = vector.broadcast %210 : f32 to vector<1x256xf32>
      %212 = arith.mulf %211, %177 : vector<1x256xf32>
      %213 = arith.addf %209, %212 : vector<1x256xf32>
      %c1_165 = arith.constant 1 : index
      %c24 = arith.constant 24 : index
      %214 = memref.load %arg2[%c1_165, %c24] : memref<2x55xf32, #tpu.memory_space<smem>>
      %215 = vector.broadcast %214 : f32 to vector<1x256xf32>
      %216 = arith.mulf %215, %178 : vector<1x256xf32>
      %217 = arith.addf %213, %216 : vector<1x256xf32>
      %c1_166 = arith.constant 1 : index
      %c25 = arith.constant 25 : index
      %218 = memref.load %arg2[%c1_166, %c25] : memref<2x55xf32, #tpu.memory_space<smem>>
      %219 = vector.broadcast %218 : f32 to vector<1x256xf32>
      %220 = arith.mulf %219, %179 : vector<1x256xf32>
      %221 = arith.addf %217, %220 : vector<1x256xf32>
      %c1_167 = arith.constant 1 : index
      %c26 = arith.constant 26 : index
      %222 = memref.load %arg2[%c1_167, %c26] : memref<2x55xf32, #tpu.memory_space<smem>>
      %223 = vector.broadcast %222 : f32 to vector<1x256xf32>
      %224 = arith.mulf %223, %180 : vector<1x256xf32>
      %225 = arith.addf %221, %224 : vector<1x256xf32>
      %c1_168 = arith.constant 1 : index
      %c27 = arith.constant 27 : index
      %226 = memref.load %arg2[%c1_168, %c27] : memref<2x55xf32, #tpu.memory_space<smem>>
      %227 = vector.broadcast %226 : f32 to vector<1x256xf32>
      %228 = arith.mulf %227, %181 : vector<1x256xf32>
      %c1_169 = arith.constant 1 : index
      %c28 = arith.constant 28 : index
      %229 = memref.load %arg2[%c1_169, %c28] : memref<2x55xf32, #tpu.memory_space<smem>>
      %230 = vector.broadcast %229 : f32 to vector<1x256xf32>
      %231 = arith.mulf %230, %182 : vector<1x256xf32>
      %232 = arith.addf %228, %231 : vector<1x256xf32>
      %c1_170 = arith.constant 1 : index
      %c29 = arith.constant 29 : index
      %233 = memref.load %arg2[%c1_170, %c29] : memref<2x55xf32, #tpu.memory_space<smem>>
      %234 = vector.broadcast %233 : f32 to vector<1x256xf32>
      %235 = arith.mulf %234, %183 : vector<1x256xf32>
      %236 = arith.addf %232, %235 : vector<1x256xf32>
      %c1_171 = arith.constant 1 : index
      %c30 = arith.constant 30 : index
      %237 = memref.load %arg2[%c1_171, %c30] : memref<2x55xf32, #tpu.memory_space<smem>>
      %238 = vector.broadcast %237 : f32 to vector<1x256xf32>
      %239 = arith.mulf %238, %184 : vector<1x256xf32>
      %240 = arith.addf %236, %239 : vector<1x256xf32>
      %c1_172 = arith.constant 1 : index
      %c31 = arith.constant 31 : index
      %241 = memref.load %arg2[%c1_172, %c31] : memref<2x55xf32, #tpu.memory_space<smem>>
      %242 = vector.broadcast %241 : f32 to vector<1x256xf32>
      %243 = arith.mulf %242, %185 : vector<1x256xf32>
      %244 = arith.addf %240, %243 : vector<1x256xf32>
      %c1_173 = arith.constant 1 : index
      %c32 = arith.constant 32 : index
      %245 = memref.load %arg2[%c1_173, %c32] : memref<2x55xf32, #tpu.memory_space<smem>>
      %246 = vector.broadcast %245 : f32 to vector<1x256xf32>
      %247 = arith.mulf %246, %186 : vector<1x256xf32>
      %248 = arith.addf %244, %247 : vector<1x256xf32>
      %c1_174 = arith.constant 1 : index
      %c33 = arith.constant 33 : index
      %249 = memref.load %arg2[%c1_174, %c33] : memref<2x55xf32, #tpu.memory_space<smem>>
      %250 = vector.broadcast %249 : f32 to vector<1x256xf32>
      %251 = arith.mulf %250, %177 : vector<1x256xf32>
      %252 = arith.addf %248, %251 : vector<1x256xf32>
      %c1_175 = arith.constant 1 : index
      %c34 = arith.constant 34 : index
      %253 = memref.load %arg2[%c1_175, %c34] : memref<2x55xf32, #tpu.memory_space<smem>>
      %254 = vector.broadcast %253 : f32 to vector<1x256xf32>
      %255 = arith.mulf %254, %178 : vector<1x256xf32>
      %256 = arith.addf %252, %255 : vector<1x256xf32>
      %c1_176 = arith.constant 1 : index
      %c35 = arith.constant 35 : index
      %257 = memref.load %arg2[%c1_176, %c35] : memref<2x55xf32, #tpu.memory_space<smem>>
      %258 = vector.broadcast %257 : f32 to vector<1x256xf32>
      %259 = arith.mulf %258, %179 : vector<1x256xf32>
      %260 = arith.addf %256, %259 : vector<1x256xf32>
      %c1_177 = arith.constant 1 : index
      %c36 = arith.constant 36 : index
      %261 = memref.load %arg2[%c1_177, %c36] : memref<2x55xf32, #tpu.memory_space<smem>>
      %262 = vector.broadcast %261 : f32 to vector<1x256xf32>
      %263 = arith.mulf %262, %180 : vector<1x256xf32>
      %264 = arith.addf %260, %263 : vector<1x256xf32>
      %c1_178 = arith.constant 1 : index
      %c37 = arith.constant 37 : index
      %265 = memref.load %arg2[%c1_178, %c37] : memref<2x55xf32, #tpu.memory_space<smem>>
      %266 = vector.broadcast %265 : f32 to vector<1x256xf32>
      %267 = arith.mulf %266, %181 : vector<1x256xf32>
      %c1_179 = arith.constant 1 : index
      %c38 = arith.constant 38 : index
      %268 = memref.load %arg2[%c1_179, %c38] : memref<2x55xf32, #tpu.memory_space<smem>>
      %269 = vector.broadcast %268 : f32 to vector<1x256xf32>
      %270 = arith.mulf %269, %182 : vector<1x256xf32>
      %271 = arith.addf %267, %270 : vector<1x256xf32>
      %c1_180 = arith.constant 1 : index
      %c39 = arith.constant 39 : index
      %272 = memref.load %arg2[%c1_180, %c39] : memref<2x55xf32, #tpu.memory_space<smem>>
      %273 = vector.broadcast %272 : f32 to vector<1x256xf32>
      %274 = arith.mulf %273, %183 : vector<1x256xf32>
      %275 = arith.addf %271, %274 : vector<1x256xf32>
      %c1_181 = arith.constant 1 : index
      %c40 = arith.constant 40 : index
      %276 = memref.load %arg2[%c1_181, %c40] : memref<2x55xf32, #tpu.memory_space<smem>>
      %277 = vector.broadcast %276 : f32 to vector<1x256xf32>
      %278 = arith.mulf %277, %184 : vector<1x256xf32>
      %279 = arith.addf %275, %278 : vector<1x256xf32>
      %c1_182 = arith.constant 1 : index
      %c41 = arith.constant 41 : index
      %280 = memref.load %arg2[%c1_182, %c41] : memref<2x55xf32, #tpu.memory_space<smem>>
      %281 = vector.broadcast %280 : f32 to vector<1x256xf32>
      %282 = arith.mulf %281, %185 : vector<1x256xf32>
      %283 = arith.addf %279, %282 : vector<1x256xf32>
      %c1_183 = arith.constant 1 : index
      %c42 = arith.constant 42 : index
      %284 = memref.load %arg2[%c1_183, %c42] : memref<2x55xf32, #tpu.memory_space<smem>>
      %285 = vector.broadcast %284 : f32 to vector<1x256xf32>
      %286 = arith.mulf %285, %186 : vector<1x256xf32>
      %287 = arith.addf %283, %286 : vector<1x256xf32>
      %c1_184 = arith.constant 1 : index
      %c43 = arith.constant 43 : index
      %288 = memref.load %arg2[%c1_184, %c43] : memref<2x55xf32, #tpu.memory_space<smem>>
      %289 = vector.broadcast %288 : f32 to vector<1x256xf32>
      %290 = arith.mulf %289, %177 : vector<1x256xf32>
      %291 = arith.addf %287, %290 : vector<1x256xf32>
      %c1_185 = arith.constant 1 : index
      %c44 = arith.constant 44 : index
      %292 = memref.load %arg2[%c1_185, %c44] : memref<2x55xf32, #tpu.memory_space<smem>>
      %293 = vector.broadcast %292 : f32 to vector<1x256xf32>
      %294 = arith.mulf %293, %178 : vector<1x256xf32>
      %295 = arith.addf %291, %294 : vector<1x256xf32>
      %c1_186 = arith.constant 1 : index
      %c45 = arith.constant 45 : index
      %296 = memref.load %arg2[%c1_186, %c45] : memref<2x55xf32, #tpu.memory_space<smem>>
      %297 = vector.broadcast %296 : f32 to vector<1x256xf32>
      %298 = arith.mulf %297, %179 : vector<1x256xf32>
      %299 = arith.addf %295, %298 : vector<1x256xf32>
      %c1_187 = arith.constant 1 : index
      %c46 = arith.constant 46 : index
      %300 = memref.load %arg2[%c1_187, %c46] : memref<2x55xf32, #tpu.memory_space<smem>>
      %301 = vector.broadcast %300 : f32 to vector<1x256xf32>
      %302 = arith.mulf %301, %180 : vector<1x256xf32>
      %303 = arith.addf %299, %302 : vector<1x256xf32>
      %304 = tpu.concatenate %225, %264, %303 in 0 : vector<1x256xf32>, vector<1x256xf32>, vector<1x256xf32> -> vector<3x256xf32>
      %305 = vector.broadcast %163 : f32 to vector<3x256xf32>
      %306 = arith.mulf %305, %304 : vector<3x256xf32>
      %307 = arith.addf %175, %306 : vector<3x256xf32>
      %c0_188 = arith.constant 0 : index
      %c0_189 = arith.constant 0 : index
      %308 = vector.load %arg11[%c0_188, %c0_189] : memref<3x256xf32, #tpu.memory_space<vmem>>, vector<3x256xf32>
      tpu.vector_store %arg11[%c0_188, %c0_189], %307 {strides = array<i32>} : memref<3x256xf32, #tpu.memory_space<vmem>>, vector<3x256xf32>,
    } else {
    }
    %c1_144 = arith.constant 1 : index
    %c13_145 = arith.constant 13 : index
    %167 = memref.load %arg1[%c1_144, %c13_145] : memref<2x15xf32, #tpu.memory_space<smem>>
    %cst_146 = arith.constant 9.99999971E-10 : f32
    %168 = arith.cmpf oge, %167, %cst_146 : f32
    %169 = arith.extui %168 : i1 to i32
    %c0_i32_147 = arith.constant 0 : i32
    %170 = arith.cmpi ne, %169, %c0_i32_147 : i32
    scf.if %170 {
      %c0_153 = arith.constant 0 : index
      %c0_154 = arith.constant 0 : index
      %175 = vector.load %arg11[%c0_153, %c0_154] : memref<3x256xf32, #tpu.memory_space<vmem>>, vector<3x256xf32>
      %c1_155 = arith.constant 1 : index
      %c47 = arith.constant 47 : index
      %176 = memref.load %arg2[%c1_155, %c47] : memref<2x55xf32, #tpu.memory_space<smem>>
      %c1_156 = arith.constant 1 : index
      %c48 = arith.constant 48 : index
      %177 = memref.load %arg2[%c1_156, %c48] : memref<2x55xf32, #tpu.memory_space<smem>>
      %c1_157 = arith.constant 1 : index
      %c49 = arith.constant 49 : index
      %178 = memref.load %arg2[%c1_157, %c49] : memref<2x55xf32, #tpu.memory_space<smem>>
      %c0_158 = arith.constant 0 : index
      %c128_159 = arith.constant 128 : index
      %179 = vector.load %arg12[%c0_158, %c128_159] : memref<3x512xf32, #tpu.memory_space<vmem>>, vector<3x256xf32>
      %cst_160 = arith.constant 0.000000e+00 : f32
      %cst_161 = arith.constant 1.000000e+00 : f32
      %180 = vector.broadcast %cst_160 : f32 to vector<3x256xf32>
      %181 = arith.maximumf %180, %179 : vector<3x256xf32>
      %182 = vector.broadcast %cst_161 : f32 to vector<3x256xf32>
      %183 = arith.minimumf %182, %181 : vector<3x256xf32>
      %cst_162 = arith.constant 1.000000e+00 : f32
      %184 = vector.broadcast %cst_162 : f32 to vector<3x256xf32>
      %185 = arith.subf %184, %183 : vector<3x256xf32>
      %186 = arith.mulf %183, %183 : vector<3x256xf32>
      %187 = arith.mulf %185, %185 : vector<3x256xf32>
      %cst_163 = arith.constant 4.000000e+00 : f32
      %188 = vector.broadcast %cst_163 : f32 to vector<3x256xf32>
      %189 = arith.mulf %188, %187 : vector<3x256xf32>
      %190 = arith.mulf %189, %185 : vector<3x256xf32>
      %191 = arith.mulf %190, %183 : vector<3x256xf32>
      %192 = vector.broadcast %176 : f32 to vector<3x256xf32>
      %193 = arith.mulf %191, %192 : vector<3x256xf32>
      %cst_164 = arith.constant 6.000000e+00 : f32
      %194 = vector.broadcast %cst_164 : f32 to vector<3x256xf32>
      %195 = arith.mulf %194, %187 : vector<3x256xf32>
      %196 = arith.mulf %195, %186 : vector<3x256xf32>
      %197 = vector.broadcast %177 : f32 to vector<3x256xf32>
      %198 = arith.mulf %196, %197 : vector<3x256xf32>
      %199 = arith.addf %193, %198 : vector<3x256xf32>
      %cst_165 = arith.constant 4.000000e+00 : f32
      %200 = vector.broadcast %cst_165 : f32 to vector<3x256xf32>
      %201 = arith.mulf %200, %185 : vector<3x256xf32>
      %202 = arith.mulf %201, %186 : vector<3x256xf32>
      %203 = arith.mulf %202, %183 : vector<3x256xf32>
      %204 = vector.broadcast %178 : f32 to vector<3x256xf32>
      %205 = arith.mulf %203, %204 : vector<3x256xf32>
      %206 = arith.addf %199, %205 : vector<3x256xf32>
      %207 = arith.mulf %186, %186 : vector<3x256xf32>
      %208 = arith.addf %206, %207 : vector<3x256xf32>
      %209 = vector.broadcast %167 : f32 to vector<3x256xf32>
      %210 = arith.mulf %209, %208 : vector<3x256xf32>
      %211 = arith.addf %175, %210 : vector<3x256xf32>
      %c0_166 = arith.constant 0 : index
      %c0_167 = arith.constant 0 : index
      %212 = vector.load %arg11[%c0_166, %c0_167] : memref<3x256xf32, #tpu.memory_space<vmem>>, vector<3x256xf32>
      tpu.vector_store %arg11[%c0_166, %c0_167], %211 {strides = array<i32>} : memref<3x256xf32, #tpu.memory_space<vmem>>, vector<3x256xf32>,
    } else {
    }
    %c0_148 = arith.constant 0 : index
    %c0_149 = arith.constant 0 : index
    %171 = vector.load %arg11[%c0_148, %c0_149] : memref<3x256xf32, #tpu.memory_space<vmem>>, vector<3x256xf32>
    %c0_150 = arith.constant 0 : index
    %c0_151 = arith.constant 0 : index
    %c0_152 = arith.constant 0 : index
    %172 = vector.load %arg10[%c0_150, %c0_151, %c0_152] : memref<1x3x256xf32, #tpu.memory_space<vmem>>, vector<1x3x256xf32>
    %173 = vector.shape_cast %172 : vector<1x3x256xf32> to vector<3x256xf32>
    %174 = vector.shape_cast %171 : vector<3x256xf32> to vector<1x3x256xf32>
    tpu.vector_store %arg10[%c0_150, %c0_151, %c0_152], %174 {strides = array<i32>} : memref<1x3x256xf32, #tpu.memory_space<vmem>>, vector<1x3x256xf32>,
    return
  }
  func.func @transform_0(%arg0: i32) -> (i32, i32) {
    %c0_i32 = arith.constant 0 : i32
    %c0_i32_0 = arith.constant 0 : i32
    %c0_i32_1 = arith.constant 0 : i32
    return %c0_i32, %c0_i32_0 : i32, i32
  }
  func.func @transform_1(%arg0: i32) -> (i32, i32) {
    %c0_i32 = arith.constant 0 : i32
    %c0_i32_0 = arith.constant 0 : i32
    %c0_i32_1 = arith.constant 0 : i32
    return %c0_i32, %c0_i32_0 : i32, i32
  }
  func.func @transform_2(%arg0: i32) -> i32 {
    %c0_i32 = arith.constant 0 : i32
    %c0_i32_0 = arith.constant 0 : i32
    return %c0_i32 : i32
  }
  func.func @transform_3(%arg0: i32) -> (i32, i32) {
    %c0_i32 = arith.constant 0 : i32
    %c0_i32_0 = arith.constant 0 : i32
    %c0_i32_1 = arith.constant 0 : i32
    return %c0_i32, %c0_i32_0 : i32, i32
  }
  func.func @transform_4(%arg0: i32) -> i32 {
    %c0_i32 = arith.constant 0 : i32
    %c0_i32_0 = arith.constant 0 : i32
    return %c0_i32 : i32
  }
  func.func @transform_5(%arg0: i32) -> (i32, i32) {
    %c0_i32 = arith.constant 0 : i32
    %c0_i32_0 = arith.constant 0 : i32
    %c0_i32_1 = arith.constant 0 : i32
    return %c0_i32, %c0_i32_0 : i32, i32
  }
  func.func @transform_6(%arg0: i32) -> (i32, i32, i32) {
    %c0_i32 = arith.constant 0 : i32
    %c0_i32_0 = arith.constant 0 : i32
    %c0_i32_1 = arith.constant 0 : i32
    %c0_i32_2 = arith.constant 0 : i32
    return %c0_i32, %c0_i32_0, %c0_i32_1 : i32, i32, i32
  }
  func.func @transform_7(%arg0: i32) -> (i32, i32) {
    %c0_i32 = arith.constant 0 : i32
    %c0_i32_0 = arith.constant 0 : i32
    %c0_i32_1 = arith.constant 0 : i32
    return %c0_i32, %c0_i32_0 : i32, i32
  }
  func.func @transform_8(%arg0: i32) -> (i32, i32, i32) {
    %c0_i32 = arith.constant 0 : i32
    %c0_i32_0 = arith.constant 0 : i32
    %c0_i32_1 = arith.constant 0 : i32
    return %arg0, %c0_i32, %c0_i32_0 : i32, i32, i32
  }
  func.func @transform_9(%arg0: i32) -> (i32, i32, i32) {
    %c0_i32 = arith.constant 0 : i32
    %c0_i32_0 = arith.constant 0 : i32
    %c0_i32_1 = arith.constant 0 : i32
    return %arg0, %c0_i32, %c0_i32_0 : i32, i32, i32
  }
}

</mosaic_0001>

<llo_original>
// kernel: forward.1
$region0: #{forward.1}
  #allocation0 [shape = 'u32[]', space=smem, size = 0x4, offset = 0x4, fixed_abs, tag = 'smem constant byte address 0x4 - core index']
  #allocation1 [shape = 'u32[144,128]{1,0:T(1,128)}', space=vmem, size = 0x12000, scoped, tag = 'internal scratch']
  #allocation2 [shape = 'f32[3,256]{1,0:T(4,128)}', space=vmem, size = 0x1000, scoped, tag = 'scratch operand']
  #allocation3 [shape = 'f32[3,512]{1,0:T(4,128)}', space=vmem, size = 0x2000, scoped, tag = 'scratch operand']
  #allocation4 [shape = 'f32[32,256]{1,0:T(8,128)}', space=vmem, size = 0x8000, scoped, tag = 'scratch operand']
  %s0 = inlined_call_operand.vmem [shape: f32[2,15], index: 0, kind: input, shape index: {}]
  %s1 = inlined_call_operand.vmem [shape: f32[2,55], index: 1, kind: input, shape index: {}]
  %s2 = inlined_call_operand.vmem [shape: f32[2], index: 2, kind: input, shape index: {}]
  %s3 = inlined_call_operand.vmem [shape: f32[2,3], index: 3, kind: input, shape index: {}]
  %s4 = inlined_call_operand.vmem [shape: s32[2], index: 4, kind: input, shape index: {}]
  %s5 = inlined_call_operand.vmem [shape: f32[3,9], index: 5, kind: input, shape index: {}]
  %s6 = inlined_call_operand.vmem [shape: f32[2,3,27], index: 6, kind: input, shape index: {}]
  %s7 = inlined_call_operand.vmem [shape: f32[2,256], index: 7, kind: input, shape index: {}]
  %s8 = inlined_call_operand.vmem [shape: f32[2,1,256], index: 8, kind: input, shape index: {}]
  %s9 = inlined_call_operand.vmem [shape: f32[2,3,256], index: 9, kind: output, shape index: {}]
  %s10 = sld [smem:[#allocation0]]
  $region137: #{forward.1} parent=0
    _
  %s12 = ssub.s32 1, %s10
  %s13 = scalar_select 0, %s12, %s10
  $region1: #{forward.1} parent=0
    #allocation5 [shape = 'u8[1024]{0}', space=smem, size = 0x400, scoped, tag = 'input window, operand 0, single buffered']
    #allocation6 [shape = 's32[2]{0}', space=sflag, size = 0x8, scoped, tag = 'scoped memory for forward.1']
    #allocation7 [shape = 'u8[1024]{0}', space=smem, size = 0x400, scoped, tag = 'input window, operand 1, single buffered']
    #allocation8 [shape = 's32[1]{0}', space=sflag, size = 0x4, scoped, tag = 'scoped memory for forward.1']
    #allocation9 [shape = 'u8[512]{0}', space=smem, size = 0x200, scoped, tag = 'input window, operand 2, single buffered']
    #allocation10 [shape = 'u8[1024]{0}', space=smem, size = 0x400, scoped, tag = 'input window, operand 3, single buffered']
    #allocation11 [shape = 's32[1]{0}', space=sflag, size = 0x4, scoped, tag = 'scoped memory for forward.1']
    #allocation12 [shape = 'u8[512]{0}', space=smem, size = 0x200, scoped, tag = 'input window, operand 4, single buffered']
    %14 = vsyncpa [#allocation6], 0
    %15 = vsyncpa [#allocation8], 0
    %16 = vsyncpa [#allocation11], 0
    loop: start=0, step=1, limit=4
    $region2: #{forward.1} parent=1 // loop_pre_header
      _
    $region3: #{forward.1} parent=1 // loop_header
      %s18 = sphi 0, %s22
      %p19 = scmp.ge.s32.totalorder %s18, 4
      %s26 = sphi 0, %s26
      %s28 = sphi 0, %s26
      %s29 = sphi 0, %s28
      %s43 = sphi 0, %s29
      %s47 = sphi 0, %s47
      %s49 = sphi 0, %s47
      %s50 = sphi 0, %s49
      %s64 = sphi 0, %s50
      %s68 = sphi 0, %s68
      %s70 = sphi 0, %s68
      %s71 = sphi 0, %s70
      %s85 = sphi 0, %s71
      %s89 = sphi 0, %s89
      %s91 = sphi 0, %s89
      %s92 = sphi 0, %s91
      %s106 = sphi 0, %s92
      %s110 = sphi 0, %s110
      %s112 = sphi 0, %s110
      %s113 = sphi 0, %s112
      %s127 = sphi 0, %s113
      %s131 = sphi 0, %s131
      %s133 = sphi 0, %s131
      %s134 = sphi 0, %s133
      %s148 = sphi 0, %s134
      %s152 = sphi 0, %s152
      %s154 = sphi 0, %s152
      %s155 = sphi 0, %s154
      %s169 = sphi 0, %s155
      %s173 = sphi 0, %s173
      %s175 = sphi 0, %s173
      %s176 = sphi 0, %s175
      %s190 = sphi 0, %s176
      %s196 = sphi 0, %s198
      %s199 = sphi 0, %s196
      %s200 = sphi 0, %s199
      %s216 = sphi 0, %s200
      %s222 = sphi 0, %s224
      %s225 = sphi 0, %s222
      %s226 = sphi 0, %s225
      %s242 = sphi 0, %s226
    $region4: #{forward.1} parent=1 // loop_header_branch
      %21 = sbr.rel (%p19) target = $region8
    $region5: #{forward.1} parent=1 // loop_body
      %s23 = ssub.s32 %s18, 1
      %s24 = ssub.s32 %s18, 2
      %s25 = sadd.s32 %s18, 1
      %s27 = sadd.s32 %s26, 1
      %p30 = scmp.eq.s32.totalorder %s18, 1
      %p31 = scmp.ne.s32.totalorder %s26, %s28
      %p32 = scmp.eq.s32.totalorder %s18, 0
      %p33 = por %p31, %p32
      %p34 = scmp.ne.s32.totalorder %s26, %s28
      %p35 = scmp.eq.s32.totalorder %s23, 1
      %p36 = por %p34, %p35
      %p37 = scmp.ne.s32.totalorder %s28, %s29
      %p38 = scmp.eq.s32.totalorder %s23, 0
      %p39 = por %p37, %p38
      %p40 = scmp.ne.s32.totalorder %s28, %s29
      %p41 = scmp.eq.s32.totalorder %s24, 1
      %p42 = por %p40, %p41
      %p44 = scmp.ne.s32.totalorder %s29, %s43
      %p45 = scmp.eq.s32.totalorder %s24, 0
      %p46 = por %p44, %p45
      %s48 = sadd.s32 %s47, 1
      %p51 = scmp.eq.s32.totalorder %s18, 1
      %p52 = scmp.ne.s32.totalorder %s47, %s49
      %p53 = scmp.eq.s32.totalorder %s18, 0
      %p54 = por %p52, %p53
      %p55 = scmp.ne.s32.totalorder %s47, %s49
      %p56 = scmp.eq.s32.totalorder %s23, 1
      %p57 = por %p55, %p56
      %p58 = scmp.ne.s32.totalorder %s49, %s50
      %p59 = scmp.eq.s32.totalorder %s23, 0
      %p60 = por %p58, %p59
      %p61 = scmp.ne.s32.totalorder %s49, %s50
      %p62 = scmp.eq.s32.totalorder %s24, 1
      %p63 = por %p61, %p62
      %p65 = scmp.ne.s32.totalorder %s50, %s64
      %p66 = scmp.eq.s32.totalorder %s24, 0
      %p67 = por %p65, %p66
      %s69 = sadd.s32 %s68, 1
      %p72 = scmp.eq.s32.totalorder %s18, 1
      %p73 = scmp.ne.s32.totalorder %s68, %s70
      %p74 = scmp.eq.s32.totalorder %s18, 0
      %p75 = por %p73, %p74
      %p76 = scmp.ne.s32.totalorder %s68, %s70
      %p77 = scmp.eq.s32.totalorder %s23, 1
      %p78 = por %p76, %p77
      %p79 = scmp.ne.s32.totalorder %s70, %s71
      %p80 = scmp.eq.s32.totalorder %s23, 0
      %p81 = por %p79, %p80
      %p82 = scmp.ne.s32.totalorder %s70, %s71
      %p83 = scmp.eq.s32.totalorder %s24, 1
      %p84 = por %p82, %p83
      %p86 = scmp.ne.s32.totalorder %s71, %s85
      %p87 = scmp.eq.s32.totalorder %s24, 0
      %p88 = por %p86, %p87
      %s90 = sadd.s32 %s89, 1
      %p93 = scmp.eq.s32.totalorder %s18, 1
      %p94 = scmp.ne.s32.totalorder %s89, %s91
      %p95 = scmp.eq.s32.totalorder %s18, 0
      %p96 = por %p94, %p95
      %p97 = scmp.ne.s32.totalorder %s89, %s91
      %p98 = scmp.eq.s32.totalorder %s23, 1
      %p99 = por %p97, %p98
      %p100 = scmp.ne.s32.totalorder %s91, %s92
      %p101 = scmp.eq.s32.totalorder %s23, 0
      %p102 = por %p100, %p101
      %p103 = scmp.ne.s32.totalorder %s91, %s92
      %p104 = scmp.eq.s32.totalorder %s24, 1
      %p105 = por %p103, %p104
      %p107 = scmp.ne.s32.totalorder %s92, %s106
      %p108 = scmp.eq.s32.totalorder %s24, 0
      %p109 = por %p107, %p108
      %s111 = sadd.s32 %s110, 1
      %p114 = scmp.eq.s32.totalorder %s18, 1
      %p115 = scmp.ne.s32.totalorder %s110, %s112
      %p116 = scmp.eq.s32.totalorder %s18, 0
      %p117 = por %p115, %p116
      %p118 = scmp.ne.s32.totalorder %s110, %s112
      %p119 = scmp.eq.s32.totalorder %s23, 1
      %p120 = por %p118, %p119
      %p121 = scmp.ne.s32.totalorder %s112, %s113
      %p122 = scmp.eq.s32.totalorder %s23, 0
      %p123 = por %p121, %p122
      %p124 = scmp.ne.s32.totalorder %s112, %s113
      %p125 = scmp.eq.s32.totalorder %s24, 1
      %p126 = por %p124, %p125
      %p128 = scmp.ne.s32.totalorder %s113, %s127
      %p129 = scmp.eq.s32.totalorder %s24, 0
      %p130 = por %p128, %p129
      %s132 = sadd.s32 %s131, 1
      %p135 = scmp.eq.s32.totalorder %s18, 1
      %p136 = scmp.ne.s32.totalorder %s131, %s133
      %p137 = scmp.eq.s32.totalorder %s18, 0
      %p138 = por %p136, %p137
      %p139 = scmp.ne.s32.totalorder %s131, %s133
      %p140 = scmp.eq.s32.totalorder %s23, 1
      %p141 = por %p139, %p140
      %p142 = scmp.ne.s32.totalorder %s133, %s134
      %p143 = scmp.eq.s32.totalorder %s23, 0
      %p144 = por %p142, %p143
      %p145 = scmp.ne.s32.totalorder %s133, %s134
      %p146 = scmp.eq.s32.totalorder %s24, 1
      %p147 = por %p145, %p146
      %p149 = scmp.ne.s32.totalorder %s134, %s148
      %p150 = scmp.eq.s32.totalorder %s24, 0
      %p151 = por %p149, %p150
      %s153 = sadd.s32 %s152, 1
      %p156 = scmp.eq.s32.totalorder %s18, 1
      %p157 = scmp.ne.s32.totalorder %s152, %s154
      %p158 = scmp.eq.s32.totalorder %s18, 0
      %p159 = por %p157, %p158
      %p160 = scmp.ne.s32.totalorder %s152, %s154
      %p161 = scmp.eq.s32.totalorder %s23, 1
      %p162 = por %p160, %p161
      %p163 = scmp.ne.s32.totalorder %s154, %s155
      %p164 = scmp.eq.s32.totalorder %s23, 0
      %p165 = por %p163, %p164
      %p166 = scmp.ne.s32.totalorder %s154, %s155
      %p167 = scmp.eq.s32.totalorder %s24, 1
      %p168 = por %p166, %p167
      %p170 = scmp.ne.s32.totalorder %s155, %s169
      %p171 = scmp.eq.s32.totalorder %s24, 0
      %p172 = por %p170, %p171
      %s174 = sadd.s32 %s173, 1
      %p177 = scmp.eq.s32.totalorder %s18, 1
      %p178 = scmp.ne.s32.totalorder %s173, %s175
      %p179 = scmp.eq.s32.totalorder %s18, 0
      %p180 = por %p178, %p179
      %p181 = scmp.ne.s32.totalorder %s173, %s175
      %p182 = scmp.eq.s32.totalorder %s23, 1
      %p183 = por %p181, %p182
      %p184 = scmp.ne.s32.totalorder %s175, %s176
      %p185 = scmp.eq.s32.totalorder %s23, 0
      %p186 = por %p184, %p185
      %p187 = scmp.ne.s32.totalorder %s175, %s176
      %p188 = scmp.eq.s32.totalorder %s24, 1
      %p189 = por %p187, %p188
      %p191 = scmp.ne.s32.totalorder %s176, %s190
      %p192 = scmp.eq.s32.totalorder %s24, 0
      %p193 = por %p191, %p192
      %s194 = ssub.s32 %s18, %s25
      %p195 = scmp.eq.s32.totalorder %s194, 0
      %s197 = sadd.s32 %s196, 1
      %s198 = scalar_select %p195, %s196, %s197
      %p201 = pneg %p195
      %p202 = scmp.eq.s32.totalorder %s18, 1
      %p203 = por %p201, %p202
      %p204 = scmp.ne.s32.totalorder %s196, %s199
      %p205 = scmp.eq.s32.totalorder %s18, 0
      %p206 = por %p204, %p205
      %p207 = scmp.ne.s32.totalorder %s196, %s199
      %p208 = scmp.eq.s32.totalorder %s23, 1
      %p209 = por %p207, %p208
      %p210 = scmp.ne.s32.totalorder %s199, %s200
      %p211 = scmp.eq.s32.totalorder %s23, 0
      %p212 = por %p210, %p211
      %p213 = scmp.ne.s32.totalorder %s199, %s200
      %p214 = scmp.eq.s32.totalorder %s24, 1
      %p215 = por %p213, %p214
      %p217 = scmp.ne.s32.totalorder %s200, %s216
      %p218 = scmp.eq.s32.totalorder %s24, 0
      %p219 = por %p217, %p218
      %s220 = ssub.s32 %s18, %s25
      %p221 = scmp.eq.s32.totalorder %s220, 0
      %s223 = sadd.s32 %s222, 1
      %s224 = scalar_select %p221, %s222, %s223
      %p227 = pneg %p221
      %p228 = scmp.eq.s32.totalorder %s18, 1
      %p229 = por %p227, %p228
      %p230 = scmp.ne.s32.totalorder %s222, %s225
      %p231 = scmp.eq.s32.totalorder %s18, 0
      %p232 = por %p230, %p231
      %p233 = scmp.ne.s32.totalorder %s222, %s225
      %p234 = scmp.eq.s32.totalorder %s23, 1
      %p235 = por %p233, %p234
      %p236 = scmp.ne.s32.totalorder %s225, %s226
      %p237 = scmp.eq.s32.totalorder %s23, 0
      %p238 = por %p236, %p237
      %p239 = scmp.ne.s32.totalorder %s225, %s226
      %p240 = scmp.eq.s32.totalorder %s24, 1
      %p241 = por %p239, %p240
      %p243 = scmp.ne.s32.totalorder %s226, %s242
      %p244 = scmp.eq.s32.totalorder %s24, 0
      %p245 = por %p243, %p244
      %p246 = scmp.le.s32.totalorder 1, %s18
      %p247 = scmp.lt.s32.totalorder %s18, 3
      %p248 = pnand %p246, %p247
      %p249 = pneg %p248
      // Predicated region
      $region9: #{forward.1} parent=5 // pred_check
        _
      $region10: #{forward.1} parent=5 // pred_check_branch
        %251 = sbr.rel (%p248) target = $region12
      $region11: #{forward.1} parent=5 // pred_region
        %s252 = ssub.s32 %s18, 1
        // Predicated region
        $region13: #{forward.1} parent=11 // pred_check
          %p253 = pneg %p39
        $region14: #{forward.1} parent=11 // pred_check_branch
          %255 = sbr.rel (%p253) target = $region16
        $region15: #{forward.1} parent=11 // pred_region
          %s257 = ssub.s32 32, 32
          %258 = vsyncadd [#allocation6], %s257
          %s260 = sshll.u32 %s0, 4
          %s261 = int_to_ptr.vmem [resolvable:$true] %s260
          %263 = dma.vmem_to_smem %s261, 32, [#allocation5], [#allocation6]
        $region16: #{forward.1} parent=11 // pred_fallthru
          _
        // Predicated region
        $region17: #{forward.1} parent=11 // pred_check
          %p264 = pneg %p60
        $region18: #{forward.1} parent=11 // pred_check_branch
          %266 = sbr.rel (%p264) target = $region20
        $region19: #{forward.1} parent=11 // pred_region
          %s268 = ssub.s32 32, 32
          %269 = vsyncadd [#allocation8], %s268
          %s271 = sshll.u32 %s1, 4
          %s272 = int_to_ptr.vmem [resolvable:$true] %s271
          %274 = dma.vmem_to_smem %s272, 32, [#allocation7], [#allocation8]
        $region20: #{forward.1} parent=11 // pred_fallthru
          _
        // Predicated region
        $region21: #{forward.1} parent=11 // pred_check
          %p275 = pneg %p81
        $region22: #{forward.1} parent=11 // pred_check_branch
          %277 = sbr.rel (%p275) target = $region24
        $region23: #{forward.1} parent=11 // pred_region
          %s279 = ssub.s32 16, 16
          %280 = vsyncadd [#allocation8], %s279
          %s282 = sshll.u32 %s2, 4
          %s283 = int_to_ptr.vmem [resolvable:$true] %s282
          %285 = dma.vmem_to_smem %s283, 16, [#allocation9], [#allocation8]
        $region24: #{forward.1} parent=11 // pred_fallthru
          _
        // Predicated region
        $region25: #{forward.1} parent=11 // pred_check
          %p286 = pneg %p102
        $region26: #{forward.1} parent=11 // pred_check_branch
          %288 = sbr.rel (%p286) target = $region28
        $region27: #{forward.1} parent=11 // pred_region
          %s290 = ssub.s32 32, 32
          %291 = vsyncadd [#allocation11], %s290
          %s293 = sshll.u32 %s3, 4
          %s294 = int_to_ptr.vmem [resolvable:$true] %s293
          %296 = dma.vmem_to_smem %s294, 32, [#allocation10], [#allocation11]
        $region28: #{forward.1} parent=11 // pred_fallthru
          _
        // Predicated region
        $region29: #{forward.1} parent=11 // pred_check
          %p297 = pneg %p123
        $region30: #{forward.1} parent=11 // pred_check_branch
          %299 = sbr.rel (%p297) target = $region32
        $region31: #{forward.1} parent=11 // pred_region
          %s301 = ssub.s32 16, 16
          %302 = vsyncadd [#allocation11], %s301
          %s304 = sshll.u32 %s4, 4
          %s305 = int_to_ptr.vmem [resolvable:$true] %s304
          %307 = dma.vmem_to_smem %s305, 16, [#allocation12], [#allocation11]
        $region32: #{forward.1} parent=11 // pred_fallthru
          _
        // Predicated region
        $region33: #{forward.1} parent=11 // pred_check
          %p308 = pneg %p144
        $region34: #{forward.1} parent=11 // pred_check_branch
          %310 = sbr.rel (%p308) target = $region36
        $region35: #{forward.1} parent=11 // pred_region
          _
        $region36: #{forward.1} parent=11 // pred_fallthru
          _
        // Predicated region
        $region37: #{forward.1} parent=11 // pred_check
          %p311 = pneg %p165
        $region38: #{forward.1} parent=11 // pred_check_branch
          %313 = sbr.rel (%p311) target = $region40
        $region39: #{forward.1} parent=11 // pred_region
          _
        $region40: #{forward.1} parent=11 // pred_fallthru
          _
        // Predicated region
        $region41: #{forward.1} parent=11 // pred_check
          %p314 = pneg %p186
        $region42: #{forward.1} parent=11 // pred_check_branch
          %316 = sbr.rel (%p314) target = $region44
        $region43: #{forward.1} parent=11 // pred_region
          _
        $region44: #{forward.1} parent=11 // pred_fallthru
          _
      $region12: #{forward.1} parent=5 // pred_fallthru
        _
      %p317 = scmp.lt.s32.totalorder %s18, 2
      // Predicated region
      $region45: #{forward.1} parent=5 // pred_check
        %p318 = pneg %p317
      $region46: #{forward.1} parent=5 // pred_check_branch
        %320 = sbr.rel (%p318) target = $region48
      $region47: #{forward.1} parent=5 // pred_region
        // Predicated region
        $region49: #{forward.1} parent=47 // pred_check
          %p321 = pneg %p206
        $region50: #{forward.1} parent=47 // pred_check_branch
          %323 = sbr.rel (%p321) target = $region52
        $region51: #{forward.1} parent=47 // pred_region
          %p324 = scmp.lt.s32.totalorder %s18, 1
          %s325 = scalar_select %p324, %s18, 1
          %s326 = smul.addr %s325, 2
          %s327 = scalar_lea.vmem %s8, %s326
        $region52: #{forward.1} parent=47 // pred_fallthru
          _
      $region48: #{forward.1} parent=5 // pred_fallthru
        _
      %p328 = scmp.le.s32.totalorder 1, %s18
      %p329 = scmp.lt.s32.totalorder %s18, 3
      %p330 = pnand %p328, %p329
      %p331 = pneg %p330
      // Predicated region
      $region53: #{forward.1} parent=5 // pred_check
        _
      $region54: #{forward.1} parent=5 // pred_check_branch
        %333 = sbr.rel (%p330) target = $region56
      $region55: #{forward.1} parent=5 // pred_region
        %s334 = ssub.s32 %s18, 1
        // Predicated region
        $region57: #{forward.1} parent=55 // pred_check
          %p335 = pneg %p39
        $region58: #{forward.1} parent=55 // pred_check_branch
          %337 = sbr.rel (%p335) target = $region60
        $region59: #{forward.1} parent=55 // pred_region
          %338 = dma.done [#allocation6], 32
        $region60: #{forward.1} parent=55 // pred_fallthru
          _
        // Predicated region
        $region61: #{forward.1} parent=55 // pred_check
          %p339 = pneg %p60
        $region62: #{forward.1} parent=55 // pred_check_branch
          %341 = sbr.rel (%p339) target = $region64
        $region63: #{forward.1} parent=55 // pred_region
          %342 = dma.done [#allocation8], 32
        $region64: #{forward.1} parent=55 // pred_fallthru
          _
        // Predicated region
        $region65: #{forward.1} parent=55 // pred_check
          %p343 = pneg %p81
        $region66: #{forward.1} parent=55 // pred_check_branch
          %345 = sbr.rel (%p343) target = $region68
        $region67: #{forward.1} parent=55 // pred_region
          %346 = dma.done [#allocation8], 16
        $region68: #{forward.1} parent=55 // pred_fallthru
          _
        // Predicated region
        $region69: #{forward.1} parent=55 // pred_check
          %p347 = pneg %p102
        $region70: #{forward.1} parent=55 // pred_check_branch
          %349 = sbr.rel (%p347) target = $region72
        $region71: #{forward.1} parent=55 // pred_region
          %350 = dma.done [#allocation11], 32
        $region72: #{forward.1} parent=55 // pred_fallthru
          _
        // Predicated region
        $region73: #{forward.1} parent=55 // pred_check
          %p351 = pneg %p123
        $region74: #{forward.1} parent=55 // pred_check_branch
          %353 = sbr.rel (%p351) target = $region76
        $region75: #{forward.1} parent=55 // pred_region
          %354 = dma.done [#allocation11], 16
        $region76: #{forward.1} parent=55 // pred_fallthru
          _
        %355 = sfence
        %p356 = pneg %p39
        %p357 = pneg %p36
        %p358 = pneg %p60
        %p359 = pneg %p57
        %p360 = pneg %p81
        %p361 = pneg %p78
        %p362 = pneg %p102
        %p363 = pneg %p99
        %p364 = pneg %p123
        %p365 = pneg %p120
        %p366 = pneg %p144
        %p367 = pneg %p141
        %p368 = pneg %p165
        %p369 = pneg %p162
        %p370 = pneg %p186
        %p371 = pneg %p183
        %p372 = scmp.lt.s32.totalorder %s23, 1
        %s373 = scalar_select %p372, %s23, 1
        %s374 = smul.addr %s373, 2
        %s375 = scalar_lea.vmem %s8, %s374
        %p376 = pneg %p212
        %p377 = pneg %p209
        %p378 = pneg %p238
        %p379 = pneg %p235
        %p380 = scmp.lt.s32.totalorder %s23, 1
        %s381 = scalar_select %p380, %s23, 1
        %s382 = smul.addr %s381, 2
        %s383 = smul.addr %s382, 4
        %s384 = scalar_lea.vmem %s9, %s383
        %p385 = scmp.lt.s32.totalorder %s23, 1
        %s386 = scalar_select %p385, %s23, 1
        %s387 = smul.addr %s386, 2
        %s388 = scalar_lea.vmem %s8, %s387
        %p389 = scmp.lt.s32.totalorder %s23, 1
        %s390 = scalar_select %p389, %s23, 1
        %s391 = smul.addr %s390, 2
        %s392 = smul.addr %s391, 4
        %s393 = scalar_lea.vmem %s9, %s392
        %v394 = vlaneseq
        %v395 = vshrl.u32 %v394, 7
        %396 = vst [vmem:[#allocation3] sm:$0x7] 0.0
        %397 = vst [vmem:[#allocation3 + $0xc] sm:$0x7] 0.0
        %v398 = vld [vmem:[%s388] sm:$0x3]
        %v399 = vlaneseq
        %vm400 = vcmp.ge.s32.totalorder %v399, 0
        %vm401 = vcmp.lt.s32.totalorder %v399, 256
        %vm402 = vmand %vm400, %vm401
        %s403 = scalar_lea.vmem [#allocation3], 4
        %404 = vst.msk [vmem:[%s403] ss:$4 sm:$0x3] %vm402, %v398
        %v405 = vld [vmem:[#allocation3] ss:$4 sm:$0x7]
        %v406 = vld [vmem:[%s7] ss:$2 sm:$0x3]
        %408 = vrot.lane.b32.xlu0 %v406, 111
        %v409 = vpop.permute.xlu0 %408
        %v410 = vrot.slane %v409, 7
        %vm411 = vcmask 908288
        %v412 = vsel %vm411, %v410, %v409
        %v414 = vmul.f32 %v405, %v412
        %s415 = scalar_lea.vmem %s7, 1
        %v416 = vld [vmem:[%s415] ss:$2 sm:$0x3]
        %418 = vrot.lane.b32.xlu0 %v416, 113
        %v419 = vpop.permute.xlu0 %418
        %v420 = vrot.slane %v419, 7
        %vm421 = vcmask 924672
        %v422 = vsel %vm421, %v420, %v419
        %v424 = vmul.f32 %v405, %v422
        %425 = vrot.lane.b32.xlu0 %v406, 127
        %v426 = vpop.permute.xlu0 %425
        %v427 = vrot.slane %v426, 7
        %vm428 = vcmask 1039360
        %v429 = vsel %vm428, %v427, %v426
        %v431 = vmul.f32 %v405, %v429
        %v432 = vld [vmem:[%s403] ss:$4 sm:$0x3]
        %v433 = vld [vmem:[%s403] ss:$4 sm:$0x7]
        %434 = vrot.lane.b32.xlu0 %v416, 1
        %v435 = vpop.permute.xlu0 %434
        %v436 = vrot.slane %v435, 7
        %vm437 = vcmask 7168
        %v438 = vsel %vm437, %v436, %v435
        %v440 = vmul.f32 %v433, %v438
        %441 = vrot.lane.b32.xlu0 %v406, 15
        %v442 = vpop.permute.xlu0 %441
        %v443 = vrot.slane %v442, 7
        %vm444 = vcmask 121856
        %v445 = vsel %vm444, %v443, %v442
        %v447 = vmul.f32 %v433, %v445
        %448 = vrot.lane.b32.xlu0 %v416, 17
        %v449 = vpop.permute.xlu0 %448
        %v450 = vrot.slane %v449, 7
        %vm451 = vcmask 138240
        %v452 = vsel %vm451, %v450, %v449
        %v454 = vmul.f32 %v433, %v452
        %v455 = vmul.f32 %v414, -0.02454668
        %v456 = vmul.f32 %v405, -0.047393467
        %458 = vrot.lane.b32.xlu0 %v456, 127
        %v459 = vpop.permute.xlu0 %458
        %v460 = vrot.slane %v459, 1
        %v461 = vsel %vm428, %v459, %v460
        %v463 = vadd.f32 %v455, %v461
        %v464 = vmul.f32 %v424, -0.088759854
        %466 = vrot.lane.b32.xlu0 %v464, 126
        %v467 = vpop.permute.xlu0 %466
        %v468 = vrot.slane %v467, 1
        %vm469 = vcmask 1031168
        %v470 = vsel %vm469, %v467, %v468
        %v472 = vadd.f32 %v463, %v470
        %v473 = vmul.f32 %v431, -0.015050161
        %475 = vrot.lane.b32.xlu0 %v473, 112
        %v476 = vpop.permute.xlu0 %475
        %v477 = vrot.slane %v476, 1
        %vm478 = vcmask 916480
        %v479 = vsel %vm478, %v476, %v477
        %v481 = vadd.f32 %v472, %v479
        %v482 = vmul.f32 %v432, 0.0024680537
        %484 = vrot.lane.b32.xlu0 %v482, 111
        %v485 = vpop.permute.xlu0 %484
        %v486 = vrot.slane %v485, 7
        %v487 = vsel %vm411, %v486, %v485
        %v489 = vadd.f32 %v481, %v487
        %v490 = vmul.f32 %v440, -0.025578171
        %492 = vrot.lane.b32.xlu0 %v490, 110
        %v493 = vpop.permute.xlu0 %492
        %v494 = vrot.slane %v493, 7
        %vm495 = vcmask 900096
        %v496 = vsel %vm495, %v494, %v493
        %v498 = vadd.f32 %v489, %v496
        %v499 = vmul.f32 %v447, -0.033076577
        %501 = vrot.lane.b32.xlu0 %v499, 96
        %v502 = vpop.permute.xlu0 %501
        %v503 = vrot.slane %v502, 7
        %vm504 = vcmask 785408
        %v505 = vsel %vm504, %v503, %v502
        %v507 = vadd.f32 %v498, %v505
        %v508 = vmul.f32 %v433, -0.007565949
        %510 = vrot.lane.b32.xlu0 %v508, 95
        %v511 = vpop.permute.xlu0 %510
        %v512 = vrot.slane %v511, 7
        %vm513 = vcmask 777216
        %v514 = vsel %vm513, %v512, %v511
        %v516 = vadd.f32 %v507, %v514
        %v517 = vmul.f32 %v454, 0.034267545
        %519 = vrot.lane.b32.xlu0 %v517, 94
        %v520 = vpop.permute.xlu0 %519
        %v521 = vrot.slane %v520, 7
        %vm522 = vcmask 769024
        %v523 = vsel %vm522, %v521, %v520
        %v525 = vadd.f32 %v516, %v523
        %s526 = sld [smem:[#allocation9]]
        %528 = vrot.lane.b32.xlu0 %v525, 17
        %v529 = vpop.permute.xlu0 %528
        %v530 = vrot.slane %v529, 1
        %v531 = vsel %vm451, %v529, %v530
        %v533 = vadd.f32 %v398, %v531
        %v534 = vstv %s526
        %v535 = vmul.f32 %v534, %v533
        %s536 = sld [smem:[#allocation9 + $0x1]]
        %v537 = vstv %s536
        %v538 = vmul.f32 %v537, %v398
        %v539 = vadd.f32 %v535, %v538
        %540 = vst.msk [vmem:[%s403] ss:$4 sm:$0x3] %vm402, %v539
        %v541 = vld [vmem:[#allocation3] ss:$4 sm:$0x7]
        %v542 = vld [vmem:[%s7] ss:$2 sm:$0x3]
        %544 = vrot.lane.b32.xlu0 %v542, 111
        %v545 = vpop.permute.xlu0 %544
        %v546 = vrot.slane %v545, 7
        %v547 = vsel %vm411, %v546, %v545
        %v549 = vmul.f32 %v541, %v547
        %551 = vrot.lane.b32.xlu0 %v549, 17
        %v552 = vpop.permute.xlu0 %551
        %v553 = vrot.slane %v552, 1
        %v554 = vsel %vm451, %v552, %v553
        %556 = vst.msk [vmem:[#allocation4] ss:$8 sm:$0x3] %vm402, %v554
        %557 = vst.msk [vmem:[#allocation4] ss:$8 sm:$0x0] %vm402, %v554
        %v558 = vld [vmem:[#allocation3] ss:$4 sm:$0x7]
        %560 = vrot.lane.b32.xlu0 %v558, 16
        %v561 = vpop.permute.xlu0 %560
        %v562 = vrot.slane %v561, 1
        %vm563 = vcmask 130048
        %v564 = vsel %vm563, %v561, %v562
        %s566 = scalar_lea.vmem [#allocation4], 1
        %567 = vst.msk [vmem:[%s566] ss:$8 sm:$0x3] %vm402, %v564
        %568 = vst.msk [vmem:[%s566] ss:$8 sm:$0x0] %vm402, %v564
        %v569 = vld [vmem:[#allocation3] ss:$4 sm:$0x7]
        %v570 = vld [vmem:[%s415] ss:$2 sm:$0x3]
        %572 = vrot.lane.b32.xlu0 %v570, 113
        %v573 = vpop.permute.xlu0 %572
        %v574 = vrot.slane %v573, 7
        %v575 = vsel %vm421, %v574, %v573
        %v577 = vmul.f32 %v569, %v575
        %579 = vrot.lane.b32.xlu0 %v577, 15
        %v580 = vpop.permute.xlu0 %579
        %v581 = vrot.slane %v580, 1
        %v582 = vsel %vm444, %v580, %v581
        %s584 = scalar_lea.vmem [#allocation4], 2
        %585 = vst.msk [vmem:[%s584] ss:$8 sm:$0x3] %vm402, %v582
        %586 = vst.msk [vmem:[%s584] ss:$8 sm:$0x0] %vm402, %v582
        %v587 = vld [vmem:[#allocation3] ss:$4 sm:$0x7]
        %v588 = vld [vmem:[%s7] ss:$2 sm:$0x3]
        %590 = vrot.lane.b32.xlu0 %v588, 127
        %v591 = vpop.permute.xlu0 %590
        %v592 = vrot.slane %v591, 7
        %v593 = vsel %vm428, %v592, %v591
        %v595 = vmul.f32 %v587, %v593
        %597 = vrot.lane.b32.xlu0 %v595, 1
        %v598 = vpop.permute.xlu0 %597
        %v599 = vrot.slane %v598, 1
        %v600 = vsel %vm437, %v598, %v599
        %s602 = scalar_lea.vmem [#allocation4], 3
        %603 = vst.msk [vmem:[%s602] ss:$8 sm:$0x3] %vm402, %v600
        %604 = vst.msk [vmem:[%s602] ss:$8 sm:$0x0] %vm402, %v600
        %v605 = vld [vmem:[%s403] ss:$4 sm:$0x3]
        %s606 = scalar_lea.vmem [#allocation4], 4
        %607 = vst.msk [vmem:[%s606] ss:$8 sm:$0x3] %vm402, %v605
        %608 = vst.msk [vmem:[%s606] ss:$8 sm:$0x0] %vm402, %v605
        %v609 = vld [vmem:[%s403] ss:$4 sm:$0x7]
        %v610 = vld [vmem:[%s415] ss:$2 sm:$0x3]
        %612 = vrot.lane.b32.xlu0 %v610, 1
        %v613 = vpop.permute.xlu0 %612
        %v614 = vrot.slane %v613, 7
        %v615 = vsel %vm437, %v614, %v613
        %v617 = vmul.f32 %v609, %v615
        %619 = vrot.lane.b32.xlu0 %v617, 127
        %v620 = vpop.permute.xlu0 %619
        %v621 = vrot.slane %v620, 1
        %v622 = vsel %vm428, %v620, %v621
        %s624 = scalar_lea.vmem [#allocation4], 5
        %625 = vst.msk [vmem:[%s624] ss:$8 sm:$0x3] %vm402, %v622
        %626 = vst.msk [vmem:[%s624] ss:$8 sm:$0x0] %vm402, %v622
        %v627 = vld [vmem:[%s403] ss:$4 sm:$0x7]
        %v628 = vld [vmem:[%s7] ss:$2 sm:$0x3]
        %630 = vrot.lane.b32.xlu0 %v628, 15
        %v631 = vpop.permute.xlu0 %630
        %v632 = vrot.slane %v631, 7
        %v633 = vsel %vm444, %v632, %v631
        %v635 = vmul.f32 %v627, %v633
        %637 = vrot.lane.b32.xlu0 %v635, 113
        %v638 = vpop.permute.xlu0 %637
        %v639 = vrot.slane %v638, 1
        %v640 = vsel %vm421, %v638, %v639
        %s642 = scalar_lea.vmem [#allocation4], 6
        %643 = vst.msk [vmem:[%s642] ss:$8 sm:$0x3] %vm402, %v640
        %644 = vst.msk [vmem:[%s642] ss:$8 sm:$0x0] %vm402, %v640
        %v645 = vld [vmem:[%s403] ss:$4 sm:$0x7]
        %647 = vrot.lane.b32.xlu0 %v645, 112
        %v648 = vpop.permute.xlu0 %647
        %v649 = vrot.slane %v648, 1
        %v650 = vsel %vm478, %v648, %v649
        %s652 = scalar_lea.vmem [#allocation4], 7
        %653 = vst.msk [vmem:[%s652] ss:$8 sm:$0x3] %vm402, %v650
        %654 = vst.msk [vmem:[%s652] ss:$8 sm:$0x0] %vm402, %v650
        %v655 = vld [vmem:[%s403] ss:$4 sm:$0x7]
        %v656 = vld [vmem:[%s415] ss:$2 sm:$0x3]
        %658 = vrot.lane.b32.xlu0 %v656, 17
        %v659 = vpop.permute.xlu0 %658
        %v660 = vrot.slane %v659, 7
        %v661 = vsel %vm451, %v660, %v659
        %v663 = vmul.f32 %v655, %v661
        %665 = vrot.lane.b32.xlu0 %v663, 111
        %v666 = vpop.permute.xlu0 %665
        %v667 = vrot.slane %v666, 1
        %v668 = vsel %vm411, %v666, %v667
        %s670 = scalar_lea.vmem [#allocation4], 16
        %671 = vst.msk [vmem:[%s670] ss:$8 sm:$0x3] %vm402, %v668
        %672 = vst.msk [vmem:[%s670] ss:$8 sm:$0x0] %vm402, %v668
        %v673 = vld [vmem:[%s5] sm:$0x7]
        %v674 = vld [vmem:[#allocation4] sm:$0xff]
        %v675 = vld [vmem:[#allocation4 + $0x8] sm:$0xff]
        %v676 = vld [vmem:[#allocation4 + $0x10] sm:$0x1]
        %v677 = vld [vmem:[#allocation4 + $0x18] sm:$0x1]
        %vm678 = vcmask 72704
        %v680 = vsel %vm678, %v673, 0
        %vm682 = vcmask 1040384
        %v684 = vsel %vm682, %v676, 0
        %v687 = vsel %vm682, %v677, 0
        %689 = vmatprep.subr.mxu0 0.0
        %690 = vmatpush1.msra.mxu0 0.0
        %691 = vmatprep.subr.mxu0 0.0
        %692 = vmatpush1.msra.mxu0 0.0
        %693 = vmatprep.subr.mxu0 0.0
        %694 = vmatpush1.msra.mxu0 0.0
        %695 = vmatprep.subr.mxu0 0.0
        %696 = vmatpush1.msra.mxu0 0.0
        %697 = vmatprep.subr.mxu0 0.0
        %698 = vmatpush1.msra.mxu0 0.0
        %699 = vmatprep.subr.mxu0 0.0
        %700 = vmatpush1.msra.mxu0 0.0
        %701 = vmatprep.subr.mxu0 0.0
        %702 = vmatpush1.msra.mxu0 0.0
        %703 = vmatprep.subr.mxu0 0.0
        %704 = vmatpush1.msra.mxu0 0.0
        %705 = vmatprep.subr.mxu0 0.0
        %706 = vmatpush1.msra.mxu0 0.0
        %707 = vmatprep.subr.mxu0 0.0
        %708 = vmatpush1.msra.mxu0 0.0
        %709 = vmatprep.subr.mxu0 0.0
        %710 = vmatpush1.msra.mxu0 0.0
        %711 = vmatprep.subr.mxu0 0.0
        %712 = vmatpush1.msra.mxu0 0.0
        %713 = vmatprep.subr.mxu0 0.0
        %714 = vmatpush1.msra.mxu0 0.0
        %715 = vmatprep.subr.mxu0 0.0
        %716 = vmatpush1.msra.mxu0 0.0
        %717 = vmatprep.subr.mxu0 %v687
        %718 = vmatpush1.msra.mxu0 %v684
        %719 = vmatprep.subr.mxu0 %v675
        %720 = vmatpush1.msra.mxu0 %v674
        %721 = vmatprep.subr.mxu0 0.0
        %722 = vmatpush2.msra.mxu0 0.0
        %723 = vmatprep.subr.mxu0 0.0
        %724 = vmatpush2.msra.mxu0 0.0
        %725 = vmatprep.subr.mxu0 0.0
        %726 = vmatpush2.msra.mxu0 0.0
        %727 = vmatprep.subr.mxu0 0.0
        %728 = vmatpush2.msra.mxu0 0.0
        %729 = vmatprep.subr.mxu0 0.0
        %730 = vmatpush2.msra.mxu0 0.0
        %731 = vmatprep.subr.mxu0 0.0
        %732 = vmatpush2.msra.mxu0 0.0
        %733 = vmatprep.subr.mxu0 0.0
        %734 = vmatpush2.msra.mxu0 0.0
        %735 = vmatprep.subr.mxu0 0.0
        %736 = vmatpush2.msra.mxu0 0.0
        %737 = vmatprep.subr.mxu0 0.0
        %738 = vmatpush2.msra.mxu0 0.0
        %739 = vmatprep.subr.mxu0 0.0
        %740 = vmatpush2.msra.mxu0 0.0
        %741 = vmatprep.subr.mxu0 0.0
        %742 = vmatpush2.msra.mxu0 0.0
        %743 = vmatprep.subr.mxu0 0.0
        %744 = vmatpush2.msra.mxu0 0.0
        %745 = vmatprep.subr.mxu0 0.0
        %746 = vmatpush2.msra.mxu0 0.0
        %747 = vmatprep.subr.mxu0 0.0
        %748 = vmatpush2.msra.mxu0 0.0
        %749 = vmatprep.subr.mxu0 0.0
        %750 = vmatpush2.msra.mxu0 0.0
        %751 = vmatprep.subr.mxu0 0.0
        %752 = vmatpush2.msra.mxu0 0.0
        %753 = vmatprep.mubr.f32.mxu0 0.0
        %754 = vmatmul.mubr.f32.gmra.mxu0 %v680
        %v755 = vpop.f32.mrf.mxu0
        %v756 = vadd.f32 0.0, %v755
        %v757 = vpop.f32.mrf.mxu0
        %v758 = vadd.f32 0.0, %v757
        %759 = vdwg.mxu0
        %v762 = vcombine.low %v756, %v758
        %764 = vst [vmem:[#allocation3 + $0x4] sm:$0x77] %v762
        %vm765 = vcmp.eq.s32.totalorder %v395, 0
        %s766 = sld [smem:[#allocation10]]
        %vm767 = vcmp.eq.s32.totalorder %v395, 1
        %s768 = sld [smem:[#allocation10 + $0x1]]
        %s769 = sld [smem:[#allocation10 + $0x2]]
        %v770 = vstv %s768
        %v771 = vstv %s769
        %v772 = vsel %vm767, %v770, %v771
        %v773 = vstv %s766
        %v774 = vsel %vm765, %v773, %v772
        %s775 = sld [smem:[#allocation12]]
        %p776 = scmp.gt.s32.totalorder %s775, 0
        // Predicated region
        $region77: #{forward.1} parent=55 // pred_check
          %p777 = pneg %p776
        $region78: #{forward.1} parent=55 // pred_check_branch
          %779 = sbr.rel (%p777) target = $region80
        $region79: #{forward.1} parent=55 // pred_region
          %v780 = vld [vmem:[#allocation3] sm:$0x77]
          %v781 = vld [vmem:[#allocation3 + $0x8] sm:$0x7]
          %v782 = vld [vmem:[%s7] ss:$2 sm:$0x3]
          %v784 = vlaneseq
          %v785 = vshrl.u32 %v784, 7
          %v786 = vsub.s32 0, %v785
          %v787 = vrot.slane %v782, %v786
          %v788 = vlaneseq
          %v789 = vshrl.u32 %v788, 7
          %v790 = vsub.s32 1, %v789
          %v791 = vrot.slane %v782, %v790
          %v792 = vcombine.low %v787, %v791
          %793 = vrot.lane.b32.xlu0 %v792, 111
          %v794 = vpop.permute.xlu0 %793
          %v795 = vrot.slane %v794, 4
          %v796 = vsel %vm411, %v795, %v794
          %v799 = vmul.f32 %v780, %v796
          %v800 = vmul.f32 %v781, %v795
          %v803 = vcombine.high %v799, %v799
          %804 = vrot.lane.b32.xlu0 %v799, 17
          %v805 = vpop.permute.xlu0 %804
          %806 = vrot.lane.b32.xlu0 %v803, 17
          %v807 = vpop.permute.xlu0 %806
          %808 = vrot.lane.b32.xlu0 %v800, 17
          %v809 = vpop.permute.xlu0 %808
          %v810 = vsel %vm451, %v805, %v807
          %v811 = vsel %vm451, %v807, %v809
          %814 = vst [vmem:[#allocation4] sm:$0x7] %v810
          %815 = vst [vmem:[#allocation4 + $0x8] sm:$0x7] %v811
          %v816 = vld [vmem:[#allocation3] sm:$0x77]
          %v817 = vld [vmem:[#allocation3 + $0x8] sm:$0x7]
          %v820 = vcombine.high %v816, %v816
          %v821 = vrot.slane %v816, 5
          %v822 = vrot.slane %v820, 5
          %v823 = vrot.slane %v817, 5
          %824 = vrot.lane.b32.xlu0 %v821, 16
          %v825 = vpop.permute.xlu0 %824
          %826 = vrot.lane.b32.xlu0 %v822, 16
          %v827 = vpop.permute.xlu0 %826
          %828 = vrot.lane.b32.xlu0 %v823, 16
          %v829 = vpop.permute.xlu0 %828
          %v830 = vsel %vm563, %v825, %v827
          %v831 = vsel %vm563, %v827, %v829
          %834 = vst [vmem:[#allocation4] sm:$0x38] %v830
          %835 = vst [vmem:[#allocation4 + $0x8] sm:$0x38] %v831
          %v836 = vld [vmem:[#allocation3] sm:$0x77]
          %v837 = vld [vmem:[#allocation3 + $0x8] sm:$0x7]
          %v838 = vld [vmem:[%s415] ss:$2 sm:$0x3]
          %v840 = vlaneseq
          %v841 = vshrl.u32 %v840, 7
          %v842 = vsub.s32 0, %v841
          %v843 = vrot.slane %v838, %v842
          %v844 = vlaneseq
          %v845 = vshrl.u32 %v844, 7
          %v846 = vsub.s32 1, %v845
          %v847 = vrot.slane %v838, %v846
          %v848 = vcombine.low %v843, %v847
          %849 = vrot.lane.b32.xlu0 %v848, 113
          %v850 = vpop.permute.xlu0 %849
          %v851 = vrot.slane %v850, 4
          %v852 = vsel %vm421, %v851, %v850
          %v855 = vmul.f32 %v836, %v852
          %v856 = vmul.f32 %v837, %v851
          %v859 = vcombine.high %v855, %v855
          %v860 = vrot.slane %v855, 2
          %v861 = vrot.slane %v859, 2
          %v862 = vrot.slane %v856, 2
          %863 = vrot.lane.b32.xlu0 %v860, 15
          %v864 = vpop.permute.xlu0 %863
          %865 = vrot.lane.b32.xlu0 %v861, 15
          %v866 = vpop.permute.xlu0 %865
          %867 = vrot.lane.b32.xlu0 %v862, 15
          %v868 = vpop.permute.xlu0 %867
          %v869 = vsel %vm444, %v864, %v866
          %v870 = vsel %vm444, %v866, %v868
          %873 = vst [vmem:[#allocation4] sm:$0xc0] %v869
          %874 = vst [vmem:[#allocation4 + $0x8] sm:$0xc0] %v870
          %875 = vst [vmem:[#allocation4 + $0x10] sm:$0x1] %v869
          %876 = vst [vmem:[#allocation4 + $0x18] sm:$0x1] %v870
          %v877 = vld [vmem:[#allocation3] sm:$0x77]
          %v878 = vld [vmem:[#allocation3 + $0x8] sm:$0x7]
          %v879 = vld [vmem:[%s7] ss:$2 sm:$0x3]
          %v881 = vlaneseq
          %v882 = vshrl.u32 %v881, 7
          %v883 = vsub.s32 0, %v882
          %v884 = vrot.slane %v879, %v883
          %v885 = vlaneseq
          %v886 = vshrl.u32 %v885, 7
          %v887 = vsub.s32 1, %v886
          %v888 = vrot.slane %v879, %v887
          %v889 = vcombine.low %v884, %v888
          %890 = vrot.lane.b32.xlu0 %v889, 127
          %v891 = vpop.permute.xlu0 %890
          %v892 = vrot.slane %v891, 4
          %v893 = vsel %vm428, %v892, %v891
          %v896 = vmul.f32 %v877, %v893
          %v897 = vmul.f32 %v878, %v892
          %v900 = vcombine.high %v896, %v896
          %v901 = vrot.slane %v896, 7
          %v902 = vrot.slane %v900, 7
          %v903 = vrot.slane %v897, 7
          %904 = vrot.lane.b32.xlu0 %v901, 1
          %v905 = vpop.permute.xlu0 %904
          %906 = vrot.lane.b32.xlu0 %v902, 1
          %v907 = vpop.permute.xlu0 %906
          %908 = vrot.lane.b32.xlu0 %v903, 1
          %v909 = vpop.permute.xlu0 %908
          %v910 = vsel %vm437, %v905, %v907
          %v911 = vsel %vm437, %v907, %v909
          %914 = vst [vmem:[#allocation4 + $0x10] sm:$0xe] %v910
          %915 = vst [vmem:[#allocation4 + $0x18] sm:$0xe] %v911
          %v916 = vld [vmem:[#allocation3 + $0x4] sm:$0x77]
          %v918 = vcombine.low %v916, %v916
          %920 = vst [vmem:[#allocation4 + $0x10] sm:$0x70] %v918
          %921 = vst [vmem:[#allocation4 + $0x18] sm:$0x70] %v916
          %v922 = vld [vmem:[#allocation3 + $0x4] sm:$0x77]
          %v923 = vld [vmem:[#allocation3 + $0xc] sm:$0x7]
          %v924 = vld [vmem:[%s415] ss:$2 sm:$0x3]
          %v926 = vlaneseq
          %v927 = vshrl.u32 %v926, 7
          %v928 = vsub.s32 0, %v927
          %v929 = vrot.slane %v924, %v928
          %v930 = vlaneseq
          %v931 = vshrl.u32 %v930, 7
          %v932 = vsub.s32 1, %v931
          %v933 = vrot.slane %v924, %v932
          %v934 = vcombine.low %v929, %v933
          %935 = vrot.lane.b32.xlu0 %v934, 1
          %v936 = vpop.permute.xlu0 %935
          %v937 = vrot.slane %v936, 4
          %v938 = vsel %vm437, %v937, %v936
          %v941 = vmul.f32 %v922, %v938
          %v942 = vmul.f32 %v923, %v937
          %v945 = vcombine.high %v941, %v941
          %v946 = vrot.slane %v941, 1
          %v947 = vrot.slane %v945, 1
          %v948 = vrot.slane %v942, 1
          %949 = vrot.lane.b32.xlu0 %v946, 127
          %v950 = vpop.permute.xlu0 %949
          %951 = vrot.lane.b32.xlu0 %v947, 127
          %v952 = vpop.permute.xlu0 %951
          %953 = vrot.lane.b32.xlu0 %v948, 127
          %v954 = vpop.permute.xlu0 %953
          %v955 = vsel %vm428, %v950, %v952
          %v956 = vsel %vm428, %v952, %v954
          %959 = vst [vmem:[#allocation4 + $0x10] sm:$0x80] %v955
          %960 = vst [vmem:[#allocation4 + $0x18] sm:$0x80] %v956
          %961 = vst [vmem:[#allocation4 + $0x20] sm:$0x3] %v955
          %962 = vst [vmem:[#allocation4 + $0x28] sm:$0x3] %v956
          %v963 = vld [vmem:[#allocation3 + $0x4] sm:$0x77]
          %v964 = vld [vmem:[#allocation3 + $0xc] sm:$0x7]
          %v965 = vld [vmem:[%s7] ss:$2 sm:$0x3]
          %v967 = vlaneseq
          %v968 = vshrl.u32 %v967, 7
          %v969 = vsub.s32 0, %v968
          %v970 = vrot.slane %v965, %v969
          %v971 = vlaneseq
          %v972 = vshrl.u32 %v971, 7
          %v973 = vsub.s32 1, %v972
          %v974 = vrot.slane %v965, %v973
          %v975 = vcombine.low %v970, %v974
          %976 = vrot.lane.b32.xlu0 %v975, 15
          %v977 = vpop.permute.xlu0 %976
          %v978 = vrot.slane %v977, 4
          %v979 = vsel %vm444, %v978, %v977
          %v982 = vmul.f32 %v963, %v979
          %v983 = vmul.f32 %v964, %v978
          %v986 = vcombine.high %v982, %v982
          %v987 = vrot.slane %v982, 6
          %v988 = vrot.slane %v986, 6
          %v989 = vrot.slane %v983, 6
          %990 = vrot.lane.b32.xlu0 %v987, 113
          %v991 = vpop.permute.xlu0 %990
          %992 = vrot.lane.b32.xlu0 %v988, 113
          %v993 = vpop.permute.xlu0 %992
          %994 = vrot.lane.b32.xlu0 %v989, 113
          %v995 = vpop.permute.xlu0 %994
          %v996 = vsel %vm421, %v991, %v993
          %v997 = vsel %vm421, %v993, %v995
          %1000 = vst [vmem:[#allocation4 + $0x20] sm:$0x1c] %v996
          %1001 = vst [vmem:[#allocation4 + $0x28] sm:$0x1c] %v997
          %v1002 = vld [vmem:[#allocation3 + $0x4] sm:$0x77]
          %v1003 = vld [vmem:[#allocation3 + $0xc] sm:$0x7]
          %v1006 = vcombine.high %v1002, %v1002
          %v1007 = vrot.slane %v1002, 3
          %v1008 = vrot.slane %v1006, 3
          %v1009 = vrot.slane %v1003, 3
          %1010 = vrot.lane.b32.xlu0 %v1007, 112
          %v1011 = vpop.permute.xlu0 %1010
          %1012 = vrot.lane.b32.xlu0 %v1008, 112
          %v1013 = vpop.permute.xlu0 %1012
          %1014 = vrot.lane.b32.xlu0 %v1009, 112
          %v1015 = vpop.permute.xlu0 %1014
          %v1016 = vsel %vm478, %v1011, %v1013
          %v1017 = vsel %vm478, %v1013, %v1015
          %1020 = vst [vmem:[#allocation4 + $0x20] sm:$0xe0] %v1016
          %1021 = vst [vmem:[#allocation4 + $0x28] sm:$0xe0] %v1017
          %v1022 = vld [vmem:[#allocation3 + $0x4] sm:$0x77]
          %v1023 = vld [vmem:[#allocation3 + $0xc] sm:$0x7]
          %v1024 = vld [vmem:[%s415] ss:$2 sm:$0x3]
          %v1026 = vlaneseq
          %v1027 = vshrl.u32 %v1026, 7
          %v1028 = vsub.s32 0, %v1027
          %v1029 = vrot.slane %v1024, %v1028
          %v1030 = vlaneseq
          %v1031 = vshrl.u32 %v1030, 7
          %v1032 = vsub.s32 1, %v1031
          %v1033 = vrot.slane %v1024, %v1032
          %v1034 = vcombine.low %v1029, %v1033
          %1035 = vrot.lane.b32.xlu0 %v1034, 17
          %v1036 = vpop.permute.xlu0 %1035
          %v1037 = vrot.slane %v1036, 4
          %v1038 = vsel %vm451, %v1037, %v1036
          %v1041 = vmul.f32 %v1022, %v1038
          %v1042 = vmul.f32 %v1023, %v1037
          %v1045 = vcombine.high %v1041, %v1041
          %1046 = vrot.lane.b32.xlu0 %v1041, 111
          %v1047 = vpop.permute.xlu0 %1046
          %1048 = vrot.lane.b32.xlu0 %v1045, 111
          %v1049 = vpop.permute.xlu0 %1048
          %1050 = vrot.lane.b32.xlu0 %v1042, 111
          %v1051 = vpop.permute.xlu0 %1050
          %v1052 = vsel %vm411, %v1047, %v1049
          %v1053 = vsel %vm411, %v1049, %v1051
          %1056 = vst [vmem:[#allocation4 + $0x30] sm:$0x7] %v1052
          %1057 = vst [vmem:[#allocation4 + $0x38] sm:$0x7] %v1053
          %v1058 = vld [vmem:[%s6] sm:$0x7]
          %v1059 = vld [vmem:[#allocation4] sm:$0xff]
          %v1060 = vld [vmem:[#allocation4 + $0x8] sm:$0xff]
          %v1061 = vld [vmem:[#allocation4 + $0x10] sm:$0xff]
          %v1062 = vld [vmem:[#allocation4 + $0x18] sm:$0xff]
          %v1063 = vld [vmem:[#allocation4 + $0x20] sm:$0xff]
          %v1064 = vld [vmem:[#allocation4 + $0x28] sm:$0xff]
          %v1065 = vld [vmem:[#allocation4 + $0x30] sm:$0x7]
          %v1066 = vld [vmem:[#allocation4 + $0x38] sm:$0x7]
          %v1067 = vld [vmem:[#allocation3 + $0x4] sm:$0x77]
          %v1069 = vcombine.high %v1067, %v1067
          %v1071 = vmul.f32 %v774, %v1067
          %v1072 = vmul.f32 %v774, %v1069
          %vm1073 = vcmask 220160
          %v1075 = vsel %vm1073, %v1058, 0
          %vm1077 = vcmask 1042432
          %v1079 = vsel %vm1077, %v1065, 0
          %v1082 = vsel %vm1077, %v1066, 0
          %1084 = vmatprep.subr.mxu0 0.0
          %1085 = vmatpush1.msra.mxu0 0.0
          %1086 = vmatprep.subr.mxu0 0.0
          %1087 = vmatpush1.msra.mxu0 0.0
          %1088 = vmatprep.subr.mxu0 0.0
          %1089 = vmatpush1.msra.mxu0 0.0
          %1090 = vmatprep.subr.mxu0 0.0
          %1091 = vmatpush1.msra.mxu0 0.0
          %1092 = vmatprep.subr.mxu0 0.0
          %1093 = vmatpush1.msra.mxu0 0.0
          %1094 = vmatprep.subr.mxu0 0.0
          %1095 = vmatpush1.msra.mxu0 0.0
          %1096 = vmatprep.subr.mxu0 0.0
          %1097 = vmatpush1.msra.mxu0 0.0
          %1098 = vmatprep.subr.mxu0 0.0
          %1099 = vmatpush1.msra.mxu0 0.0
          %1100 = vmatprep.subr.mxu0 0.0
          %1101 = vmatpush1.msra.mxu0 0.0
          %1102 = vmatprep.subr.mxu0 0.0
          %1103 = vmatpush1.msra.mxu0 0.0
          %1104 = vmatprep.subr.mxu0 0.0
          %1105 = vmatpush1.msra.mxu0 0.0
          %1106 = vmatprep.subr.mxu0 0.0
          %1107 = vmatpush1.msra.mxu0 0.0
          %1108 = vmatprep.subr.mxu0 %v1082
          %1109 = vmatpush1.msra.mxu0 %v1079
          %1110 = vmatprep.subr.mxu0 %v1064
          %1111 = vmatpush1.msra.mxu0 %v1063
          %1112 = vmatprep.subr.mxu0 %v1062
          %1113 = vmatpush1.msra.mxu0 %v1061
          %1114 = vmatprep.subr.mxu0 %v1060
          %1115 = vmatpush1.msra.mxu0 %v1059
          %1116 = vmatprep.subr.mxu0 0.0
          %1117 = vmatpush2.msra.mxu0 0.0
          %1118 = vmatprep.subr.mxu0 0.0
          %1119 = vmatpush2.msra.mxu0 0.0
          %1120 = vmatprep.subr.mxu0 0.0
          %1121 = vmatpush2.msra.mxu0 0.0
          %1122 = vmatprep.subr.mxu0 0.0
          %1123 = vmatpush2.msra.mxu0 0.0
          %1124 = vmatprep.subr.mxu0 0.0
          %1125 = vmatpush2.msra.mxu0 0.0
          %1126 = vmatprep.subr.mxu0 0.0
          %1127 = vmatpush2.msra.mxu0 0.0
          %1128 = vmatprep.subr.mxu0 0.0
          %1129 = vmatpush2.msra.mxu0 0.0
          %1130 = vmatprep.subr.mxu0 0.0
          %1131 = vmatpush2.msra.mxu0 0.0
          %1132 = vmatprep.subr.mxu0 0.0
          %1133 = vmatpush2.msra.mxu0 0.0
          %1134 = vmatprep.subr.mxu0 0.0
          %1135 = vmatpush2.msra.mxu0 0.0
          %1136 = vmatprep.subr.mxu0 0.0
          %1137 = vmatpush2.msra.mxu0 0.0
          %1138 = vmatprep.subr.mxu0 0.0
          %1139 = vmatpush2.msra.mxu0 0.0
          %1140 = vmatprep.subr.mxu0 0.0
          %1141 = vmatpush2.msra.mxu0 0.0
          %1142 = vmatprep.subr.mxu0 0.0
          %1143 = vmatpush2.msra.mxu0 0.0
          %1144 = vmatprep.subr.mxu0 0.0
          %1145 = vmatpush2.msra.mxu0 0.0
          %1146 = vmatprep.subr.mxu0 0.0
          %1147 = vmatpush2.msra.mxu0 0.0
          %1148 = vmatprep.mubr.f32.mxu0 0.0
          %1149 = vmatmul.mubr.f32.gmra.mxu0 %v1075
          %v1150 = vpop.f32.mrf.mxu0
          %v1151 = vadd.f32 %v1071, %v1150
          %v1152 = vpop.f32.mrf.mxu0
          %v1153 = vadd.f32 %v1072, %v1152
          %1154 = vdwg.mxu0
          %v1157 = vcombine.low %v1151, %v1153
          %1159 = vst [vmem:[#allocation2] sm:$0x77] %v1157
        $region80: #{forward.1} parent=55 // pred_fallthru
          _
        %s1160 = sld [smem:[#allocation12]]
        %p1161 = scmp.eq.s32.totalorder %s1160, 0
        // Predicated region
        $region81: #{forward.1} parent=55 // pred_check
          %p1162 = pneg %p1161
        $region82: #{forward.1} parent=55 // pred_check_branch
          %1164 = sbr.rel (%p1162) target = $region84
        $region83: #{forward.1} parent=55 // pred_region
          %v1165 = vld [vmem:[#allocation3 + $0x4] sm:$0x77]
          %v1167 = vcombine.high %v1165, %v1165
          %v1169 = vmul.f32 %v774, %v1165
          %v1170 = vmul.f32 %v774, %v1167
          %v1173 = vcombine.low %v1169, %v1170
          %1175 = vst [vmem:[#allocation2] sm:$0x77] %v1173
        $region84: #{forward.1} parent=55 // pred_fallthru
          _
        %s1176 = sld [smem:[#allocation5]]
        %p1177 = scmp.ge.f32.partialorder %s1176, 1e-09
        // Predicated region
        $region85: #{forward.1} parent=55 // pred_check
          %p1178 = pneg %p1177
        $region86: #{forward.1} parent=55 // pred_check_branch
          %1180 = sbr.rel (%p1178) target = $region88
        $region87: #{forward.1} parent=55 // pred_region
          %v1181 = vld [vmem:[#allocation2] sm:$0x77]
          %s1182 = sld [smem:[#allocation7]]
          %s1183 = smul.f32 %s1182, 1.5
          %s1184 = sadd.f32 %s1183, 0.5
          %v1185 = vld [vmem:[#allocation3 + $0x4] sm:$0x77]
          %v1186 = vmax.f32 %v1185, 0.0001
          %v1187 = vlog2.pop %v1186
          %v1188 = vmul.f32 %v1187, 0.6931472
          %v1189 = vstv %s1184
          %v1190 = vmul.f32 %v1189, %v1188
          %v1191 = vmul.f32 %v1190, 1.442695
          %v1192 = vpow.pop %v1191
          %v1193 = vstv %s1176
          %v1194 = vmul.f32 %v1193, %v1192
          %v1195 = vadd.f32 %v1181, %v1194
          %1196 = vst [vmem:[#allocation2] sm:$0x77] %v1195
        $region88: #{forward.1} parent=55 // pred_fallthru
          _
        %s1197 = sld [smem:[#allocation5 + $0x4]]
        %p1198 = scmp.ge.f32.partialorder %s1197, 1e-09
        // Predicated region
        $region89: #{forward.1} parent=55 // pred_check
          %p1199 = pneg %p1198
        $region90: #{forward.1} parent=55 // pred_check_branch
          %1201 = sbr.rel (%p1199) target = $region92
        $region91: #{forward.1} parent=55 // pred_region
          %v1202 = vld [vmem:[#allocation2] sm:$0x77]
          %v1203 = vld [vmem:[#allocation3 + $0x4] sm:$0x77]
          %v1205 = vcombine.high %v1203, %v1203
          %vm1207 = vcmask 1042432
          %v1208 = vsel %vm1207, %v1203, 0.0
          %v1209 = vsel %vm1207, %v1205, 0.0
          %v1210 = vadd.f32 %v1208, %v1209
          %1211 = vadd.xlane.f32.xlu0 %v1210
          %v1212 = vpop.xlane.xlu0 %1211
          %v1213 = vrcp.pop 256.0
          %v1214 = vmul.f32 %v1212, %v1213
          %v1216 = vrot.slane %v1214, 1
          %v1218 = vadd.f32 %v1214, %v1216
          %v1219 = vrot.slane %v1214, 2
          %v1221 = vadd.f32 %v1218, %v1219
          %v1222 = vmul.f32 %v1221, 0.33333334
          %v1223 = vadd.f32 %v1214, 1e-06
          %v1224 = vlaneseq
          %v1225 = vshrl.u32 %v1224, 7
          %v1226 = vsub.s32 0, %v1225
          %v1227 = vrot.slane %v1222, %v1226
          %v1228 = vrcp.pop %v1223
          %v1229 = vmul.f32 %v1227, %v1228
          %1231 = vset.pattern.permute.xlu0 0
          %1232 = vperm.xlu0 %1231, %v1229
          %v1233 = vpop.permute.xlu0 %1232
          %v1235 = vunpack.c.l.s4 839922192
          %v1236 = vunpack.c.0.s8 %v1235
          %v1237 = vlaneseq
          %v1238 = vshrl.u32 %v1237, 7
          %v1239 = vsub.s32 %v1236, %v1238
          %v1240 = vrot.slane %v1233, %v1239
          %v1242 = vmul.f32 %v1203, %v1240
          %v1243 = vstv %s1197
          %v1244 = vmul.f32 %v1243, %v1242
          %v1245 = vadd.f32 %v1202, %v1244
          %1246 = vst [vmem:[#allocation2] sm:$0x77] %v1245
        $region92: #{forward.1} parent=55 // pred_fallthru
          _
        %s1247 = sld [smem:[#allocation5 + $0xc]]
        %p1248 = scmp.ge.f32.partialorder %s1247, 1e-09
        // Predicated region
        $region93: #{forward.1} parent=55 // pred_check
          %p1249 = pneg %p1248
        $region94: #{forward.1} parent=55 // pred_check_branch
          %1251 = sbr.rel (%p1249) target = $region96
        $region95: #{forward.1} parent=55 // pred_region
          %v1252 = vld [vmem:[#allocation2] sm:$0x77]
          %v1253 = vld [vmem:[#allocation3 + $0x4] sm:$0x77]
          %v1254 = vmul.f32 %v1253, %v1253
          %v1256 = vrot.slane %v1253, 5
          %v1257 = vrot.slane %v1256, 4
          %v1259 = vmul.f32 %v1253, %v1257
          %v1260 = vrot.slane %v1253, 6
          %v1261 = vrot.slane %v1260, 4
          %v1263 = vmul.f32 %v1253, %v1261
          %s1264 = sld [smem:[#allocation7 + $0x11]]
          %v1265 = vstv %s1264
          %v1266 = vmul.f32 %v1265, %v1254
          %s1267 = sld [smem:[#allocation7 + $0x12]]
          %v1268 = vstv %s1267
          %v1269 = vmul.f32 %v1268, %v1254
          %v1271 = vrot.slane %v1269, 5
          %v1272 = vrot.slane %v1271, 4
          %v1274 = vadd.f32 %v1266, %v1272
          %s1275 = sld [smem:[#allocation7 + $0x13]]
          %v1276 = vstv %s1275
          %v1277 = vmul.f32 %v1276, %v1254
          %v1279 = vrot.slane %v1277, 6
          %v1280 = vrot.slane %v1279, 4
          %v1282 = vadd.f32 %v1274, %v1280
          %s1283 = sld [smem:[#allocation7 + $0x14]]
          %v1284 = vstv %s1283
          %v1285 = vmul.f32 %v1284, %v1259
          %v1286 = vadd.f32 %v1282, %v1285
          %s1287 = sld [smem:[#allocation7 + $0x15]]
          %v1288 = vstv %s1287
          %v1289 = vmul.f32 %v1288, %v1263
          %v1290 = vadd.f32 %v1286, %v1289
          %s1291 = sld [smem:[#allocation7 + $0x16]]
          %v1292 = vstv %s1291
          %v1293 = vmul.f32 %v1292, %v1259
          %v1295 = vrot.slane %v1293, 5
          %v1296 = vrot.slane %v1295, 4
          %v1298 = vadd.f32 %v1290, %v1296
          %s1299 = sld [smem:[#allocation7 + $0x17]]
          %v1300 = vstv %s1299
          %v1301 = vmul.f32 %v1300, %v1253
          %v1302 = vadd.f32 %v1298, %v1301
          %s1303 = sld [smem:[#allocation7 + $0x18]]
          %v1304 = vstv %s1303
          %v1305 = vmul.f32 %v1304, %v1253
          %v1307 = vrot.slane %v1305, 5
          %v1308 = vrot.slane %v1307, 4
          %v1310 = vadd.f32 %v1302, %v1308
          %s1311 = sld [smem:[#allocation7 + $0x19]]
          %v1312 = vstv %s1311
          %v1313 = vmul.f32 %v1312, %v1253
          %v1315 = vrot.slane %v1313, 6
          %v1316 = vrot.slane %v1315, 4
          %v1318 = vadd.f32 %v1310, %v1316
          %s1319 = sld [smem:[#allocation7 + $0x1a]]
          %v1320 = vstv %s1319
          %v1321 = vadd.f32 %v1318, %v1320
          %s1322 = sld [smem:[#allocation7 + $0x1b]]
          %v1323 = vstv %s1322
          %v1324 = vmul.f32 %v1323, %v1254
          %s1325 = sld [smem:[#allocation7 + $0x1c]]
          %v1326 = vstv %s1325
          %v1327 = vmul.f32 %v1326, %v1254
          %v1329 = vrot.slane %v1327, 5
          %v1330 = vrot.slane %v1329, 4
          %v1332 = vadd.f32 %v1324, %v1330
          %s1333 = sld [smem:[#allocation7 + $0x1d]]
          %v1334 = vstv %s1333
          %v1335 = vmul.f32 %v1334, %v1254
          %v1337 = vrot.slane %v1335, 6
          %v1338 = vrot.slane %v1337, 4
          %v1340 = vadd.f32 %v1332, %v1338
          %s1341 = sld [smem:[#allocation7 + $0x1e]]
          %v1342 = vstv %s1341
          %v1343 = vmul.f32 %v1342, %v1259
          %v1344 = vadd.f32 %v1340, %v1343
          %s1345 = sld [smem:[#allocation7 + $0x1f]]
          %v1346 = vstv %s1345
          %v1347 = vmul.f32 %v1346, %v1263
          %v1348 = vadd.f32 %v1344, %v1347
          %s1349 = sld [smem:[#allocation7 + $0x20]]
          %v1350 = vstv %s1349
          %v1351 = vmul.f32 %v1350, %v1259
          %v1353 = vrot.slane %v1351, 5
          %v1354 = vrot.slane %v1353, 4
          %v1356 = vadd.f32 %v1348, %v1354
          %s1357 = sld [smem:[#allocation7 + $0x21]]
          %v1358 = vstv %s1357
          %v1359 = vmul.f32 %v1358, %v1253
          %v1360 = vadd.f32 %v1356, %v1359
          %s1361 = sld [smem:[#allocation7 + $0x22]]
          %v1362 = vstv %s1361
          %v1363 = vmul.f32 %v1362, %v1253
          %v1365 = vrot.slane %v1363, 5
          %v1366 = vrot.slane %v1365, 4
          %v1368 = vadd.f32 %v1360, %v1366
          %s1369 = sld [smem:[#allocation7 + $0x23]]
          %v1370 = vstv %s1369
          %v1371 = vmul.f32 %v1370, %v1253
          %v1373 = vrot.slane %v1371, 6
          %v1374 = vrot.slane %v1373, 4
          %v1376 = vadd.f32 %v1368, %v1374
          %s1377 = sld [smem:[#allocation7 + $0x24]]
          %v1378 = vstv %s1377
          %v1379 = vadd.f32 %v1376, %v1378
          %s1380 = sld [smem:[#allocation7 + $0x25]]
          %v1381 = vstv %s1380
          %v1382 = vmul.f32 %v1381, %v1254
          %s1383 = sld [smem:[#allocation7 + $0x26]]
          %v1384 = vstv %s1383
          %v1385 = vmul.f32 %v1384, %v1254
          %v1387 = vrot.slane %v1385, 5
          %v1388 = vrot.slane %v1387, 4
          %v1390 = vadd.f32 %v1382, %v1388
          %s1391 = sld [smem:[#allocation7 + $0x27]]
          %v1392 = vstv %s1391
          %v1393 = vmul.f32 %v1392, %v1254
          %v1395 = vrot.slane %v1393, 6
          %v1396 = vrot.slane %v1395, 4
          %v1398 = vadd.f32 %v1390, %v1396
          %s1399 = sld [smem:[#allocation7 + $0x28]]
          %v1400 = vstv %s1399
          %v1401 = vmul.f32 %v1400, %v1259
          %v1402 = vadd.f32 %v1398, %v1401
          %s1403 = sld [smem:[#allocation7 + $0x29]]
          %v1404 = vstv %s1403
          %v1405 = vmul.f32 %v1404, %v1263
          %v1406 = vadd.f32 %v1402, %v1405
          %s1407 = sld [smem:[#allocation7 + $0x2a]]
          %v1408 = vstv %s1407
          %v1409 = vmul.f32 %v1408, %v1259
          %v1411 = vrot.slane %v1409, 5
          %v1412 = vrot.slane %v1411, 4
          %v1414 = vadd.f32 %v1406, %v1412
          %s1415 = sld [smem:[#allocation7 + $0x2b]]
          %v1416 = vstv %s1415
          %v1417 = vmul.f32 %v1416, %v1253
          %v1418 = vadd.f32 %v1414, %v1417
          %s1419 = sld [smem:[#allocation7 + $0x2c]]
          %v1420 = vstv %s1419
          %v1421 = vmul.f32 %v1420, %v1253
          %v1423 = vrot.slane %v1421, 5
          %v1424 = vrot.slane %v1423, 4
          %v1426 = vadd.f32 %v1418, %v1424
          %s1427 = sld [smem:[#allocation7 + $0x2d]]
          %v1428 = vstv %s1427
          %v1429 = vmul.f32 %v1428, %v1253
          %v1431 = vrot.slane %v1429, 6
          %v1432 = vrot.slane %v1431, 4
          %v1434 = vadd.f32 %v1426, %v1432
          %s1435 = sld [smem:[#allocation7 + $0x2e]]
          %v1436 = vstv %s1435
          %v1437 = vadd.f32 %v1434, %v1436
          %v1439 = vlaneseq
          %v1440 = vshrl.u32 %v1439, 7
          %v1441 = vsub.s32 0, %v1440
          %v1442 = vrot.slane %v1321, %v1441
          %v1443 = vlaneseq
          %v1444 = vshrl.u32 %v1443, 7
          %v1445 = vsub.s32 4, %v1444
          %v1446 = vrot.slane %v1321, %v1445
          %v1450 = vlaneseq
          %v1451 = vshrl.u32 %v1450, 7
          %v1452 = vsub.s32 0, %v1451
          %v1453 = vrot.slane %v1379, %v1452
          %v1454 = vlaneseq
          %v1455 = vshrl.u32 %v1454, 7
          %v1456 = vsub.s32 4, %v1455
          %v1457 = vrot.slane %v1379, %v1456
          %v1461 = vlaneseq
          %v1462 = vshrl.u32 %v1461, 7
          %v1463 = vsub.s32 0, %v1462
          %v1464 = vrot.slane %v1437, %v1463
          %v1465 = vlaneseq
          %v1466 = vshrl.u32 %v1465, 7
          %v1467 = vsub.s32 4, %v1466
          %v1468 = vrot.slane %v1437, %v1467
          %v1471 = vsel %vm682, %v1442, %v1453
          %v1472 = vsel %vm682, %v1446, %v1457
          %vm1473 = vcmask 1041408
          %v1474 = vsel %vm1473, %v1471, %v1464
          %v1475 = vsel %vm1473, %v1472, %v1468
          %v1476 = vstv %s1247
          %v1477 = vmul.f32 %v1476, %v1474
          %v1478 = vmul.f32 %v1476, %v1475
          %v1481 = vcombine.low %v1477, %v1478
          %v1483 = vadd.f32 %v1252, %v1481
          %1484 = vst [vmem:[#allocation2] sm:$0x77] %v1483
        $region96: #{forward.1} parent=55 // pred_fallthru
          _
        %s1485 = sld [smem:[#allocation5 + $0xd]]
        %p1486 = scmp.ge.f32.partialorder %s1485, 1e-09
        // Predicated region
        $region97: #{forward.1} parent=55 // pred_check
          %p1487 = pneg %p1486
        $region98: #{forward.1} parent=55 // pred_check_branch
          %1489 = sbr.rel (%p1487) target = $region100
        $region99: #{forward.1} parent=55 // pred_region
          %v1490 = vld [vmem:[#allocation2] sm:$0x77]
          %s1491 = sld [smem:[#allocation7 + $0x2f]]
          %s1492 = sld [smem:[#allocation7 + $0x30]]
          %s1493 = sld [smem:[#allocation7 + $0x31]]
          %v1494 = vld [vmem:[#allocation3 + $0x4] sm:$0x77]
          %v1495 = vmax.f32 %v1494, 0.0
          %v1496 = vmin.f32 %v1495, 1.0
          %v1497 = vsub.f32 1.0, %v1496
          %v1498 = vmul.f32 %v1496, %v1496
          %v1499 = vmul.f32 %v1497, %v1497
          %v1500 = vmul.f32 %v1499, 4.0
          %v1501 = vmul.f32 %v1500, %v1497
          %v1502 = vmul.f32 %v1501, %v1496
          %v1503 = vstv %s1491
          %v1504 = vmul.f32 %v1502, %v1503
          %v1505 = vmul.f32 %v1499, 6.0
          %v1506 = vmul.f32 %v1505, %v1498
          %v1507 = vstv %s1492
          %v1508 = vmul.f32 %v1506, %v1507
          %v1509 = vadd.f32 %v1504, %v1508
          %v1510 = vmul.f32 %v1497, 4.0
          %v1511 = vmul.f32 %v1510, %v1498
          %v1512 = vmul.f32 %v1511, %v1496
          %v1513 = vstv %s1493
          %v1514 = vmul.f32 %v1512, %v1513
          %v1515 = vadd.f32 %v1509, %v1514
          %v1516 = vmul.f32 %v1498, %v1498
          %v1517 = vadd.f32 %v1515, %v1516
          %v1518 = vstv %s1485
          %v1519 = vmul.f32 %v1518, %v1517
          %v1520 = vadd.f32 %v1490, %v1519
          %1521 = vst [vmem:[#allocation2] sm:$0x77] %v1520
        $region100: #{forward.1} parent=55 // pred_fallthru
          _
        %v1522 = vld [vmem:[#allocation2] sm:$0x77]
        %1523 = vst [vmem:[#allocation3 + $0x4] sm:$0x77] %v1522
        %s1524 = sld [smem:[#allocation10 + $0x80]]
        %s1525 = sld [smem:[#allocation10 + $0x81]]
        %s1526 = sld [smem:[#allocation10 + $0x82]]
        %v1527 = vstv %s1525
        %v1528 = vstv %s1526
        %v1529 = vsel %vm767, %v1527, %v1528
        %v1530 = vstv %s1524
        %v1531 = vsel %vm765, %v1530, %v1529
        %s1532 = sld [smem:[#allocation12 + $0x1]]
        %p1533 = scmp.gt.s32.totalorder %s1532, 0
        // Predicated region
        $region101: #{forward.1} parent=55 // pred_check
          %p1534 = pneg %p1533
        $region102: #{forward.1} parent=55 // pred_check_branch
          %1536 = sbr.rel (%p1534) target = $region104
        $region103: #{forward.1} parent=55 // pred_region
          %v1537 = vld [vmem:[#allocation3] sm:$0x77]
          %v1538 = vld [vmem:[#allocation3 + $0x8] sm:$0x7]
          %v1539 = vld [vmem:[%s7] ss:$2 sm:$0x3]
          %v1541 = vlaneseq
          %v1542 = vshrl.u32 %v1541, 7
          %v1543 = vsub.s32 0, %v1542
          %v1544 = vrot.slane %v1539, %v1543
          %v1545 = vlaneseq
          %v1546 = vshrl.u32 %v1545, 7
          %v1547 = vsub.s32 1, %v1546
          %v1548 = vrot.slane %v1539, %v1547
          %v1549 = vcombine.low %v1544, %v1548
          %1550 = vrot.lane.b32.xlu0 %v1549, 111
          %v1551 = vpop.permute.xlu0 %1550
          %v1552 = vrot.slane %v1551, 4
          %v1553 = vsel %vm411, %v1552, %v1551
          %v1556 = vmul.f32 %v1537, %v1553
          %v1557 = vmul.f32 %v1538, %v1552
          %v1560 = vcombine.high %v1556, %v1556
          %1561 = vrot.lane.b32.xlu0 %v1556, 17
          %v1562 = vpop.permute.xlu0 %1561
          %1563 = vrot.lane.b32.xlu0 %v1560, 17
          %v1564 = vpop.permute.xlu0 %1563
          %1565 = vrot.lane.b32.xlu0 %v1557, 17
          %v1566 = vpop.permute.xlu0 %1565
          %v1567 = vsel %vm451, %v1562, %v1564
          %v1568 = vsel %vm451, %v1564, %v1566
          %1571 = vst [vmem:[#allocation4] sm:$0x7] %v1567
          %1572 = vst [vmem:[#allocation4 + $0x8] sm:$0x7] %v1568
          %v1573 = vld [vmem:[#allocation3] sm:$0x77]
          %v1574 = vld [vmem:[#allocation3 + $0x8] sm:$0x7]
          %v1577 = vcombine.high %v1573, %v1573
          %v1578 = vrot.slane %v1573, 5
          %v1579 = vrot.slane %v1577, 5
          %v1580 = vrot.slane %v1574, 5
          %1581 = vrot.lane.b32.xlu0 %v1578, 16
          %v1582 = vpop.permute.xlu0 %1581
          %1583 = vrot.lane.b32.xlu0 %v1579, 16
          %v1584 = vpop.permute.xlu0 %1583
          %1585 = vrot.lane.b32.xlu0 %v1580, 16
          %v1586 = vpop.permute.xlu0 %1585
          %v1587 = vsel %vm563, %v1582, %v1584
          %v1588 = vsel %vm563, %v1584, %v1586
          %1591 = vst [vmem:[#allocation4] sm:$0x38] %v1587
          %1592 = vst [vmem:[#allocation4 + $0x8] sm:$0x38] %v1588
          %v1593 = vld [vmem:[#allocation3] sm:$0x77]
          %v1594 = vld [vmem:[#allocation3 + $0x8] sm:$0x7]
          %v1595 = vld [vmem:[%s415] ss:$2 sm:$0x3]
          %v1597 = vlaneseq
          %v1598 = vshrl.u32 %v1597, 7
          %v1599 = vsub.s32 0, %v1598
          %v1600 = vrot.slane %v1595, %v1599
          %v1601 = vlaneseq
          %v1602 = vshrl.u32 %v1601, 7
          %v1603 = vsub.s32 1, %v1602
          %v1604 = vrot.slane %v1595, %v1603
          %v1605 = vcombine.low %v1600, %v1604
          %1606 = vrot.lane.b32.xlu0 %v1605, 113
          %v1607 = vpop.permute.xlu0 %1606
          %v1608 = vrot.slane %v1607, 4
          %v1609 = vsel %vm421, %v1608, %v1607
          %v1612 = vmul.f32 %v1593, %v1609
          %v1613 = vmul.f32 %v1594, %v1608
          %v1616 = vcombine.high %v1612, %v1612
          %v1617 = vrot.slane %v1612, 2
          %v1618 = vrot.slane %v1616, 2
          %v1619 = vrot.slane %v1613, 2
          %1620 = vrot.lane.b32.xlu0 %v1617, 15
          %v1621 = vpop.permute.xlu0 %1620
          %1622 = vrot.lane.b32.xlu0 %v1618, 15
          %v1623 = vpop.permute.xlu0 %1622
          %1624 = vrot.lane.b32.xlu0 %v1619, 15
          %v1625 = vpop.permute.xlu0 %1624
          %v1626 = vsel %vm444, %v1621, %v1623
          %v1627 = vsel %vm444, %v1623, %v1625
          %1630 = vst [vmem:[#allocation4] sm:$0xc0] %v1626
          %1631 = vst [vmem:[#allocation4 + $0x8] sm:$0xc0] %v1627
          %1632 = vst [vmem:[#allocation4 + $0x10] sm:$0x1] %v1626
          %1633 = vst [vmem:[#allocation4 + $0x18] sm:$0x1] %v1627
          %v1634 = vld [vmem:[#allocation3] sm:$0x77]
          %v1635 = vld [vmem:[#allocation3 + $0x8] sm:$0x7]
          %v1636 = vld [vmem:[%s7] ss:$2 sm:$0x3]
          %v1638 = vlaneseq
          %v1639 = vshrl.u32 %v1638, 7
          %v1640 = vsub.s32 0, %v1639
          %v1641 = vrot.slane %v1636, %v1640
          %v1642 = vlaneseq
          %v1643 = vshrl.u32 %v1642, 7
          %v1644 = vsub.s32 1, %v1643
          %v1645 = vrot.slane %v1636, %v1644
          %v1646 = vcombine.low %v1641, %v1645
          %1647 = vrot.lane.b32.xlu0 %v1646, 127
          %v1648 = vpop.permute.xlu0 %1647
          %v1649 = vrot.slane %v1648, 4
          %v1650 = vsel %vm428, %v1649, %v1648
          %v1653 = vmul.f32 %v1634, %v1650
          %v1654 = vmul.f32 %v1635, %v1649
          %v1657 = vcombine.high %v1653, %v1653
          %v1658 = vrot.slane %v1653, 7
          %v1659 = vrot.slane %v1657, 7
          %v1660 = vrot.slane %v1654, 7
          %1661 = vrot.lane.b32.xlu0 %v1658, 1
          %v1662 = vpop.permute.xlu0 %1661
          %1663 = vrot.lane.b32.xlu0 %v1659, 1
          %v1664 = vpop.permute.xlu0 %1663
          %1665 = vrot.lane.b32.xlu0 %v1660, 1
          %v1666 = vpop.permute.xlu0 %1665
          %v1667 = vsel %vm437, %v1662, %v1664
          %v1668 = vsel %vm437, %v1664, %v1666
          %1671 = vst [vmem:[#allocation4 + $0x10] sm:$0xe] %v1667
          %1672 = vst [vmem:[#allocation4 + $0x18] sm:$0xe] %v1668
          %v1673 = vld [vmem:[#allocation3 + $0x4] sm:$0x77]
          %v1675 = vcombine.low %v1673, %v1673
          %1677 = vst [vmem:[#allocation4 + $0x10] sm:$0x70] %v1675
          %1678 = vst [vmem:[#allocation4 + $0x18] sm:$0x70] %v1673
          %v1679 = vld [vmem:[#allocation3 + $0x4] sm:$0x77]
          %v1680 = vld [vmem:[#allocation3 + $0xc] sm:$0x7]
          %v1681 = vld [vmem:[%s415] ss:$2 sm:$0x3]
          %v1683 = vlaneseq
          %v1684 = vshrl.u32 %v1683, 7
          %v1685 = vsub.s32 0, %v1684
          %v1686 = vrot.slane %v1681, %v1685
          %v1687 = vlaneseq
          %v1688 = vshrl.u32 %v1687, 7
          %v1689 = vsub.s32 1, %v1688
          %v1690 = vrot.slane %v1681, %v1689
          %v1691 = vcombine.low %v1686, %v1690
          %1692 = vrot.lane.b32.xlu0 %v1691, 1
          %v1693 = vpop.permute.xlu0 %1692
          %v1694 = vrot.slane %v1693, 4
          %v1695 = vsel %vm437, %v1694, %v1693
          %v1698 = vmul.f32 %v1679, %v1695
          %v1699 = vmul.f32 %v1680, %v1694
          %v1702 = vcombine.high %v1698, %v1698
          %v1703 = vrot.slane %v1698, 1
          %v1704 = vrot.slane %v1702, 1
          %v1705 = vrot.slane %v1699, 1
          %1706 = vrot.lane.b32.xlu0 %v1703, 127
          %v1707 = vpop.permute.xlu0 %1706
          %1708 = vrot.lane.b32.xlu0 %v1704, 127
          %v1709 = vpop.permute.xlu0 %1708
          %1710 = vrot.lane.b32.xlu0 %v1705, 127
          %v1711 = vpop.permute.xlu0 %1710
          %v1712 = vsel %vm428, %v1707, %v1709
          %v1713 = vsel %vm428, %v1709, %v1711
          %1716 = vst [vmem:[#allocation4 + $0x10] sm:$0x80] %v1712
          %1717 = vst [vmem:[#allocation4 + $0x18] sm:$0x80] %v1713
          %1718 = vst [vmem:[#allocation4 + $0x20] sm:$0x3] %v1712
          %1719 = vst [vmem:[#allocation4 + $0x28] sm:$0x3] %v1713
          %v1720 = vld [vmem:[#allocation3 + $0x4] sm:$0x77]
          %v1721 = vld [vmem:[#allocation3 + $0xc] sm:$0x7]
          %v1722 = vld [vmem:[%s7] ss:$2 sm:$0x3]
          %v1724 = vlaneseq
          %v1725 = vshrl.u32 %v1724, 7
          %v1726 = vsub.s32 0, %v1725
          %v1727 = vrot.slane %v1722, %v1726
          %v1728 = vlaneseq
          %v1729 = vshrl.u32 %v1728, 7
          %v1730 = vsub.s32 1, %v1729
          %v1731 = vrot.slane %v1722, %v1730
          %v1732 = vcombine.low %v1727, %v1731
          %1733 = vrot.lane.b32.xlu0 %v1732, 15
          %v1734 = vpop.permute.xlu0 %1733
          %v1735 = vrot.slane %v1734, 4
          %v1736 = vsel %vm444, %v1735, %v1734
          %v1739 = vmul.f32 %v1720, %v1736
          %v1740 = vmul.f32 %v1721, %v1735
          %v1743 = vcombine.high %v1739, %v1739
          %v1744 = vrot.slane %v1739, 6
          %v1745 = vrot.slane %v1743, 6
          %v1746 = vrot.slane %v1740, 6
          %1747 = vrot.lane.b32.xlu0 %v1744, 113
          %v1748 = vpop.permute.xlu0 %1747
          %1749 = vrot.lane.b32.xlu0 %v1745, 113
          %v1750 = vpop.permute.xlu0 %1749
          %1751 = vrot.lane.b32.xlu0 %v1746, 113
          %v1752 = vpop.permute.xlu0 %1751
          %v1753 = vsel %vm421, %v1748, %v1750
          %v1754 = vsel %vm421, %v1750, %v1752
          %1757 = vst [vmem:[#allocation4 + $0x20] sm:$0x1c] %v1753
          %1758 = vst [vmem:[#allocation4 + $0x28] sm:$0x1c] %v1754
          %v1759 = vld [vmem:[#allocation3 + $0x4] sm:$0x77]
          %v1760 = vld [vmem:[#allocation3 + $0xc] sm:$0x7]
          %v1763 = vcombine.high %v1759, %v1759
          %v1764 = vrot.slane %v1759, 3
          %v1765 = vrot.slane %v1763, 3
          %v1766 = vrot.slane %v1760, 3
          %1767 = vrot.lane.b32.xlu0 %v1764, 112
          %v1768 = vpop.permute.xlu0 %1767
          %1769 = vrot.lane.b32.xlu0 %v1765, 112
          %v1770 = vpop.permute.xlu0 %1769
          %1771 = vrot.lane.b32.xlu0 %v1766, 112
          %v1772 = vpop.permute.xlu0 %1771
          %v1773 = vsel %vm478, %v1768, %v1770
          %v1774 = vsel %vm478, %v1770, %v1772
          %1777 = vst [vmem:[#allocation4 + $0x20] sm:$0xe0] %v1773
          %1778 = vst [vmem:[#allocation4 + $0x28] sm:$0xe0] %v1774
          %v1779 = vld [vmem:[#allocation3 + $0x4] sm:$0x77]
          %v1780 = vld [vmem:[#allocation3 + $0xc] sm:$0x7]
          %v1781 = vld [vmem:[%s415] ss:$2 sm:$0x3]
          %v1783 = vlaneseq
          %v1784 = vshrl.u32 %v1783, 7
          %v1785 = vsub.s32 0, %v1784
          %v1786 = vrot.slane %v1781, %v1785
          %v1787 = vlaneseq
          %v1788 = vshrl.u32 %v1787, 7
          %v1789 = vsub.s32 1, %v1788
          %v1790 = vrot.slane %v1781, %v1789
          %v1791 = vcombine.low %v1786, %v1790
          %1792 = vrot.lane.b32.xlu0 %v1791, 17
          %v1793 = vpop.permute.xlu0 %1792
          %v1794 = vrot.slane %v1793, 4
          %v1795 = vsel %vm451, %v1794, %v1793
          %v1798 = vmul.f32 %v1779, %v1795
          %v1799 = vmul.f32 %v1780, %v1794
          %v1802 = vcombine.high %v1798, %v1798
          %1803 = vrot.lane.b32.xlu0 %v1798, 111
          %v1804 = vpop.permute.xlu0 %1803
          %1805 = vrot.lane.b32.xlu0 %v1802, 111
          %v1806 = vpop.permute.xlu0 %1805
          %1807 = vrot.lane.b32.xlu0 %v1799, 111
          %v1808 = vpop.permute.xlu0 %1807
          %v1809 = vsel %vm411, %v1804, %v1806
          %v1810 = vsel %vm411, %v1806, %v1808
          %1813 = vst [vmem:[#allocation4 + $0x30] sm:$0x7] %v1809
          %1814 = vst [vmem:[#allocation4 + $0x38] sm:$0x7] %v1810
          %s1815 = scalar_lea.vmem %s6, 4
          %v1816 = vld [vmem:[%s1815] sm:$0x7]
          %v1817 = vld [vmem:[#allocation4] sm:$0xff]
          %v1818 = vld [vmem:[#allocation4 + $0x8] sm:$0xff]
          %v1819 = vld [vmem:[#allocation4 + $0x10] sm:$0xff]
          %v1820 = vld [vmem:[#allocation4 + $0x18] sm:$0xff]
          %v1821 = vld [vmem:[#allocation4 + $0x20] sm:$0xff]
          %v1822 = vld [vmem:[#allocation4 + $0x28] sm:$0xff]
          %v1823 = vld [vmem:[#allocation4 + $0x30] sm:$0x7]
          %v1824 = vld [vmem:[#allocation4 + $0x38] sm:$0x7]
          %v1825 = vld [vmem:[#allocation3 + $0x4] sm:$0x77]
          %v1827 = vcombine.high %v1825, %v1825
          %v1829 = vmul.f32 %v1531, %v1825
          %v1830 = vmul.f32 %v1531, %v1827
          %vm1831 = vcmask 220160
          %v1833 = vsel %vm1831, %v1816, 0
          %vm1835 = vcmask 1042432
          %v1837 = vsel %vm1835, %v1823, 0
          %v1840 = vsel %vm1835, %v1824, 0
          %1842 = vmatprep.subr.mxu0 0.0
          %1843 = vmatpush1.msra.mxu0 0.0
          %1844 = vmatprep.subr.mxu0 0.0
          %1845 = vmatpush1.msra.mxu0 0.0
          %1846 = vmatprep.subr.mxu0 0.0
          %1847 = vmatpush1.msra.mxu0 0.0
          %1848 = vmatprep.subr.mxu0 0.0
          %1849 = vmatpush1.msra.mxu0 0.0
          %1850 = vmatprep.subr.mxu0 0.0
          %1851 = vmatpush1.msra.mxu0 0.0
          %1852 = vmatprep.subr.mxu0 0.0
          %1853 = vmatpush1.msra.mxu0 0.0
          %1854 = vmatprep.subr.mxu0 0.0
          %1855 = vmatpush1.msra.mxu0 0.0
          %1856 = vmatprep.subr.mxu0 0.0
          %1857 = vmatpush1.msra.mxu0 0.0
          %1858 = vmatprep.subr.mxu0 0.0
          %1859 = vmatpush1.msra.mxu0 0.0
          %1860 = vmatprep.subr.mxu0 0.0
          %1861 = vmatpush1.msra.mxu0 0.0
          %1862 = vmatprep.subr.mxu0 0.0
          %1863 = vmatpush1.msra.mxu0 0.0
          %1864 = vmatprep.subr.mxu0 0.0
          %1865 = vmatpush1.msra.mxu0 0.0
          %1866 = vmatprep.subr.mxu0 %v1840
          %1867 = vmatpush1.msra.mxu0 %v1837
          %1868 = vmatprep.subr.mxu0 %v1822
          %1869 = vmatpush1.msra.mxu0 %v1821
          %1870 = vmatprep.subr.mxu0 %v1820
          %1871 = vmatpush1.msra.mxu0 %v1819
          %1872 = vmatprep.subr.mxu0 %v1818
          %1873 = vmatpush1.msra.mxu0 %v1817
          %1874 = vmatprep.subr.mxu0 0.0
          %1875 = vmatpush2.msra.mxu0 0.0
          %1876 = vmatprep.subr.mxu0 0.0
          %1877 = vmatpush2.msra.mxu0 0.0
          %1878 = vmatprep.subr.mxu0 0.0
          %1879 = vmatpush2.msra.mxu0 0.0
          %1880 = vmatprep.subr.mxu0 0.0
          %1881 = vmatpush2.msra.mxu0 0.0
          %1882 = vmatprep.subr.mxu0 0.0
          %1883 = vmatpush2.msra.mxu0 0.0
          %1884 = vmatprep.subr.mxu0 0.0
          %1885 = vmatpush2.msra.mxu0 0.0
          %1886 = vmatprep.subr.mxu0 0.0
          %1887 = vmatpush2.msra.mxu0 0.0
          %1888 = vmatprep.subr.mxu0 0.0
          %1889 = vmatpush2.msra.mxu0 0.0
          %1890 = vmatprep.subr.mxu0 0.0
          %1891 = vmatpush2.msra.mxu0 0.0
          %1892 = vmatprep.subr.mxu0 0.0
          %1893 = vmatpush2.msra.mxu0 0.0
          %1894 = vmatprep.subr.mxu0 0.0
          %1895 = vmatpush2.msra.mxu0 0.0
          %1896 = vmatprep.subr.mxu0 0.0
          %1897 = vmatpush2.msra.mxu0 0.0
          %1898 = vmatprep.subr.mxu0 0.0
          %1899 = vmatpush2.msra.mxu0 0.0
          %1900 = vmatprep.subr.mxu0 0.0
          %1901 = vmatpush2.msra.mxu0 0.0
          %1902 = vmatprep.subr.mxu0 0.0
          %1903 = vmatpush2.msra.mxu0 0.0
          %1904 = vmatprep.subr.mxu0 0.0
          %1905 = vmatpush2.msra.mxu0 0.0
          %1906 = vmatprep.mubr.f32.mxu0 0.0
          %1907 = vmatmul.mubr.f32.gmra.mxu0 %v1833
          %v1908 = vpop.f32.mrf.mxu0
          %v1909 = vadd.f32 %v1829, %v1908
          %v1910 = vpop.f32.mrf.mxu0
          %v1911 = vadd.f32 %v1830, %v1910
          %1912 = vdwg.mxu0
          %v1915 = vcombine.low %v1909, %v1911
          %1917 = vst [vmem:[#allocation2] sm:$0x77] %v1915
        $region104: #{forward.1} parent=55 // pred_fallthru
          _
        %s1918 = sld [smem:[#allocation12 + $0x1]]
        %p1919 = scmp.eq.s32.totalorder %s1918, 0
        // Predicated region
        $region105: #{forward.1} parent=55 // pred_check
          %p1920 = pneg %p1919
        $region106: #{forward.1} parent=55 // pred_check_branch
          %1922 = sbr.rel (%p1920) target = $region108
        $region107: #{forward.1} parent=55 // pred_region
          %v1923 = vld [vmem:[#allocation3 + $0x4] sm:$0x77]
          %v1925 = vcombine.high %v1923, %v1923
          %v1927 = vmul.f32 %v1531, %v1923
          %v1928 = vmul.f32 %v1531, %v1925
          %v1931 = vcombine.low %v1927, %v1928
          %1933 = vst [vmem:[#allocation2] sm:$0x77] %v1931
        $region108: #{forward.1} parent=55 // pred_fallthru
          _
        %s1934 = sld [smem:[#allocation5 + $0x80]]
        %p1935 = scmp.ge.f32.partialorder %s1934, 1e-09
        // Predicated region
        $region109: #{forward.1} parent=55 // pred_check
          %p1936 = pneg %p1935
        $region110: #{forward.1} parent=55 // pred_check_branch
          %1938 = sbr.rel (%p1936) target = $region112
        $region111: #{forward.1} parent=55 // pred_region
          %v1939 = vld [vmem:[#allocation2] sm:$0x77]
          %s1940 = sld [smem:[#allocation7 + $0x80]]
          %s1941 = smul.f32 %s1940, 1.5
          %s1942 = sadd.f32 %s1941, 0.5
          %v1943 = vld [vmem:[#allocation3 + $0x4] sm:$0x77]
          %v1944 = vmax.f32 %v1943, 0.0001
          %v1945 = vlog2.pop %v1944
          %v1946 = vmul.f32 %v1945, 0.6931472
          %v1947 = vstv %s1942
          %v1948 = vmul.f32 %v1947, %v1946
          %v1949 = vmul.f32 %v1948, 1.442695
          %v1950 = vpow.pop %v1949
          %v1951 = vstv %s1934
          %v1952 = vmul.f32 %v1951, %v1950
          %v1953 = vadd.f32 %v1939, %v1952
          %1954 = vst [vmem:[#allocation2] sm:$0x77] %v1953
        $region112: #{forward.1} parent=55 // pred_fallthru
          _
        %s1955 = sld [smem:[#allocation5 + $0x84]]
        %p1956 = scmp.ge.f32.partialorder %s1955, 1e-09
        // Predicated region
        $region113: #{forward.1} parent=55 // pred_check
          %p1957 = pneg %p1956
        $region114: #{forward.1} parent=55 // pred_check_branch
          %1959 = sbr.rel (%p1957) target = $region116
        $region115: #{forward.1} parent=55 // pred_region
          %v1960 = vld [vmem:[#allocation2] sm:$0x77]
          %v1961 = vld [vmem:[#allocation3 + $0x4] sm:$0x77]
          %v1963 = vcombine.high %v1961, %v1961
          %vm1965 = vcmask 1042432
          %v1966 = vsel %vm1965, %v1961, 0.0
          %v1967 = vsel %vm1965, %v1963, 0.0
          %v1968 = vadd.f32 %v1966, %v1967
          %1969 = vadd.xlane.f32.xlu0 %v1968
          %v1970 = vpop.xlane.xlu0 %1969
          %v1971 = vrcp.pop 256.0
          %v1972 = vmul.f32 %v1970, %v1971
          %v1974 = vrot.slane %v1972, 1
          %v1976 = vadd.f32 %v1972, %v1974
          %v1977 = vrot.slane %v1972, 2
          %v1979 = vadd.f32 %v1976, %v1977
          %v1980 = vmul.f32 %v1979, 0.33333334
          %v1981 = vadd.f32 %v1972, 1e-06
          %v1982 = vlaneseq
          %v1983 = vshrl.u32 %v1982, 7
          %v1984 = vsub.s32 0, %v1983
          %v1985 = vrot.slane %v1980, %v1984
          %v1986 = vrcp.pop %v1981
          %v1987 = vmul.f32 %v1985, %v1986
          %1989 = vset.pattern.permute.xlu0 0
          %1990 = vperm.xlu0 %1989, %v1987
          %v1991 = vpop.permute.xlu0 %1990
          %v1993 = vunpack.c.l.s4 839922192
          %v1994 = vunpack.c.0.s8 %v1993
          %v1995 = vlaneseq
          %v1996 = vshrl.u32 %v1995, 7
          %v1997 = vsub.s32 %v1994, %v1996
          %v1998 = vrot.slane %v1991, %v1997
          %v2000 = vmul.f32 %v1961, %v1998
          %v2001 = vstv %s1955
          %v2002 = vmul.f32 %v2001, %v2000
          %v2003 = vadd.f32 %v1960, %v2002
          %2004 = vst [vmem:[#allocation2] sm:$0x77] %v2003
        $region116: #{forward.1} parent=55 // pred_fallthru
          _
        %s2005 = sld [smem:[#allocation5 + $0x8c]]
        %p2006 = scmp.ge.f32.partialorder %s2005, 1e-09
        // Predicated region
        $region117: #{forward.1} parent=55 // pred_check
          %p2007 = pneg %p2006
        $region118: #{forward.1} parent=55 // pred_check_branch
          %2009 = sbr.rel (%p2007) target = $region120
        $region119: #{forward.1} parent=55 // pred_region
          %v2010 = vld [vmem:[#allocation2] sm:$0x77]
          %v2011 = vld [vmem:[#allocation3 + $0x4] sm:$0x77]
          %v2012 = vmul.f32 %v2011, %v2011
          %v2014 = vrot.slane %v2011, 5
          %v2015 = vrot.slane %v2014, 4
          %v2017 = vmul.f32 %v2011, %v2015
          %v2018 = vrot.slane %v2011, 6
          %v2019 = vrot.slane %v2018, 4
          %v2021 = vmul.f32 %v2011, %v2019
          %s2022 = sld [smem:[#allocation7 + $0x91]]
          %v2023 = vstv %s2022
          %v2024 = vmul.f32 %v2023, %v2012
          %s2025 = sld [smem:[#allocation7 + $0x92]]
          %v2026 = vstv %s2025
          %v2027 = vmul.f32 %v2026, %v2012
          %v2029 = vrot.slane %v2027, 5
          %v2030 = vrot.slane %v2029, 4
          %v2032 = vadd.f32 %v2024, %v2030
          %s2033 = sld [smem:[#allocation7 + $0x93]]
          %v2034 = vstv %s2033
          %v2035 = vmul.f32 %v2034, %v2012
          %v2037 = vrot.slane %v2035, 6
          %v2038 = vrot.slane %v2037, 4
          %v2040 = vadd.f32 %v2032, %v2038
          %s2041 = sld [smem:[#allocation7 + $0x94]]
          %v2042 = vstv %s2041
          %v2043 = vmul.f32 %v2042, %v2017
          %v2044 = vadd.f32 %v2040, %v2043
          %s2045 = sld [smem:[#allocation7 + $0x95]]
          %v2046 = vstv %s2045
          %v2047 = vmul.f32 %v2046, %v2021
          %v2048 = vadd.f32 %v2044, %v2047
          %s2049 = sld [smem:[#allocation7 + $0x96]]
          %v2050 = vstv %s2049
          %v2051 = vmul.f32 %v2050, %v2017
          %v2053 = vrot.slane %v2051, 5
          %v2054 = vrot.slane %v2053, 4
          %v2056 = vadd.f32 %v2048, %v2054
          %s2057 = sld [smem:[#allocation7 + $0x97]]
          %v2058 = vstv %s2057
          %v2059 = vmul.f32 %v2058, %v2011
          %v2060 = vadd.f32 %v2056, %v2059
          %s2061 = sld [smem:[#allocation7 + $0x98]]
          %v2062 = vstv %s2061
          %v2063 = vmul.f32 %v2062, %v2011
          %v2065 = vrot.slane %v2063, 5
          %v2066 = vrot.slane %v2065, 4
          %v2068 = vadd.f32 %v2060, %v2066
          %s2069 = sld [smem:[#allocation7 + $0x99]]
          %v2070 = vstv %s2069
          %v2071 = vmul.f32 %v2070, %v2011
          %v2073 = vrot.slane %v2071, 6
          %v2074 = vrot.slane %v2073, 4
          %v2076 = vadd.f32 %v2068, %v2074
          %s2077 = sld [smem:[#allocation7 + $0x9a]]
          %v2078 = vstv %s2077
          %v2079 = vadd.f32 %v2076, %v2078
          %s2080 = sld [smem:[#allocation7 + $0x9b]]
          %v2081 = vstv %s2080
          %v2082 = vmul.f32 %v2081, %v2012
          %s2083 = sld [smem:[#allocation7 + $0x9c]]
          %v2084 = vstv %s2083
          %v2085 = vmul.f32 %v2084, %v2012
          %v2087 = vrot.slane %v2085, 5
          %v2088 = vrot.slane %v2087, 4
          %v2090 = vadd.f32 %v2082, %v2088
          %s2091 = sld [smem:[#allocation7 + $0x9d]]
          %v2092 = vstv %s2091
          %v2093 = vmul.f32 %v2092, %v2012
          %v2095 = vrot.slane %v2093, 6
          %v2096 = vrot.slane %v2095, 4
          %v2098 = vadd.f32 %v2090, %v2096
          %s2099 = sld [smem:[#allocation7 + $0x9e]]
          %v2100 = vstv %s2099
          %v2101 = vmul.f32 %v2100, %v2017
          %v2102 = vadd.f32 %v2098, %v2101
          %s2103 = sld [smem:[#allocation7 + $0x9f]]
          %v2104 = vstv %s2103
          %v2105 = vmul.f32 %v2104, %v2021
          %v2106 = vadd.f32 %v2102, %v2105
          %s2107 = sld [smem:[#allocation7 + $0xa0]]
          %v2108 = vstv %s2107
          %v2109 = vmul.f32 %v2108, %v2017
          %v2111 = vrot.slane %v2109, 5
          %v2112 = vrot.slane %v2111, 4
          %v2114 = vadd.f32 %v2106, %v2112
          %s2115 = sld [smem:[#allocation7 + $0xa1]]
          %v2116 = vstv %s2115
          %v2117 = vmul.f32 %v2116, %v2011
          %v2118 = vadd.f32 %v2114, %v2117
          %s2119 = sld [smem:[#allocation7 + $0xa2]]
          %v2120 = vstv %s2119
          %v2121 = vmul.f32 %v2120, %v2011
          %v2123 = vrot.slane %v2121, 5
          %v2124 = vrot.slane %v2123, 4
          %v2126 = vadd.f32 %v2118, %v2124
          %s2127 = sld [smem:[#allocation7 + $0xa3]]
          %v2128 = vstv %s2127
          %v2129 = vmul.f32 %v2128, %v2011
          %v2131 = vrot.slane %v2129, 6
          %v2132 = vrot.slane %v2131, 4
          %v2134 = vadd.f32 %v2126, %v2132
          %s2135 = sld [smem:[#allocation7 + $0xa4]]
          %v2136 = vstv %s2135
          %v2137 = vadd.f32 %v2134, %v2136
          %s2138 = sld [smem:[#allocation7 + $0xa5]]
          %v2139 = vstv %s2138
          %v2140 = vmul.f32 %v2139, %v2012
          %s2141 = sld [smem:[#allocation7 + $0xa6]]
          %v2142 = vstv %s2141
          %v2143 = vmul.f32 %v2142, %v2012
          %v2145 = vrot.slane %v2143, 5
          %v2146 = vrot.slane %v2145, 4
          %v2148 = vadd.f32 %v2140, %v2146
          %s2149 = sld [smem:[#allocation7 + $0xa7]]
          %v2150 = vstv %s2149
          %v2151 = vmul.f32 %v2150, %v2012
          %v2153 = vrot.slane %v2151, 6
          %v2154 = vrot.slane %v2153, 4
          %v2156 = vadd.f32 %v2148, %v2154
          %s2157 = sld [smem:[#allocation7 + $0xa8]]
          %v2158 = vstv %s2157
          %v2159 = vmul.f32 %v2158, %v2017
          %v2160 = vadd.f32 %v2156, %v2159
          %s2161 = sld [smem:[#allocation7 + $0xa9]]
          %v2162 = vstv %s2161
          %v2163 = vmul.f32 %v2162, %v2021
          %v2164 = vadd.f32 %v2160, %v2163
          %s2165 = sld [smem:[#allocation7 + $0xaa]]
          %v2166 = vstv %s2165
          %v2167 = vmul.f32 %v2166, %v2017
          %v2169 = vrot.slane %v2167, 5
          %v2170 = vrot.slane %v2169, 4
          %v2172 = vadd.f32 %v2164, %v2170
          %s2173 = sld [smem:[#allocation7 + $0xab]]
          %v2174 = vstv %s2173
          %v2175 = vmul.f32 %v2174, %v2011
          %v2176 = vadd.f32 %v2172, %v2175
          %s2177 = sld [smem:[#allocation7 + $0xac]]
          %v2178 = vstv %s2177
          %v2179 = vmul.f32 %v2178, %v2011
          %v2181 = vrot.slane %v2179, 5
          %v2182 = vrot.slane %v2181, 4
          %v2184 = vadd.f32 %v2176, %v2182
          %s2185 = sld [smem:[#allocation7 + $0xad]]
          %v2186 = vstv %s2185
          %v2187 = vmul.f32 %v2186, %v2011
          %v2189 = vrot.slane %v2187, 6
          %v2190 = vrot.slane %v2189, 4
          %v2192 = vadd.f32 %v2184, %v2190
          %s2193 = sld [smem:[#allocation7 + $0xae]]
          %v2194 = vstv %s2193
          %v2195 = vadd.f32 %v2192, %v2194
          %v2197 = vlaneseq
          %v2198 = vshrl.u32 %v2197, 7
          %v2199 = vsub.s32 0, %v2198
          %v2200 = vrot.slane %v2079, %v2199
          %v2201 = vlaneseq
          %v2202 = vshrl.u32 %v2201, 7
          %v2203 = vsub.s32 4, %v2202
          %v2204 = vrot.slane %v2079, %v2203
          %v2208 = vlaneseq
          %v2209 = vshrl.u32 %v2208, 7
          %v2210 = vsub.s32 0, %v2209
          %v2211 = vrot.slane %v2137, %v2210
          %v2212 = vlaneseq
          %v2213 = vshrl.u32 %v2212, 7
          %v2214 = vsub.s32 4, %v2213
          %v2215 = vrot.slane %v2137, %v2214
          %v2219 = vlaneseq
          %v2220 = vshrl.u32 %v2219, 7
          %v2221 = vsub.s32 0, %v2220
          %v2222 = vrot.slane %v2195, %v2221
          %v2223 = vlaneseq
          %v2224 = vshrl.u32 %v2223, 7
          %v2225 = vsub.s32 4, %v2224
          %v2226 = vrot.slane %v2195, %v2225
          %v2229 = vsel %vm682, %v2200, %v2211
          %v2230 = vsel %vm682, %v2204, %v2215
          %vm2231 = vcmask 1041408
          %v2232 = vsel %vm2231, %v2229, %v2222
          %v2233 = vsel %vm2231, %v2230, %v2226
          %v2234 = vstv %s2005
          %v2235 = vmul.f32 %v2234, %v2232
          %v2236 = vmul.f32 %v2234, %v2233
          %v2239 = vcombine.low %v2235, %v2236
          %v2241 = vadd.f32 %v2010, %v2239
          %2242 = vst [vmem:[#allocation2] sm:$0x77] %v2241
        $region120: #{forward.1} parent=55 // pred_fallthru
          _
        %s2243 = sld [smem:[#allocation5 + $0x8d]]
        %p2244 = scmp.ge.f32.partialorder %s2243, 1e-09
        // Predicated region
        $region121: #{forward.1} parent=55 // pred_check
          %p2245 = pneg %p2244
        $region122: #{forward.1} parent=55 // pred_check_branch
          %2247 = sbr.rel (%p2245) target = $region124
        $region123: #{forward.1} parent=55 // pred_region
          %v2248 = vld [vmem:[#allocation2] sm:$0x77]
          %s2249 = sld [smem:[#allocation7 + $0xaf]]
          %s2250 = sld [smem:[#allocation7 + $0xb0]]
          %s2251 = sld [smem:[#allocation7 + $0xb1]]
          %v2252 = vld [vmem:[#allocation3 + $0x4] sm:$0x77]
          %v2253 = vmax.f32 %v2252, 0.0
          %v2254 = vmin.f32 %v2253, 1.0
          %v2255 = vsub.f32 1.0, %v2254
          %v2256 = vmul.f32 %v2254, %v2254
          %v2257 = vmul.f32 %v2255, %v2255
          %v2258 = vmul.f32 %v2257, 4.0
          %v2259 = vmul.f32 %v2258, %v2255
          %v2260 = vmul.f32 %v2259, %v2254
          %v2261 = vstv %s2249
          %v2262 = vmul.f32 %v2260, %v2261
          %v2263 = vmul.f32 %v2257, 6.0
          %v2264 = vmul.f32 %v2263, %v2256
          %v2265 = vstv %s2250
          %v2266 = vmul.f32 %v2264, %v2265
          %v2267 = vadd.f32 %v2262, %v2266
          %v2268 = vmul.f32 %v2255, 4.0
          %v2269 = vmul.f32 %v2268, %v2256
          %v2270 = vmul.f32 %v2269, %v2254
          %v2271 = vstv %s2251
          %v2272 = vmul.f32 %v2270, %v2271
          %v2273 = vadd.f32 %v2267, %v2272
          %v2274 = vmul.f32 %v2256, %v2256
          %v2275 = vadd.f32 %v2273, %v2274
          %v2276 = vstv %s2243
          %v2277 = vmul.f32 %v2276, %v2275
          %v2278 = vadd.f32 %v2248, %v2277
          %2279 = vst [vmem:[#allocation2] sm:$0x77] %v2278
        $region124: #{forward.1} parent=55 // pred_fallthru
          _
        %v2280 = vld [vmem:[#allocation2] sm:$0x77]
        %2281 = vst [vmem:[%s393] sm:$0x77] %v2280
        %p2282 = scmp.lt.s32.totalorder %s23, 1
        %s2283 = scalar_select %p2282, %s23, 1
        %s2284 = smul.addr %s2283, 2
        %s2285 = smul.addr %s2284, 4
        %s2286 = scalar_lea.vmem %s9, %s2285
        // Predicated region
        $region125: #{forward.1} parent=55 // pred_check
          %p2287 = pneg %p235
        $region126: #{forward.1} parent=55 // pred_check_branch
          %2289 = sbr.rel (%p2287) target = $region128
        $region127: #{forward.1} parent=55 // pred_region
          _
        $region128: #{forward.1} parent=55 // pred_fallthru
          _
      $region56: #{forward.1} parent=5 // pred_fallthru
        _
      %p2290 = scmp.le.s32.totalorder 2, %s18
      // Predicated region
      $region129: #{forward.1} parent=5 // pred_check
        %p2291 = pneg %p2290
      $region130: #{forward.1} parent=5 // pred_check_branch
        %2293 = sbr.rel (%p2291) target = $region132
      $region131: #{forward.1} parent=5 // pred_region
        %s2294 = ssub.s32 %s18, 2
        // Predicated region
        $region133: #{forward.1} parent=131 // pred_check
          %p2295 = pneg %p241
        $region134: #{forward.1} parent=131 // pred_check_branch
          %2297 = sbr.rel (%p2295) target = $region136
        $region135: #{forward.1} parent=131 // pred_region
          %p2298 = scmp.lt.s32.totalorder %s24, 1
          %s2299 = scalar_select %p2298, %s24, 1
          %s2300 = smul.addr %s2299, 2
          %s2301 = smul.addr %s2300, 4
          %s2302 = scalar_lea.vmem %s9, %s2301
        $region136: #{forward.1} parent=131 // pred_fallthru
          _
      $region132: #{forward.1} parent=5 // pred_fallthru
        _
    $region6: #{forward.1} parent=1 // loop_footer
      %s22 = sadd.s32 1, %s18
    $region7: #{forward.1} parent=1 // loop_footer_branch
      %17 = sbr.rel target = $region3
    $region8: #{forward.1} parent=1 // loop_exit
      _
    %2303 = vsyncpa [#allocation6], 1
    %s2304 = scalar_lea.sflag [#allocation6], 1
    %2305 = vsyncpa %s2304, 1
    %2306 = vsyncpa [#allocation8], 1
    %2307 = vsyncpa [#allocation11], 1

</llo_original>
